<compile_context>
chip_gen: v6e
topology: v6e:2x2x1
jax: 0.10.0
libtpu: 0.0.40
codegen_flags: <defaults>
</compile_context>

<pallas_src>
import functools

import numpy as np
import jax
import jax.numpy as jnp
from jax.experimental import pallas as pl
from jax.experimental.pallas import tpu as pltpu

NEG_INF = -1e30  # finite stand-in for -inf in the softmax mask (exp underflows to 0)


def _elu(x):
    # ELU(alpha=1); clamp exp arg so the untaken branch stays finite.
    return jnp.where(x > 0, x, jnp.exp(jnp.minimum(x, 0.0)) - 1.0)


def _clever_kernel(F, NCP,
                   n_ref, x_ref, c_ref, ln_ref,
                   a_ref, w1_ref, b1_ref, w2_ref, b2_ref, pnorm_ref,
                   wp1_ref, bp1_ref, wp2_ref, bp2_ref, ssum_ref,
                   wc1_ref, bc1_ref, wc2_ref, bc2_ref,
                   wm1_ref, bm1_ref, wm2_ref, bm2_ref,
                   const_ref,
                   out_ref):
    f32 = jnp.float32
    bf16 = jnp.bfloat16

    n2 = n_ref[...]                                   # (Bt, 1) valid-node counts (f32)
    x = x_ref[...].astype(f32)                        # (Bt, N*F)
    ln = ln_ref[...]                                  # (1, N*F) node index per lane

    valid = ln < n2                                   # (Bt, N*F) valid node lanes
    evid = jnp.logical_and(ln >= 1.0, ln < n2)        # valid *evidence* lanes (node >= 1)
    inv_den = 1.0 / (2.0 * n2 - 1.0)                  # exact divide (review note)

    a16 = a_ref[...]                                  # kron(2*ones-I, I_F)  (bf16)

    # --- GCN closed form, lane-dense: two (Bt,NF)@(NF,NF) matmuls per layer ---
    def gcn(h, wblk_ref, btile_ref):
        hm = jnp.where(valid, h, 0.0)
        agg = jnp.dot(hm.astype(bf16), a16, preferred_element_type=f32)      # 2*sum - x_j
        hh = jnp.where(valid, agg * inv_den, h)                              # padded: identity
        y = jnp.dot(hh.astype(bf16), wblk_ref[...],
                    preferred_element_type=f32) + btile_ref[...]             # kron(I_N, W)
        return _elu(y)

    h = gcn(x, w1_ref, b1_ref)
    h = gcn(h, w2_ref, b2_ref)

    # --- F.normalize(dim=-1): per-node sum-of-squares broadcast over its lanes ---
    ssb = jnp.dot((h * h).astype(bf16), pnorm_ref[...],
                  preferred_element_type=f32)          # kron(I_N, ones(F,F))
    h = h * jax.lax.rsqrt(jnp.maximum(ssb, 1e-24))

    # --- SelfAttention (claim = node 0, evidences = nodes 1..N-1) ---
    # fused projection: kron(I_N, wp1e) + (claim rows) kron wp1c  -> one matmul
    h1 = _elu(jnp.dot(h.astype(bf16), wp1_ref[...],
                      preferred_element_type=f32) + bp1_ref[...])            # (Bt, N*H)
    # per-node logit broadcast over that node's F lanes: kron(I_N, wp2*ones(1,F))
    logits = _elu(jnp.dot(h1.astype(bf16), wp2_ref[...],
                          preferred_element_type=f32) + bp2_ref[...])        # (Bt, N*F)
    logits = jnp.where(evid, logits, NEG_INF)

    # lane-dense masked softmax (each node replicated F times -> correct by *F)
    m = jnp.max(logits, axis=1, keepdims=True)
    p = jnp.exp(logits - m)
    attn = p * (float(F) * pl.reciprocal(jnp.sum(p, axis=1, keepdims=True), approx=True))

    # attention-weighted evidence sum: segmented node-sum via kron(ones(N,1), I_F)
    rep = jnp.dot((attn * h).astype(bf16), ssum_ref[...],
                  preferred_element_type=f32)                                # (Bt, F)

    # --- fusion classifier: Linear, ELU, Linear(padded to NCP lanes), ELU ---
    o = _elu(jnp.dot(rep.astype(bf16), wc1_ref[...],
                     preferred_element_type=f32) + bc1_ref[...])
    fusion = _elu(jnp.dot(o.astype(bf16), wc2_ref[...],
                          preferred_element_type=f32) + bc2_ref[...])

    # --- claim MLP: Linear, ReLU, Linear(padded), ReLU ---
    cm = jnp.maximum(
        jnp.dot(c_ref[...], wm1_ref[...], preferred_element_type=f32) + bm1_ref[...], 0.0)
    res_claim = jnp.maximum(
        jnp.dot(cm.astype(bf16), wm2_ref[...], preferred_element_type=f32) + bm2_ref[...], 0.0)

    # --- CLEVER_graph combination ---
    res_final = jnp.log(1e-8 + 1.0 / (1.0 + jnp.exp(-(res_claim + fusion))))
    cf_res = jnp.log(1e-8 + 1.0 / (1.0 + jnp.exp(-(res_claim + const_ref[...]))))

    # single dense 128-lane output block; 32-lane slots, sliced in the wrapper
    out_ref[:, 0 * NCP:1 * NCP] = res_claim
    out_ref[:, 1 * NCP:2 * NCP] = res_final
    out_ref[:, 2 * NCP:3 * NCP] = cf_res
    out_ref[:, 3 * NCP:4 * NCP] = res_final - cf_res


def _pick_bt(B, block_b):
    """Graphs per grid step: multiple of 8; prefer >=2 grid steps (v7x dual TC)
    and an exact divisor of B (avoids a padded HBM copy of the inputs)."""
    b8 = ((B + 7) // 8) * 8
    cap = max(8, min((block_b // 8) * 8, b8))
    if b8 >= 16:
        cap = min(cap, max(8, ((b8 // 2) // 8) * 8))
    for c in range(cap, 7, -8):
        if B % c == 0:
            return c
    return cap


def clever_graph_forward(pooled_output, claims, sent_labels, params, *, block_b=512):
    B, N, F = pooled_output.shape
    NF = N * F
    H = params['wp1'].shape[1]
    NH = N * H
    nclass = params['wc2'].shape[1]
    NCP = ((nclass + 31) // 32) * 32          # per-result lane slot (4*NCP-wide output)
    OUTW = 4 * NCP

    Bt = _pick_bt(B, block_b)
    nb = pl.cdiv(B, Bt)
    Bpad = nb * Bt

    # per-graph valid-node counts as a 2-D column (no (B,1,1) tile padding)
    n = sent_labels.astype(jnp.float32).sum(axis=1, keepdims=True)           # (B, 1)
    # bf16 inputs at the kernel boundary (f32 accumulation inside)
    x = pooled_output.reshape(B, NF).astype(jnp.bfloat16)
    c = claims.astype(jnp.bfloat16)
    if Bpad != B:                               # fallback only; _pick_bt usually avoids it
        pad = Bpad - B
        x = jnp.pad(x, ((0, pad), (0, 0)))
        c = jnp.pad(c, ((0, pad), (0, 0)))
        n = jnp.pad(n, ((0, pad), (0, 0)), constant_values=1.0)   # padded graphs: claim only

    f32, bf16 = jnp.float32, jnp.bfloat16
    eyeN = jnp.eye(N, dtype=f32)
    eyeF = jnp.eye(F, dtype=f32)

    # node index of every lane (passed in, avoids in-kernel integer division)
    lane_node = jnp.repeat(jnp.arange(N, dtype=f32), F).reshape(1, NF)

    # kron'd constant matrices (all MXU RHS in bf16)
    a_agg = jnp.kron(2.0 * jnp.ones((N, N), f32) - eyeN, eyeF).astype(bf16)      # (NF, NF)
    w1_blk = jnp.kron(eyeN, params['w1']).astype(bf16)                            # (NF, NF)
    w2_blk = jnp.kron(eyeN, params['w2']).astype(bf16)
    b1_t = jnp.tile(params['b1'], (1, N)).astype(f32)                             # (1, NF)
    b2_t = jnp.tile(params['b2'], (1, N)).astype(f32)
    p_norm = jnp.kron(eyeN, jnp.ones((F, F), f32)).astype(bf16)                   # (NF, NF)

    # fused attention projection: rows 0:F of wp1 act on the claim copy, F:2F on evidences
    wp1c, wp1e = params['wp1'][:F, :], params['wp1'][F:, :]
    row0 = jnp.zeros((N, N), f32).at[0, :].set(1.0)
    wp1_big = (jnp.kron(eyeN, wp1e) + jnp.kron(row0, wp1c)).astype(bf16)          # (NF, NH)
    bp1_t = jnp.tile(params['bp1'], (1, N)).astype(f32)                           # (1, NH)
    wp2_exp = jnp.kron(eyeN, params['wp2'] * jnp.ones((1, F), f32)).astype(bf16)  # (NH, NF)
    bp2 = jnp.asarray(params['bp2'], f32).reshape(1, 1)
    s_sum = jnp.kron(jnp.ones((N, 1), f32), eyeF).astype(bf16)                    # (NF, F)

    def pad_cols(a, w):
        return jnp.pad(a, ((0, 0), (0, w - a.shape[1])))
    wc2p = pad_cols(params['wc2'], NCP).astype(bf16)
    bc2p = pad_cols(params['bc2'], NCP).astype(f32)
    wm2p = pad_cols(params['wm2'], NCP).astype(bf16)
    bm2p = pad_cols(params['bm2'], NCP).astype(f32)
    wc1 = params['wc1'].astype(bf16)
    wm1 = params['wm1'].astype(bf16)
    bc1 = params['bc1'].astype(f32)
    bm1 = params['bm1'].astype(f32)
    const = jnp.asarray(params['constant'], f32).reshape(1, 1)

    def per_batch(w):
        return pl.BlockSpec((Bt, w), lambda b: (b, 0))

    def const2(shape):
        return pl.BlockSpec(shape, lambda b: (0, 0))

    grid_spec = pltpu.PrefetchScalarGridSpec(
        num_scalar_prefetch=0,
        grid=(nb,),
        in_specs=[
            per_batch(1),                                   # n
            per_batch(NF),                                  # pooled_output (lane-dense, bf16)
            per_batch(F),                                   # claims (bf16)
            const2((1, NF)),                                # lane -> node index
            const2((NF, NF)),                               # aggregation matrix
            const2((NF, NF)), const2((1, NF)),              # GCN1 block-diag W, tiled b
            const2((NF, NF)), const2((1, NF)),              # GCN2
            const2((NF, NF)),                               # per-node sumsq broadcaster
            const2((NF, NH)), const2((1, NH)),              # fused attention proj1 + bias
            const2((NH, NF)), const2((1, 1)),               # per-node logit proj2 + bias
            const2((NF, F)),                                # node-sum selector
            const2((F, F)), const2((1, F)),                 # classifier l1
            const2((F, NCP)), const2((1, NCP)),             # classifier l2 (padded)
            const2((F, F)), const2((1, F)),                 # mlp_claim l1
            const2((F, NCP)), const2((1, NCP)),             # mlp_claim l2 (padded)
            const2((1, 1)),                                 # constant
        ],
        out_specs=pl.BlockSpec((Bt, OUTW), lambda b: (b, 0)),
    )

    out = pl.pallas_call(
        functools.partial(_clever_kernel, F, NCP),
        out_shape=jax.ShapeDtypeStruct((Bpad, OUTW), jnp.float32),
        grid_spec=grid_spec,
        compiler_params=pltpu.CompilerParams(
            dimension_semantics=("parallel",),
            vmem_limit_bytes=32 * 1024 * 1024),
    )(n, x, c, lane_node,
      a_agg, w1_blk, b1_t, w2_blk, b2_t, p_norm,
      wp1_big, bp1_t, wp2_exp, bp2, s_sum,
      wc1, bc1, wc2p, bc2p,
      wm1, bm1, wm2p, bm2p, const)

    res_claim = out[:B, 0 * NCP:0 * NCP + nclass]
    res_final = out[:B, 1 * NCP:1 * NCP + nclass]
    cf_res = out[:B, 2 * NCP:2 * NCP + nclass]
    tie = out[:B, 3 * NCP:3 * NCP + nclass]
    return res_claim, res_final, cf_res, tie


def reference_forward(pooled_output, claims, sent_labels, p):
    """Pure-JAX f32 reference mirroring the PyTorch op structure."""
    B, N, F = pooled_output.shape
    lbl = sent_labels.astype(jnp.float32)
    n = lbl.sum(axis=1, keepdims=True)                               # (B, 1)
    idx = jnp.arange(N, dtype=jnp.float32)[None, :]
    valid = (idx < n).astype(jnp.float32)[..., None]                 # (B, N, 1)
    denom = (2.0 * n - 1.0)[..., None]                               # (B, 1, 1)
    elu = jax.nn.elu

    def gcn(h, W, b):
        s = (h * valid).sum(axis=1, keepdims=True)
        agg = (2.0 * s - h) / denom
        hh = valid * agg + (1.0 - valid) * h
        return hh @ W + b

    h = elu(gcn(pooled_output, p['w1'], p['b1']))
    h = elu(gcn(h, p['w2'], p['b2']))
    h = h / jnp.maximum(jnp.linalg.norm(h, axis=-1, keepdims=True), 1e-12)

    claim_nodes, evid = h[:, 0, :], h[:, 1:, :]
    temp = jnp.concatenate(
        [jnp.broadcast_to(claim_nodes[:, None, :], evid.shape), evid], axis=-1)
    w = elu(temp @ p['wp1'] + p['bp1'])
    w = elu(w @ p['wp2'] + p['bp2'])                                 # (B, E, 1)
    w = jnp.where(lbl[:, 1:, None] == 0, -jnp.inf, w)
    w = jax.nn.softmax(w, axis=1)
    rep = (w * evid).sum(axis=1)                                     # (B, F)

    o = elu(rep @ p['wc1'] + p['bc1'])
    fusion = elu(o @ p['wc2'] + p['bc2'])

    cm = jax.nn.relu(claims @ p['wm1'] + p['bm1'])
    res_claim = jax.nn.relu(cm @ p['wm2'] + p['bm2'])

    res_final = jnp.log(1e-8 + jax.nn.sigmoid(res_claim + fusion))
    cf_res = jnp.log(1e-8 + jax.nn.sigmoid(res_claim + p['constant']))
    tie = res_final - cf_res
    return res_claim, res_final, cf_res, tie


if __name__ == "__main__":
    key = jax.random.PRNGKey(0)
    B, evi_max_num, nfeat, nclass = 16, 7, 32, 3
    N = 1 + evi_max_num
    H = 64

    ks = jax.random.split(key, 20)

    def init(k, shape, scale=0.1):
        return (scale * jax.random.normal(k, shape)).astype(jnp.float32)

    params = {
        'w1':  init(ks[0], (nfeat, nfeat)),   'b1':  init(ks[1], (1, nfeat)),
        'w2':  init(ks[2], (nfeat, nfeat)),   'b2':  init(ks[3], (1, nfeat)),
        'wp1': init(ks[4], (2 * nfeat, H)),   'bp1': init(ks[5], (1, H)),
        'wp2': init(ks[6], (H, 1)),           'bp2': init(ks[7], (1, 1)),
        'wc1': init(ks[8], (nfeat, nfeat)),   'bc1': init(ks[9], (1, nfeat)),
        'wc2': init(ks[10], (nfeat, nclass)), 'bc2': init(ks[11], (1, nclass)),
        'wm1': init(ks[12], (nfeat, nfeat)),  'bm1': init(ks[13], (1, nfeat)),
        'wm2': init(ks[14], (nfeat, nclass)), 'bm2': init(ks[15], (1, nclass)),
        'constant': jnp.float32(0.25),        # learned scalar; nonzero to exercise cf path
    }

    pooled_output = jax.random.normal(ks[16], (B, N, nfeat), dtype=jnp.float32)
    claims = jax.random.normal(ks[17], (B, nfeat), dtype=jnp.float32)
    # contiguous sent_labels with >= 1 valid evidence per graph
    n_valid = jax.random.randint(ks[18], (B,), 2, N + 1)
    sent_labels = (jnp.arange(N)[None, :] < n_valid[:, None]).astype(jnp.int32)

    outs = clever_graph_forward(pooled_output, claims, sent_labels, params)
    outs = jax.block_until_ready(outs)

    refs = reference_forward(pooled_output, claims, sent_labels, params)
    # bf16 MXU inputs (f32 accumulation) vs the f32 reference -> ~1e-2-level tolerance.
    for o, r in zip(outs, refs):
        assert o.shape == (B, nclass)
        np.testing.assert_allclose(np.asarray(o), np.asarray(r), rtol=3e-2, atol=3e-2)

    print("KERNEL_OK")
</pallas_src>

<mosaic_0001>
module attributes {stable_mosaic.version = 11 : i64} {
  func.func @_clever_kernel(%arg0: i32, %arg1: memref<8x1xf32, #tpu.memory_space<vmem>>, %arg2: memref<8x256xbf16, #tpu.memory_space<vmem>>, %arg3: memref<8x32xbf16, #tpu.memory_space<vmem>>, %arg4: memref<1x256xf32, #tpu.memory_space<vmem>>, %arg5: memref<256x256xbf16, #tpu.memory_space<vmem>>, %arg6: memref<256x256xbf16, #tpu.memory_space<vmem>>, %arg7: memref<1x256xf32, #tpu.memory_space<vmem>>, %arg8: memref<256x256xbf16, #tpu.memory_space<vmem>>, %arg9: memref<1x256xf32, #tpu.memory_space<vmem>>, %arg10: memref<256x256xbf16, #tpu.memory_space<vmem>>, %arg11: memref<256x512xbf16, #tpu.memory_space<vmem>>, %arg12: memref<1x512xf32, #tpu.memory_space<vmem>>, %arg13: memref<512x256xbf16, #tpu.memory_space<vmem>>, %arg14: memref<1x1xf32, #tpu.memory_space<vmem>>, %arg15: memref<256x32xbf16, #tpu.memory_space<vmem>>, %arg16: memref<32x32xbf16, #tpu.memory_space<vmem>>, %arg17: memref<1x32xf32, #tpu.memory_space<vmem>>, %arg18: memref<32x32xbf16, #tpu.memory_space<vmem>>, %arg19: memref<1x32xf32, #tpu.memory_space<vmem>>, %arg20: memref<32x32xbf16, #tpu.memory_space<vmem>>, %arg21: memref<1x32xf32, #tpu.memory_space<vmem>>, %arg22: memref<32x32xbf16, #tpu.memory_space<vmem>>, %arg23: memref<1x32xf32, #tpu.memory_space<vmem>>, %arg24: memref<1x1xf32, #tpu.memory_space<vmem>>, %arg25: memref<8x128xf32, #tpu.memory_space<vmem>>) attributes {dimension_semantics = [#tpu.dimension_semantics<parallel>], iteration_bounds = array<i64: 2>, scalar_prefetch = 0 : i64, scratch_operands = 0 : i64, tpu.core_type = #tpu.core_type<tc>, window_params = [{transform_indices = @transform_0, window_bounds = array<i64: 8, 1>}, {transform_indices = @transform_1, window_bounds = array<i64: 8, 256>}, {transform_indices = @transform_2, window_bounds = array<i64: 8, 32>}, {pipeline_mode = #tpu.pipeline_mode<synchronous>, transform_indices = @transform_3, window_bounds = array<i64: 1, 256>}, {pipeline_mode = #tpu.pipeline_mode<synchronous>, transform_indices = @transform_4, window_bounds = array<i64: 256, 256>}, {pipeline_mode = #tpu.pipeline_mode<synchronous>, transform_indices = @transform_5, window_bounds = array<i64: 256, 256>}, {pipeline_mode = #tpu.pipeline_mode<synchronous>, transform_indices = @transform_6, window_bounds = array<i64: 1, 256>}, {pipeline_mode = #tpu.pipeline_mode<synchronous>, transform_indices = @transform_7, window_bounds = array<i64: 256, 256>}, {pipeline_mode = #tpu.pipeline_mode<synchronous>, transform_indices = @transform_8, window_bounds = array<i64: 1, 256>}, {pipeline_mode = #tpu.pipeline_mode<synchronous>, transform_indices = @transform_9, window_bounds = array<i64: 256, 256>}, {pipeline_mode = #tpu.pipeline_mode<synchronous>, transform_indices = @transform_10, window_bounds = array<i64: 256, 512>}, {pipeline_mode = #tpu.pipeline_mode<synchronous>, transform_indices = @transform_11, window_bounds = array<i64: 1, 512>}, {pipeline_mode = #tpu.pipeline_mode<synchronous>, transform_indices = @transform_12, window_bounds = array<i64: 512, 256>}, {pipeline_mode = #tpu.pipeline_mode<synchronous>, transform_indices = @transform_13, window_bounds = array<i64: 1, 1>}, {pipeline_mode = #tpu.pipeline_mode<synchronous>, transform_indices = @transform_14, window_bounds = array<i64: 256, 32>}, {pipeline_mode = #tpu.pipeline_mode<synchronous>, transform_indices = @transform_15, window_bounds = array<i64: 32, 32>}, {pipeline_mode = #tpu.pipeline_mode<synchronous>, transform_indices = @transform_16, window_bounds = array<i64: 1, 32>}, {pipeline_mode = #tpu.pipeline_mode<synchronous>, transform_indices = @transform_17, window_bounds = array<i64: 32, 32>}, {pipeline_mode = #tpu.pipeline_mode<synchronous>, transform_indices = @transform_18, window_bounds = array<i64: 1, 32>}, {pipeline_mode = #tpu.pipeline_mode<synchronous>, transform_indices = @transform_19, window_bounds = array<i64: 32, 32>}, {pipeline_mode = #tpu.pipeline_mode<synchronous>, transform_indices = @transform_20, window_bounds = array<i64: 1, 32>}, {pipeline_mode = #tpu.pipeline_mode<synchronous>, transform_indices = @transform_21, window_bounds = array<i64: 32, 32>}, {pipeline_mode = #tpu.pipeline_mode<synchronous>, transform_indices = @transform_22, window_bounds = array<i64: 1, 32>}, {pipeline_mode = #tpu.pipeline_mode<synchronous>, transform_indices = @transform_23, window_bounds = array<i64: 1, 1>}, {transform_indices = @transform_24, window_bounds = array<i64: 8, 128>}]} {
    %c0 = arith.constant 0 : index
    %c0_0 = arith.constant 0 : index
    %0 = vector.load %arg1[%c0, %c0_0] : memref<8x1xf32, #tpu.memory_space<vmem>>, vector<8x1xf32>
    %c0_1 = arith.constant 0 : index
    %c0_2 = arith.constant 0 : index
    %1 = vector.load %arg2[%c0_1, %c0_2] : memref<8x256xbf16, #tpu.memory_space<vmem>>, vector<8x256xbf16>
    %2 = arith.extf %1 : vector<8x256xbf16> to vector<8x256xf32>
    %c0_3 = arith.constant 0 : index
    %c0_4 = arith.constant 0 : index
    %3 = vector.load %arg4[%c0_3, %c0_4] : memref<1x256xf32, #tpu.memory_space<vmem>>, vector<1x256xf32>
    %4 = vector.broadcast %3 : vector<1x256xf32> to vector<8x256xf32>
    %5 = vector.broadcast %0 : vector<8x1xf32> to vector<8x256xf32>
    %6 = arith.cmpf olt, %4, %5 : vector<8x256xf32>
    %cst = arith.constant 1.000000e+00 : f32
    %7 = vector.broadcast %cst : f32 to vector<1x256xf32>
    %8 = arith.cmpf oge, %3, %7 : vector<1x256xf32>
    %9 = vector.broadcast %3 : vector<1x256xf32> to vector<8x256xf32>
    %10 = vector.broadcast %0 : vector<8x1xf32> to vector<8x256xf32>
    %11 = arith.cmpf olt, %9, %10 : vector<8x256xf32>
    %12 = vector.broadcast %8 : vector<1x256xi1> to vector<8x256xi1>
    %13 = arith.andi %12, %11 : vector<8x256xi1>
    %cst_5 = arith.constant 2.000000e+00 : f32
    %14 = vector.broadcast %cst_5 : f32 to vector<8x1xf32>
    %15 = arith.mulf %14, %0 : vector<8x1xf32>
    %cst_6 = arith.constant 1.000000e+00 : f32
    %16 = vector.broadcast %cst_6 : f32 to vector<8x1xf32>
    %17 = arith.subf %15, %16 : vector<8x1xf32>
    %cst_7 = arith.constant 1.000000e+00 : f32
    %18 = vector.broadcast %cst_7 : f32 to vector<8x1xf32>
    %19 = arith.divf %18, %17 : vector<8x1xf32>
    %c0_8 = arith.constant 0 : index
    %c0_9 = arith.constant 0 : index
    %20 = vector.load %arg5[%c0_8, %c0_9] : memref<256x256xbf16, #tpu.memory_space<vmem>>, vector<256x256xbf16>
    %cst_10 = arith.constant 0.000000e+00 : f32
    %21 = vector.broadcast %cst_10 : f32 to vector<8x256xf32>
    %22 = arith.select %6, %2, %21 : vector<8x256xi1>, vector<8x256xf32>
    %23 = arith.truncf %22 : vector<8x256xf32> to vector<8x256xbf16>
    %cst_11 = arith.constant dense<0.000000e+00> : vector<8x256xf32>
    %24 = tpu.matmul %23, %20, %cst_11 {dimension_numbers = #tpu.dot_dimension_numbers<[1], [0], [0], [1], [0, 0, 1, 1], [], []>} : vector<8x256xbf16>, vector<256x256xbf16>, vector<8x256xf32> -> vector<8x256xf32>
    %25 = vector.broadcast %19 : vector<8x1xf32> to vector<8x256xf32>
    %26 = arith.mulf %24, %25 : vector<8x256xf32>
    %27 = arith.select %6, %26, %2 : vector<8x256xi1>, vector<8x256xf32>
    %28 = arith.truncf %27 : vector<8x256xf32> to vector<8x256xbf16>
    %c0_12 = arith.constant 0 : index
    %c0_13 = arith.constant 0 : index
    %29 = vector.load %arg6[%c0_12, %c0_13] : memref<256x256xbf16, #tpu.memory_space<vmem>>, vector<256x256xbf16>
    %cst_14 = arith.constant dense<0.000000e+00> : vector<8x256xf32>
    %30 = tpu.matmul %28, %29, %cst_14 {dimension_numbers = #tpu.dot_dimension_numbers<[1], [0], [0], [1], [0, 0, 1, 1], [], []>} : vector<8x256xbf16>, vector<256x256xbf16>, vector<8x256xf32> -> vector<8x256xf32>
    %c0_15 = arith.constant 0 : index
    %c0_16 = arith.constant 0 : index
    %31 = vector.load %arg7[%c0_15, %c0_16] : memref<1x256xf32, #tpu.memory_space<vmem>>, vector<1x256xf32>
    %32 = vector.broadcast %31 : vector<1x256xf32> to vector<8x256xf32>
    %33 = arith.addf %30, %32 : vector<8x256xf32>
    %cst_17 = arith.constant 0.000000e+00 : f32
    %34 = vector.broadcast %cst_17 : f32 to vector<8x256xf32>
    %35 = arith.cmpf ogt, %33, %34 : vector<8x256xf32>
    %cst_18 = arith.constant 0.000000e+00 : f32
    %36 = vector.broadcast %cst_18 : f32 to vector<8x256xf32>
    %37 = arith.minimumf %33, %36 : vector<8x256xf32>
    %38 = math.exp %37 : vector<8x256xf32>
    %cst_19 = arith.constant 1.000000e+00 : f32
    %39 = vector.broadcast %cst_19 : f32 to vector<8x256xf32>
    %40 = arith.subf %38, %39 : vector<8x256xf32>
    %41 = arith.select %35, %33, %40 : vector<8x256xi1>, vector<8x256xf32>
    %cst_20 = arith.constant 0.000000e+00 : f32
    %42 = vector.broadcast %cst_20 : f32 to vector<8x256xf32>
    %43 = arith.select %6, %41, %42 : vector<8x256xi1>, vector<8x256xf32>
    %44 = arith.truncf %43 : vector<8x256xf32> to vector<8x256xbf16>
    %cst_21 = arith.constant dense<0.000000e+00> : vector<8x256xf32>
    %45 = tpu.matmul %44, %20, %cst_21 {dimension_numbers = #tpu.dot_dimension_numbers<[1], [0], [0], [1], [0, 0, 1, 1], [], []>} : vector<8x256xbf16>, vector<256x256xbf16>, vector<8x256xf32> -> vector<8x256xf32>
    %46 = vector.broadcast %19 : vector<8x1xf32> to vector<8x256xf32>
    %47 = arith.mulf %45, %46 : vector<8x256xf32>
    %48 = arith.select %6, %47, %41 : vector<8x256xi1>, vector<8x256xf32>
    %49 = arith.truncf %48 : vector<8x256xf32> to vector<8x256xbf16>
    %c0_22 = arith.constant 0 : index
    %c0_23 = arith.constant 0 : index
    %50 = vector.load %arg8[%c0_22, %c0_23] : memref<256x256xbf16, #tpu.memory_space<vmem>>, vector<256x256xbf16>
    %cst_24 = arith.constant dense<0.000000e+00> : vector<8x256xf32>
    %51 = tpu.matmul %49, %50, %cst_24 {dimension_numbers = #tpu.dot_dimension_numbers<[1], [0], [0], [1], [0, 0, 1, 1], [], []>} : vector<8x256xbf16>, vector<256x256xbf16>, vector<8x256xf32> -> vector<8x256xf32>
    %c0_25 = arith.constant 0 : index
    %c0_26 = arith.constant 0 : index
    %52 = vector.load %arg9[%c0_25, %c0_26] : memref<1x256xf32, #tpu.memory_space<vmem>>, vector<1x256xf32>
    %53 = vector.broadcast %52 : vector<1x256xf32> to vector<8x256xf32>
    %54 = arith.addf %51, %53 : vector<8x256xf32>
    %cst_27 = arith.constant 0.000000e+00 : f32
    %55 = vector.broadcast %cst_27 : f32 to vector<8x256xf32>
    %56 = arith.cmpf ogt, %54, %55 : vector<8x256xf32>
    %cst_28 = arith.constant 0.000000e+00 : f32
    %57 = vector.broadcast %cst_28 : f32 to vector<8x256xf32>
    %58 = arith.minimumf %54, %57 : vector<8x256xf32>
    %59 = math.exp %58 : vector<8x256xf32>
    %cst_29 = arith.constant 1.000000e+00 : f32
    %60 = vector.broadcast %cst_29 : f32 to vector<8x256xf32>
    %61 = arith.subf %59, %60 : vector<8x256xf32>
    %62 = arith.select %56, %54, %61 : vector<8x256xi1>, vector<8x256xf32>
    %63 = arith.mulf %62, %62 : vector<8x256xf32>
    %64 = arith.truncf %63 : vector<8x256xf32> to vector<8x256xbf16>
    %c0_30 = arith.constant 0 : index
    %c0_31 = arith.constant 0 : index
    %65 = vector.load %arg10[%c0_30, %c0_31] : memref<256x256xbf16, #tpu.memory_space<vmem>>, vector<256x256xbf16>
    %cst_32 = arith.constant dense<0.000000e+00> : vector<8x256xf32>
    %66 = tpu.matmul %64, %65, %cst_32 {dimension_numbers = #tpu.dot_dimension_numbers<[1], [0], [0], [1], [0, 0, 1, 1], [], []>} : vector<8x256xbf16>, vector<256x256xbf16>, vector<8x256xf32> -> vector<8x256xf32>
    %cst_33 = arith.constant 1.000000e-24 : f32
    %67 = vector.broadcast %cst_33 : f32 to vector<8x256xf32>
    %68 = arith.maximumf %66, %67 : vector<8x256xf32>
    %69 = math.rsqrt %68 : vector<8x256xf32>
    %70 = arith.mulf %62, %69 : vector<8x256xf32>
    %71 = arith.truncf %70 : vector<8x256xf32> to vector<8x256xbf16>
    %c0_34 = arith.constant 0 : index
    %c0_35 = arith.constant 0 : index
    %72 = vector.load %arg11[%c0_34, %c0_35] : memref<256x512xbf16, #tpu.memory_space<vmem>>, vector<256x512xbf16>
    %cst_36 = arith.constant dense<0.000000e+00> : vector<8x512xf32>
    %73 = tpu.matmul %71, %72, %cst_36 {dimension_numbers = #tpu.dot_dimension_numbers<[1], [0], [0], [1], [0, 0, 1, 1], [], []>} : vector<8x256xbf16>, vector<256x512xbf16>, vector<8x512xf32> -> vector<8x512xf32>
    %c0_37 = arith.constant 0 : index
    %c0_38 = arith.constant 0 : index
    %74 = vector.load %arg12[%c0_37, %c0_38] : memref<1x512xf32, #tpu.memory_space<vmem>>, vector<1x512xf32>
    %75 = vector.broadcast %74 : vector<1x512xf32> to vector<8x512xf32>
    %76 = arith.addf %73, %75 : vector<8x512xf32>
    %cst_39 = arith.constant 0.000000e+00 : f32
    %77 = vector.broadcast %cst_39 : f32 to vector<8x512xf32>
    %78 = arith.cmpf ogt, %76, %77 : vector<8x512xf32>
    %cst_40 = arith.constant 0.000000e+00 : f32
    %79 = vector.broadcast %cst_40 : f32 to vector<8x512xf32>
    %80 = arith.minimumf %76, %79 : vector<8x512xf32>
    %81 = math.exp %80 : vector<8x512xf32>
    %cst_41 = arith.constant 1.000000e+00 : f32
    %82 = vector.broadcast %cst_41 : f32 to vector<8x512xf32>
    %83 = arith.subf %81, %82 : vector<8x512xf32>
    %84 = arith.select %78, %76, %83 : vector<8x512xi1>, vector<8x512xf32>
    %85 = arith.truncf %84 : vector<8x512xf32> to vector<8x512xbf16>
    %c0_42 = arith.constant 0 : index
    %c0_43 = arith.constant 0 : index
    %86 = vector.load %arg13[%c0_42, %c0_43] : memref<512x256xbf16, #tpu.memory_space<vmem>>, vector<512x256xbf16>
    %cst_44 = arith.constant dense<0.000000e+00> : vector<8x256xf32>
    %87 = tpu.matmul %85, %86, %cst_44 {dimension_numbers = #tpu.dot_dimension_numbers<[1], [0], [0], [1], [0, 0, 1, 1], [], []>} : vector<8x512xbf16>, vector<512x256xbf16>, vector<8x256xf32> -> vector<8x256xf32>
    %c0_45 = arith.constant 0 : index
    %c0_46 = arith.constant 0 : index
    %88 = vector.load %arg14[%c0_45, %c0_46] : memref<1x1xf32, #tpu.memory_space<vmem>>, vector<1x1xf32>
    %89 = vector.broadcast %88 : vector<1x1xf32> to vector<8x256xf32>
    %90 = arith.addf %87, %89 : vector<8x256xf32>
    %cst_47 = arith.constant 0.000000e+00 : f32
    %91 = vector.broadcast %cst_47 : f32 to vector<8x256xf32>
    %92 = arith.cmpf ogt, %90, %91 : vector<8x256xf32>
    %cst_48 = arith.constant 0.000000e+00 : f32
    %93 = vector.broadcast %cst_48 : f32 to vector<8x256xf32>
    %94 = arith.minimumf %90, %93 : vector<8x256xf32>
    %95 = math.exp %94 : vector<8x256xf32>
    %cst_49 = arith.constant 1.000000e+00 : f32
    %96 = vector.broadcast %cst_49 : f32 to vector<8x256xf32>
    %97 = arith.subf %95, %96 : vector<8x256xf32>
    %98 = arith.select %92, %90, %97 : vector<8x256xi1>, vector<8x256xf32>
    %cst_50 = arith.constant -1.000000e+30 : f32
    %99 = vector.broadcast %cst_50 : f32 to vector<8x256xf32>
    %100 = arith.select %13, %98, %99 : vector<8x256xi1>, vector<8x256xf32>
    %cst_51 = arith.constant dense<0xFF800000> : vector<8xf32>
    %101 = vector.multi_reduction <maximumf>, %100, %cst_51 [1] : vector<8x256xf32> to vector<8xf32>
    %102 = vector.shape_cast %101 : vector<8xf32> to vector<8x1xf32>
    %103 = vector.broadcast %102 : vector<8x1xf32> to vector<8x256xf32>
    %104 = arith.subf %100, %103 : vector<8x256xf32>
    %105 = math.exp %104 : vector<8x256xf32>
    %cst_52 = arith.constant dense<0.000000e+00> : vector<8xf32>
    %106 = vector.multi_reduction <add>, %105, %cst_52 [1] : vector<8x256xf32> to vector<8xf32>
    %107 = vector.shape_cast %106 : vector<8xf32> to vector<8x1xf32>
    %108 = tpu.reciprocal %107 {approx = true} : vector<8x1xf32> -> vector<8x1xf32>
    %cst_53 = arith.constant 3.200000e+01 : f32
    %109 = vector.broadcast %cst_53 : f32 to vector<8x1xf32>
    %110 = arith.mulf %109, %108 : vector<8x1xf32>
    %111 = vector.broadcast %110 : vector<8x1xf32> to vector<8x256xf32>
    %112 = arith.mulf %105, %111 : vector<8x256xf32>
    %113 = arith.mulf %112, %70 : vector<8x256xf32>
    %114 = arith.truncf %113 : vector<8x256xf32> to vector<8x256xbf16>
    %c0_54 = arith.constant 0 : index
    %c0_55 = arith.constant 0 : index
    %115 = vector.load %arg15[%c0_54, %c0_55] : memref<256x32xbf16, #tpu.memory_space<vmem>>, vector<256x32xbf16>
    %cst_56 = arith.constant dense<0.000000e+00> : vector<8x32xf32>
    %116 = tpu.matmul %114, %115, %cst_56 {dimension_numbers = #tpu.dot_dimension_numbers<[1], [0], [0], [1], [0, 0, 1, 1], [], []>} : vector<8x256xbf16>, vector<256x32xbf16>, vector<8x32xf32> -> vector<8x32xf32>
    %117 = arith.truncf %116 : vector<8x32xf32> to vector<8x32xbf16>
    %c0_57 = arith.constant 0 : index
    %c0_58 = arith.constant 0 : index
    %118 = vector.load %arg16[%c0_57, %c0_58] : memref<32x32xbf16, #tpu.memory_space<vmem>>, vector<32x32xbf16>
    %cst_59 = arith.constant dense<0.000000e+00> : vector<8x32xf32>
    %119 = tpu.matmul %117, %118, %cst_59 {dimension_numbers = #tpu.dot_dimension_numbers<[1], [0], [0], [1], [0, 0, 1, 1], [], []>} : vector<8x32xbf16>, vector<32x32xbf16>, vector<8x32xf32> -> vector<8x32xf32>
    %c0_60 = arith.constant 0 : index
    %c0_61 = arith.constant 0 : index
    %120 = vector.load %arg17[%c0_60, %c0_61] : memref<1x32xf32, #tpu.memory_space<vmem>>, vector<1x32xf32>
    %121 = vector.broadcast %120 : vector<1x32xf32> to vector<8x32xf32>
    %122 = arith.addf %119, %121 : vector<8x32xf32>
    %cst_62 = arith.constant 0.000000e+00 : f32
    %123 = vector.broadcast %cst_62 : f32 to vector<8x32xf32>
    %124 = arith.cmpf ogt, %122, %123 : vector<8x32xf32>
    %cst_63 = arith.constant 0.000000e+00 : f32
    %125 = vector.broadcast %cst_63 : f32 to vector<8x32xf32>
    %126 = arith.minimumf %122, %125 : vector<8x32xf32>
    %127 = math.exp %126 : vector<8x32xf32>
    %cst_64 = arith.constant 1.000000e+00 : f32
    %128 = vector.broadcast %cst_64 : f32 to vector<8x32xf32>
    %129 = arith.subf %127, %128 : vector<8x32xf32>
    %130 = arith.select %124, %122, %129 : vector<8x32xi1>, vector<8x32xf32>
    %131 = arith.truncf %130 : vector<8x32xf32> to vector<8x32xbf16>
    %c0_65 = arith.constant 0 : index
    %c0_66 = arith.constant 0 : index
    %132 = vector.load %arg18[%c0_65, %c0_66] : memref<32x32xbf16, #tpu.memory_space<vmem>>, vector<32x32xbf16>
    %cst_67 = arith.constant dense<0.000000e+00> : vector<8x32xf32>
    %133 = tpu.matmul %131, %132, %cst_67 {dimension_numbers = #tpu.dot_dimension_numbers<[1], [0], [0], [1], [0, 0, 1, 1], [], []>} : vector<8x32xbf16>, vector<32x32xbf16>, vector<8x32xf32> -> vector<8x32xf32>
    %c0_68 = arith.constant 0 : index
    %c0_69 = arith.constant 0 : index
    %134 = vector.load %arg19[%c0_68, %c0_69] : memref<1x32xf32, #tpu.memory_space<vmem>>, vector<1x32xf32>
    %135 = vector.broadcast %134 : vector<1x32xf32> to vector<8x32xf32>
    %136 = arith.addf %133, %135 : vector<8x32xf32>
    %cst_70 = arith.constant 0.000000e+00 : f32
    %137 = vector.broadcast %cst_70 : f32 to vector<8x32xf32>
    %138 = arith.cmpf ogt, %136, %137 : vector<8x32xf32>
    %cst_71 = arith.constant 0.000000e+00 : f32
    %139 = vector.broadcast %cst_71 : f32 to vector<8x32xf32>
    %140 = arith.minimumf %136, %139 : vector<8x32xf32>
    %141 = math.exp %140 : vector<8x32xf32>
    %cst_72 = arith.constant 1.000000e+00 : f32
    %142 = vector.broadcast %cst_72 : f32 to vector<8x32xf32>
    %143 = arith.subf %141, %142 : vector<8x32xf32>
    %144 = arith.select %138, %136, %143 : vector<8x32xi1>, vector<8x32xf32>
    %c0_73 = arith.constant 0 : index
    %c0_74 = arith.constant 0 : index
    %145 = vector.load %arg3[%c0_73, %c0_74] : memref<8x32xbf16, #tpu.memory_space<vmem>>, vector<8x32xbf16>
    %c0_75 = arith.constant 0 : index
    %c0_76 = arith.constant 0 : index
    %146 = vector.load %arg20[%c0_75, %c0_76] : memref<32x32xbf16, #tpu.memory_space<vmem>>, vector<32x32xbf16>
    %cst_77 = arith.constant dense<0.000000e+00> : vector<8x32xf32>
    %147 = tpu.matmul %145, %146, %cst_77 {dimension_numbers = #tpu.dot_dimension_numbers<[1], [0], [0], [1], [0, 0, 1, 1], [], []>} : vector<8x32xbf16>, vector<32x32xbf16>, vector<8x32xf32> -> vector<8x32xf32>
    %c0_78 = arith.constant 0 : index
    %c0_79 = arith.constant 0 : index
    %148 = vector.load %arg21[%c0_78, %c0_79] : memref<1x32xf32, #tpu.memory_space<vmem>>, vector<1x32xf32>
    %149 = vector.broadcast %148 : vector<1x32xf32> to vector<8x32xf32>
    %150 = arith.addf %147, %149 : vector<8x32xf32>
    %cst_80 = arith.constant 0.000000e+00 : f32
    %151 = vector.broadcast %cst_80 : f32 to vector<8x32xf32>
    %152 = arith.maximumf %150, %151 : vector<8x32xf32>
    %153 = arith.truncf %152 : vector<8x32xf32> to vector<8x32xbf16>
    %c0_81 = arith.constant 0 : index
    %c0_82 = arith.constant 0 : index
    %154 = vector.load %arg22[%c0_81, %c0_82] : memref<32x32xbf16, #tpu.memory_space<vmem>>, vector<32x32xbf16>
    %cst_83 = arith.constant dense<0.000000e+00> : vector<8x32xf32>
    %155 = tpu.matmul %153, %154, %cst_83 {dimension_numbers = #tpu.dot_dimension_numbers<[1], [0], [0], [1], [0, 0, 1, 1], [], []>} : vector<8x32xbf16>, vector<32x32xbf16>, vector<8x32xf32> -> vector<8x32xf32>
    %c0_84 = arith.constant 0 : index
    %c0_85 = arith.constant 0 : index
    %156 = vector.load %arg23[%c0_84, %c0_85] : memref<1x32xf32, #tpu.memory_space<vmem>>, vector<1x32xf32>
    %157 = vector.broadcast %156 : vector<1x32xf32> to vector<8x32xf32>
    %158 = arith.addf %155, %157 : vector<8x32xf32>
    %cst_86 = arith.constant 0.000000e+00 : f32
    %159 = vector.broadcast %cst_86 : f32 to vector<8x32xf32>
    %160 = arith.maximumf %158, %159 : vector<8x32xf32>
    %161 = arith.addf %160, %144 : vector<8x32xf32>
    %cst_87 = arith.constant 0.000000e+00 : f32
    %162 = vector.broadcast %cst_87 : f32 to vector<8x32xf32>
    %163 = arith.subf %162, %161 : vector<8x32xf32>
    %164 = math.exp %163 : vector<8x32xf32>
    %cst_88 = arith.constant 1.000000e+00 : f32
    %165 = vector.broadcast %cst_88 : f32 to vector<8x32xf32>
    %166 = arith.addf %165, %164 : vector<8x32xf32>
    %cst_89 = arith.constant 1.000000e+00 : f32
    %167 = vector.broadcast %cst_89 : f32 to vector<8x32xf32>
    %168 = arith.divf %167, %166 : vector<8x32xf32>
    %cst_90 = arith.constant 9.99999993E-9 : f32
    %169 = vector.broadcast %cst_90 : f32 to vector<8x32xf32>
    %170 = arith.addf %169, %168 : vector<8x32xf32>
    %171 = math.log %170 : vector<8x32xf32>
    %c0_91 = arith.constant 0 : index
    %c0_92 = arith.constant 0 : index
    %172 = vector.load %arg24[%c0_91, %c0_92] : memref<1x1xf32, #tpu.memory_space<vmem>>, vector<1x1xf32>
    %173 = vector.broadcast %172 : vector<1x1xf32> to vector<8x32xf32>
    %174 = arith.addf %160, %173 : vector<8x32xf32>
    %cst_93 = arith.constant 0.000000e+00 : f32
    %175 = vector.broadcast %cst_93 : f32 to vector<8x32xf32>
    %176 = arith.subf %175, %174 : vector<8x32xf32>
    %177 = math.exp %176 : vector<8x32xf32>
    %cst_94 = arith.constant 1.000000e+00 : f32
    %178 = vector.broadcast %cst_94 : f32 to vector<8x32xf32>
    %179 = arith.addf %178, %177 : vector<8x32xf32>
    %cst_95 = arith.constant 1.000000e+00 : f32
    %180 = vector.broadcast %cst_95 : f32 to vector<8x32xf32>
    %181 = arith.divf %180, %179 : vector<8x32xf32>
    %cst_96 = arith.constant 9.99999993E-9 : f32
    %182 = vector.broadcast %cst_96 : f32 to vector<8x32xf32>
    %183 = arith.addf %182, %181 : vector<8x32xf32>
    %184 = math.log %183 : vector<8x32xf32>
    %c0_97 = arith.constant 0 : index
    %c0_98 = arith.constant 0 : index
    %185 = vector.load %arg25[%c0_97, %c0_98] : memref<8x128xf32, #tpu.memory_space<vmem>>, vector<8x32xf32>
    tpu.vector_store %arg25[%c0_97, %c0_98], %160 {strides = array<i32>} : memref<8x128xf32, #tpu.memory_space<vmem>>, vector<8x32xf32>,
    %c0_99 = arith.constant 0 : index
    %c32 = arith.constant 32 : index
    %186 = vector.load %arg25[%c0_99, %c32] : memref<8x128xf32, #tpu.memory_space<vmem>>, vector<8x32xf32>
    tpu.vector_store %arg25[%c0_99, %c32], %171 {strides = array<i32>} : memref<8x128xf32, #tpu.memory_space<vmem>>, vector<8x32xf32>,
    %c0_100 = arith.constant 0 : index
    %c64 = arith.constant 64 : index
    %187 = vector.load %arg25[%c0_100, %c64] : memref<8x128xf32, #tpu.memory_space<vmem>>, vector<8x32xf32>
    tpu.vector_store %arg25[%c0_100, %c64], %184 {strides = array<i32>} : memref<8x128xf32, #tpu.memory_space<vmem>>, vector<8x32xf32>,
    %188 = arith.subf %171, %184 : vector<8x32xf32>
    %c0_101 = arith.constant 0 : index
    %c96 = arith.constant 96 : index
    %189 = vector.load %arg25[%c0_101, %c96] : memref<8x128xf32, #tpu.memory_space<vmem>>, vector<8x32xf32>
    tpu.vector_store %arg25[%c0_101, %c96], %188 {strides = array<i32>} : memref<8x128xf32, #tpu.memory_space<vmem>>, vector<8x32xf32>,
    return
  }
  func.func @transform_0(%arg0: i32) -> (i32, i32) {
    %c0_i32 = arith.constant 0 : i32
    %c0_i32_0 = arith.constant 0 : i32
    return %arg0, %c0_i32 : i32, i32
  }
  func.func @transform_1(%arg0: i32) -> (i32, i32) {
    %c0_i32 = arith.constant 0 : i32
    %c0_i32_0 = arith.constant 0 : i32
    return %arg0, %c0_i32 : i32, i32
  }
  func.func @transform_2(%arg0: i32) -> (i32, i32) {
    %c0_i32 = arith.constant 0 : i32
    %c0_i32_0 = arith.constant 0 : i32
    return %arg0, %c0_i32 : i32, i32
  }
  func.func @transform_3(%arg0: i32) -> (i32, i32) {
    %c0_i32 = arith.constant 0 : i32
    %c0_i32_0 = arith.constant 0 : i32
    %c0_i32_1 = arith.constant 0 : i32
    return %c0_i32, %c0_i32_0 : i32, i32
  }
  func.func @transform_4(%arg0: i32) -> (i32, i32) {
    %c0_i32 = arith.constant 0 : i32
    %c0_i32_0 = arith.constant 0 : i32
    %c0_i32_1 = arith.constant 0 : i32
    return %c0_i32, %c0_i32_0 : i32, i32
  }
  func.func @transform_5(%arg0: i32) -> (i32, i32) {
    %c0_i32 = arith.constant 0 : i32
    %c0_i32_0 = arith.constant 0 : i32
    %c0_i32_1 = arith.constant 0 : i32
    return %c0_i32, %c0_i32_0 : i32, i32
  }
  func.func @transform_6(%arg0: i32) -> (i32, i32) {
    %c0_i32 = arith.constant 0 : i32
    %c0_i32_0 = arith.constant 0 : i32
    %c0_i32_1 = arith.constant 0 : i32
    return %c0_i32, %c0_i32_0 : i32, i32
  }
  func.func @transform_7(%arg0: i32) -> (i32, i32) {
    %c0_i32 = arith.constant 0 : i32
    %c0_i32_0 = arith.constant 0 : i32
    %c0_i32_1 = arith.constant 0 : i32
    return %c0_i32, %c0_i32_0 : i32, i32
  }
  func.func @transform_8(%arg0: i32) -> (i32, i32) {
    %c0_i32 = arith.constant 0 : i32
    %c0_i32_0 = arith.constant 0 : i32
    %c0_i32_1 = arith.constant 0 : i32
    return %c0_i32, %c0_i32_0 : i32, i32
  }
  func.func @transform_9(%arg0: i32) -> (i32, i32) {
    %c0_i32 = arith.constant 0 : i32
    %c0_i32_0 = arith.constant 0 : i32
    %c0_i32_1 = arith.constant 0 : i32
    return %c0_i32, %c0_i32_0 : i32, i32
  }
  func.func @transform_10(%arg0: i32) -> (i32, i32) {
    %c0_i32 = arith.constant 0 : i32
    %c0_i32_0 = arith.constant 0 : i32
    %c0_i32_1 = arith.constant 0 : i32
    return %c0_i32, %c0_i32_0 : i32, i32
  }
  func.func @transform_11(%arg0: i32) -> (i32, i32) {
    %c0_i32 = arith.constant 0 : i32
    %c0_i32_0 = arith.constant 0 : i32
    %c0_i32_1 = arith.constant 0 : i32
    return %c0_i32, %c0_i32_0 : i32, i32
  }
  func.func @transform_12(%arg0: i32) -> (i32, i32) {
    %c0_i32 = arith.constant 0 : i32
    %c0_i32_0 = arith.constant 0 : i32
    %c0_i32_1 = arith.constant 0 : i32
    return %c0_i32, %c0_i32_0 : i32, i32
  }
  func.func @transform_13(%arg0: i32) -> (i32, i32) {
    %c0_i32 = arith.constant 0 : i32
    %c0_i32_0 = arith.constant 0 : i32
    %c0_i32_1 = arith.constant 0 : i32
    return %c0_i32, %c0_i32_0 : i32, i32
  }
  func.func @transform_14(%arg0: i32) -> (i32, i32) {
    %c0_i32 = arith.constant 0 : i32
    %c0_i32_0 = arith.constant 0 : i32
    %c0_i32_1 = arith.constant 0 : i32
    return %c0_i32, %c0_i32_0 : i32, i32
  }
  func.func @transform_15(%arg0: i32) -> (i32, i32) {
    %c0_i32 = arith.constant 0 : i32
    %c0_i32_0 = arith.constant 0 : i32
    %c0_i32_1 = arith.constant 0 : i32
    return %c0_i32, %c0_i32_0 : i32, i32
  }
  func.func @transform_16(%arg0: i32) -> (i32, i32) {
    %c0_i32 = arith.constant 0 : i32
    %c0_i32_0 = arith.constant 0 : i32
    %c0_i32_1 = arith.constant 0 : i32
    return %c0_i32, %c0_i32_0 : i32, i32
  }
  func.func @transform_17(%arg0: i32) -> (i32, i32) {
    %c0_i32 = arith.constant 0 : i32
    %c0_i32_0 = arith.constant 0 : i32
    %c0_i32_1 = arith.constant 0 : i32
    return %c0_i32, %c0_i32_0 : i32, i32
  }
  func.func @transform_18(%arg0: i32) -> (i32, i32) {
    %c0_i32 = arith.constant 0 : i32
    %c0_i32_0 = arith.constant 0 : i32
    %c0_i32_1 = arith.constant 0 : i32
    return %c0_i32, %c0_i32_0 : i32, i32
  }
  func.func @transform_19(%arg0: i32) -> (i32, i32) {
    %c0_i32 = arith.constant 0 : i32
    %c0_i32_0 = arith.constant 0 : i32
    %c0_i32_1 = arith.constant 0 : i32
    return %c0_i32, %c0_i32_0 : i32, i32
  }
  func.func @transform_20(%arg0: i32) -> (i32, i32) {
    %c0_i32 = arith.constant 0 : i32
    %c0_i32_0 = arith.constant 0 : i32
    %c0_i32_1 = arith.constant 0 : i32
    return %c0_i32, %c0_i32_0 : i32, i32
  }
  func.func @transform_21(%arg0: i32) -> (i32, i32) {
    %c0_i32 = arith.constant 0 : i32
    %c0_i32_0 = arith.constant 0 : i32
    %c0_i32_1 = arith.constant 0 : i32
    return %c0_i32, %c0_i32_0 : i32, i32
  }
  func.func @transform_22(%arg0: i32) -> (i32, i32) {
    %c0_i32 = arith.constant 0 : i32
    %c0_i32_0 = arith.constant 0 : i32
    %c0_i32_1 = arith.constant 0 : i32
    return %c0_i32, %c0_i32_0 : i32, i32
  }
  func.func @transform_23(%arg0: i32) -> (i32, i32) {
    %c0_i32 = arith.constant 0 : i32
    %c0_i32_0 = arith.constant 0 : i32
    %c0_i32_1 = arith.constant 0 : i32
    return %c0_i32, %c0_i32_0 : i32, i32
  }
  func.func @transform_24(%arg0: i32) -> (i32, i32) {
    %c0_i32 = arith.constant 0 : i32
    %c0_i32_0 = arith.constant 0 : i32
    return %arg0, %c0_i32 : i32, i32
  }
}

</mosaic_0001>

<llo_original>
// kernel: tpu_custom_call.1
$region0: #{tpu_custom_call.1}
  #allocation0 [shape = 'u32[]', space=smem, size = 0x4, offset = 0x4, fixed_abs, tag = 'smem constant byte address 0x4 - core index']
  #allocation1 [shape = 'u32[144,128]{1,0:T(1,128)}', space=vmem, size = 0x12000, scoped, tag = 'internal scratch']
  #allocation2 [shape = 'f32[1,1]{1,0:T(1,128)S(1)}', space=vmem, size = 0x200, scoped, tag = 'scoped memory for tpu_custom_call.1']
  #allocation3 [shape = 'f32[1,1]{1,0:T(1,128)S(1)}', space=vmem, size = 0x200, scoped, tag = 'scoped memory for tpu_custom_call.1']
  %s0 = inlined_call_operand.vmem [shape: f32[16,1], index: 0, kind: input, shape index: {}]
  %s1 = inlined_call_operand.vmem [shape: bf16[16,256], index: 1, kind: input, shape index: {}]
  %s2 = inlined_call_operand.vmem [shape: bf16[16,32], index: 2, kind: input, shape index: {}]
  %s3 = inlined_call_operand.vmem [shape: f32[1,256], index: 3, kind: input, shape index: {}]
  %s4 = inlined_call_operand.hbm [shape: bf16[256,256], index: 4, kind: input, shape index: {}]
  %s5 = inlined_call_operand.hbm [shape: bf16[256,256], index: 5, kind: input, shape index: {}]
  %s6 = inlined_call_operand.vmem [shape: f32[1,256], index: 6, kind: input, shape index: {}]
  %s7 = inlined_call_operand.hbm [shape: bf16[256,256], index: 7, kind: input, shape index: {}]
  %s8 = inlined_call_operand.vmem [shape: f32[1,256], index: 8, kind: input, shape index: {}]
  %s9 = inlined_call_operand.hbm [shape: bf16[256,256], index: 9, kind: input, shape index: {}]
  %s10 = inlined_call_operand.hbm [shape: bf16[256,512], index: 10, kind: input, shape index: {}]
  %s11 = inlined_call_operand.vmem [shape: f32[1,512], index: 11, kind: input, shape index: {}]
  %s12 = inlined_call_operand.hbm [shape: bf16[512,256], index: 12, kind: input, shape index: {}]
  %s13 = inlined_call_operand.<no memory space> [shape: f32[1,1], index: 13, kind: input, shape index: {}]
  %s14 = inlined_call_operand.vmem [shape: bf16[256,32], index: 14, kind: input, shape index: {}]
  %s15 = inlined_call_operand.vmem [shape: bf16[32,32], index: 15, kind: input, shape index: {}]
  %s16 = inlined_call_operand.vmem [shape: f32[1,32], index: 16, kind: input, shape index: {}]
  %s17 = inlined_call_operand.vmem [shape: bf16[32,32], index: 17, kind: input, shape index: {}]
  %s18 = inlined_call_operand.vmem [shape: f32[1,32], index: 18, kind: input, shape index: {}]
  %s19 = inlined_call_operand.vmem [shape: bf16[32,32], index: 19, kind: input, shape index: {}]
  %s20 = inlined_call_operand.vmem [shape: f32[1,32], index: 20, kind: input, shape index: {}]
  %s21 = inlined_call_operand.vmem [shape: bf16[32,32], index: 21, kind: input, shape index: {}]
  %s22 = inlined_call_operand.vmem [shape: f32[1,32], index: 22, kind: input, shape index: {}]
  %s23 = inlined_call_operand.<no memory space> [shape: f32[1,1], index: 23, kind: input, shape index: {}]
  %s24 = inlined_call_operand.hbm [shape: f32[16,128], index: 24, kind: output, shape index: {}]
  %s25 = sld [smem:[#allocation0]]
  $region153: #{tpu_custom_call.1} parent=0
    _
  %s27 = ssub.s32 1, %s25
  %s28 = scalar_select 0, %s27, %s25
  %v29 = vstv %s13
  %30 = vst [vmem:[#allocation2] sm:$0x1] %v29
  %v31 = vstv %s23
  %32 = vst [vmem:[#allocation3] sm:$0x1] %v31
  $region1: #{tpu_custom_call.1} parent=0
    #allocation4 [shape = 'u8[131072]{0}', space=vmem, size = 0x20000, scoped, tag = 'input window, operand 4, single buffered']
    #allocation5 [shape = 's32[2]{0}', space=sflag, size = 0x8, scoped, tag = 'scoped memory for tpu_custom_call.1']
    #allocation6 [shape = 's32[2]{0}', space=sflag, size = 0x8, scoped, tag = 'scoped memory for tpu_custom_call.1']
    #allocation7 [shape = 'u8[131072]{0}', space=vmem, size = 0x20000, scoped, tag = 'input window, operand 5, single buffered']
    #allocation8 [shape = 's32[1]{0}', space=sflag, size = 0x4, scoped, tag = 'scoped memory for tpu_custom_call.1']
    #allocation9 [shape = 'u8[131072]{0}', space=vmem, size = 0x20000, scoped, tag = 'input window, operand 7, single buffered']
    #allocation10 [shape = 'u8[131072]{0}', space=vmem, size = 0x20000, scoped, tag = 'input window, operand 9, single buffered']
    #allocation11 [shape = 's32[1]{0}', space=sflag, size = 0x4, scoped, tag = 'scoped memory for tpu_custom_call.1']
    #allocation12 [shape = 'u8[262144]{0}', space=vmem, size = 0x40000, scoped, tag = 'input window, operand 10, single buffered']
    #allocation13 [shape = 'u8[262144]{0}', space=vmem, size = 0x40000, scoped, tag = 'input window, operand 12, single buffered']
    #allocation14 [shape = 's32[1]{0}', space=sflag, size = 0x4, scoped, tag = 'scoped memory for tpu_custom_call.1']
    #allocation15 [shape = 'u8[8192]{0}', space=vmem, size = 0x2000, scoped, tag = 'output window, operand 0']
    %33 = vsyncpa [#allocation5], 0
    %34 = vsyncpa [#allocation8], 0
    %35 = vsyncpa [#allocation11], 0
    %36 = vsyncpa [#allocation14], 0
    %37 = vsyncpa [#allocation6], 0
    %s38 = scalar_lea.sflag [#allocation6], 1
    %39 = vsyncpa %s38, 0
    loop: start=0, step=1, limit=4
    $region2: #{tpu_custom_call.1} parent=1 // loop_pre_header
      _
    $region3: #{tpu_custom_call.1} parent=1 // loop_header
      %s41 = sphi 0, %s45
      %p42 = scmp.ge.s32.totalorder %s41, 4
      %s51 = sphi 0, %s53
      %s54 = sphi 0, %s51
      %s55 = sphi 0, %s54
      %s71 = sphi 0, %s55
      %s77 = sphi 0, %s79
      %s80 = sphi 0, %s77
      %s81 = sphi 0, %s80
      %s97 = sphi 0, %s81
      %s103 = sphi 0, %s105
      %s106 = sphi 0, %s103
      %s107 = sphi 0, %s106
      %s123 = sphi 0, %s107
      %s127 = sphi 0, %s127
      %s129 = sphi 0, %s127
      %s130 = sphi 0, %s129
      %s144 = sphi 0, %s130
      %s148 = sphi 0, %s148
      %s150 = sphi 0, %s148
      %s151 = sphi 0, %s150
      %s165 = sphi 0, %s151
      %s169 = sphi 0, %s169
      %s171 = sphi 0, %s169
      %s172 = sphi 0, %s171
      %s186 = sphi 0, %s172
      %s190 = sphi 0, %s190
      %s192 = sphi 0, %s190
      %s193 = sphi 0, %s192
      %s207 = sphi 0, %s193
      %s211 = sphi 0, %s211
      %s213 = sphi 0, %s211
      %s214 = sphi 0, %s213
      %s228 = sphi 0, %s214
      %s232 = sphi 0, %s232
      %s234 = sphi 0, %s232
      %s235 = sphi 0, %s234
      %s249 = sphi 0, %s235
      %s253 = sphi 0, %s253
      %s255 = sphi 0, %s253
      %s256 = sphi 0, %s255
      %s270 = sphi 0, %s256
      %s274 = sphi 0, %s274
      %s276 = sphi 0, %s274
      %s277 = sphi 0, %s276
      %s291 = sphi 0, %s277
      %s295 = sphi 0, %s295
      %s297 = sphi 0, %s295
      %s298 = sphi 0, %s297
      %s312 = sphi 0, %s298
      %s316 = sphi 0, %s316
      %s318 = sphi 0, %s316
      %s319 = sphi 0, %s318
      %s333 = sphi 0, %s319
      %s337 = sphi 0, %s337
      %s339 = sphi 0, %s337
      %s340 = sphi 0, %s339
      %s354 = sphi 0, %s340
      %s358 = sphi 0, %s358
      %s360 = sphi 0, %s358
      %s361 = sphi 0, %s360
      %s375 = sphi 0, %s361
      %s379 = sphi 0, %s379
      %s381 = sphi 0, %s379
      %s382 = sphi 0, %s381
      %s396 = sphi 0, %s382
      %s400 = sphi 0, %s400
      %s402 = sphi 0, %s400
      %s403 = sphi 0, %s402
      %s417 = sphi 0, %s403
      %s421 = sphi 0, %s421
      %s423 = sphi 0, %s421
      %s424 = sphi 0, %s423
      %s438 = sphi 0, %s424
      %s442 = sphi 0, %s442
      %s444 = sphi 0, %s442
      %s445 = sphi 0, %s444
      %s459 = sphi 0, %s445
      %s463 = sphi 0, %s463
      %s465 = sphi 0, %s463
      %s466 = sphi 0, %s465
      %s480 = sphi 0, %s466
      %s484 = sphi 0, %s484
      %s486 = sphi 0, %s484
      %s487 = sphi 0, %s486
      %s501 = sphi 0, %s487
      %s505 = sphi 0, %s505
      %s507 = sphi 0, %s505
      %s508 = sphi 0, %s507
      %s522 = sphi 0, %s508
      %s526 = sphi 0, %s526
      %s528 = sphi 0, %s526
      %s529 = sphi 0, %s528
      %s543 = sphi 0, %s529
      %s547 = sphi 0, %s547
      %s549 = sphi 0, %s547
      %s550 = sphi 0, %s549
      %s564 = sphi 0, %s550
      %s570 = sphi 0, %s572
      %s573 = sphi 0, %s570
      %s574 = sphi 0, %s573
      %s590 = sphi 0, %s574
    $region4: #{tpu_custom_call.1} parent=1 // loop_header_branch
      %44 = sbr.rel (%p42) target = $region8
    $region5: #{tpu_custom_call.1} parent=1 // loop_body
      %s46 = ssub.s32 %s41, 1
      %s47 = ssub.s32 %s41, 2
      %s48 = sadd.s32 %s41, 1
      %s49 = ssub.s32 %s41, %s48
      %p50 = scmp.eq.s32.totalorder %s49, 0
      %s52 = sadd.s32 %s51, 1
      %s53 = scalar_select %p50, %s51, %s52
      %p56 = pneg %p50
      %p57 = scmp.eq.s32.totalorder %s41, 1
      %p58 = por %p56, %p57
      %p59 = scmp.ne.s32.totalorder %s51, %s54
      %p60 = scmp.eq.s32.totalorder %s41, 0
      %p61 = por %p59, %p60
      %p62 = scmp.ne.s32.totalorder %s51, %s54
      %p63 = scmp.eq.s32.totalorder %s46, 1
      %p64 = por %p62, %p63
      %p65 = scmp.ne.s32.totalorder %s54, %s55
      %p66 = scmp.eq.s32.totalorder %s46, 0
      %p67 = por %p65, %p66
      %p68 = scmp.ne.s32.totalorder %s54, %s55
      %p69 = scmp.eq.s32.totalorder %s47, 1
      %p70 = por %p68, %p69
      %p72 = scmp.ne.s32.totalorder %s55, %s71
      %p73 = scmp.eq.s32.totalorder %s47, 0
      %p74 = por %p72, %p73
      %s75 = ssub.s32 %s41, %s48
      %p76 = scmp.eq.s32.totalorder %s75, 0
      %s78 = sadd.s32 %s77, 1
      %s79 = scalar_select %p76, %s77, %s78
      %p82 = pneg %p76
      %p83 = scmp.eq.s32.totalorder %s41, 1
      %p84 = por %p82, %p83
      %p85 = scmp.ne.s32.totalorder %s77, %s80
      %p86 = scmp.eq.s32.totalorder %s41, 0
      %p87 = por %p85, %p86
      %p88 = scmp.ne.s32.totalorder %s77, %s80
      %p89 = scmp.eq.s32.totalorder %s46, 1
      %p90 = por %p88, %p89
      %p91 = scmp.ne.s32.totalorder %s80, %s81
      %p92 = scmp.eq.s32.totalorder %s46, 0
      %p93 = por %p91, %p92
      %p94 = scmp.ne.s32.totalorder %s80, %s81
      %p95 = scmp.eq.s32.totalorder %s47, 1
      %p96 = por %p94, %p95
      %p98 = scmp.ne.s32.totalorder %s81, %s97
      %p99 = scmp.eq.s32.totalorder %s47, 0
      %p100 = por %p98, %p99
      %s101 = ssub.s32 %s41, %s48
      %p102 = scmp.eq.s32.totalorder %s101, 0
      %s104 = sadd.s32 %s103, 1
      %s105 = scalar_select %p102, %s103, %s104
      %p108 = pneg %p102
      %p109 = scmp.eq.s32.totalorder %s41, 1
      %p110 = por %p108, %p109
      %p111 = scmp.ne.s32.totalorder %s103, %s106
      %p112 = scmp.eq.s32.totalorder %s41, 0
      %p113 = por %p111, %p112
      %p114 = scmp.ne.s32.totalorder %s103, %s106
      %p115 = scmp.eq.s32.totalorder %s46, 1
      %p116 = por %p114, %p115
      %p117 = scmp.ne.s32.totalorder %s106, %s107
      %p118 = scmp.eq.s32.totalorder %s46, 0
      %p119 = por %p117, %p118
      %p120 = scmp.ne.s32.totalorder %s106, %s107
      %p121 = scmp.eq.s32.totalorder %s47, 1
      %p122 = por %p120, %p121
      %p124 = scmp.ne.s32.totalorder %s107, %s123
      %p125 = scmp.eq.s32.totalorder %s47, 0
      %p126 = por %p124, %p125
      %s128 = sadd.s32 %s127, 1
      %p131 = scmp.eq.s32.totalorder %s41, 1
      %p132 = scmp.ne.s32.totalorder %s127, %s129
      %p133 = scmp.eq.s32.totalorder %s41, 0
      %p134 = por %p132, %p133
      %p135 = scmp.ne.s32.totalorder %s127, %s129
      %p136 = scmp.eq.s32.totalorder %s46, 1
      %p137 = por %p135, %p136
      %p138 = scmp.ne.s32.totalorder %s129, %s130
      %p139 = scmp.eq.s32.totalorder %s46, 0
      %p140 = por %p138, %p139
      %p141 = scmp.ne.s32.totalorder %s129, %s130
      %p142 = scmp.eq.s32.totalorder %s47, 1
      %p143 = por %p141, %p142
      %p145 = scmp.ne.s32.totalorder %s130, %s144
      %p146 = scmp.eq.s32.totalorder %s47, 0
      %p147 = por %p145, %p146
      %s149 = sadd.s32 %s148, 1
      %p152 = scmp.eq.s32.totalorder %s41, 1
      %p153 = scmp.ne.s32.totalorder %s148, %s150
      %p154 = scmp.eq.s32.totalorder %s41, 0
      %p155 = por %p153, %p154
      %p156 = scmp.ne.s32.totalorder %s148, %s150
      %p157 = scmp.eq.s32.totalorder %s46, 1
      %p158 = por %p156, %p157
      %p159 = scmp.ne.s32.totalorder %s150, %s151
      %p160 = scmp.eq.s32.totalorder %s46, 0
      %p161 = por %p159, %p160
      %p162 = scmp.ne.s32.totalorder %s150, %s151
      %p163 = scmp.eq.s32.totalorder %s47, 1
      %p164 = por %p162, %p163
      %p166 = scmp.ne.s32.totalorder %s151, %s165
      %p167 = scmp.eq.s32.totalorder %s47, 0
      %p168 = por %p166, %p167
      %s170 = sadd.s32 %s169, 1
      %p173 = scmp.eq.s32.totalorder %s41, 1
      %p174 = scmp.ne.s32.totalorder %s169, %s171
      %p175 = scmp.eq.s32.totalorder %s41, 0
      %p176 = por %p174, %p175
      %p177 = scmp.ne.s32.totalorder %s169, %s171
      %p178 = scmp.eq.s32.totalorder %s46, 1
      %p179 = por %p177, %p178
      %p180 = scmp.ne.s32.totalorder %s171, %s172
      %p181 = scmp.eq.s32.totalorder %s46, 0
      %p182 = por %p180, %p181
      %p183 = scmp.ne.s32.totalorder %s171, %s172
      %p184 = scmp.eq.s32.totalorder %s47, 1
      %p185 = por %p183, %p184
      %p187 = scmp.ne.s32.totalorder %s172, %s186
      %p188 = scmp.eq.s32.totalorder %s47, 0
      %p189 = por %p187, %p188
      %s191 = sadd.s32 %s190, 1
      %p194 = scmp.eq.s32.totalorder %s41, 1
      %p195 = scmp.ne.s32.totalorder %s190, %s192
      %p196 = scmp.eq.s32.totalorder %s41, 0
      %p197 = por %p195, %p196
      %p198 = scmp.ne.s32.totalorder %s190, %s192
      %p199 = scmp.eq.s32.totalorder %s46, 1
      %p200 = por %p198, %p199
      %p201 = scmp.ne.s32.totalorder %s192, %s193
      %p202 = scmp.eq.s32.totalorder %s46, 0
      %p203 = por %p201, %p202
      %p204 = scmp.ne.s32.totalorder %s192, %s193
      %p205 = scmp.eq.s32.totalorder %s47, 1
      %p206 = por %p204, %p205
      %p208 = scmp.ne.s32.totalorder %s193, %s207
      %p209 = scmp.eq.s32.totalorder %s47, 0
      %p210 = por %p208, %p209
      %s212 = sadd.s32 %s211, 1
      %p215 = scmp.eq.s32.totalorder %s41, 1
      %p216 = scmp.ne.s32.totalorder %s211, %s213
      %p217 = scmp.eq.s32.totalorder %s41, 0
      %p218 = por %p216, %p217
      %p219 = scmp.ne.s32.totalorder %s211, %s213
      %p220 = scmp.eq.s32.totalorder %s46, 1
      %p221 = por %p219, %p220
      %p222 = scmp.ne.s32.totalorder %s213, %s214
      %p223 = scmp.eq.s32.totalorder %s46, 0
      %p224 = por %p222, %p223
      %p225 = scmp.ne.s32.totalorder %s213, %s214
      %p226 = scmp.eq.s32.totalorder %s47, 1
      %p227 = por %p225, %p226
      %p229 = scmp.ne.s32.totalorder %s214, %s228
      %p230 = scmp.eq.s32.totalorder %s47, 0
      %p231 = por %p229, %p230
      %s233 = sadd.s32 %s232, 1
      %p236 = scmp.eq.s32.totalorder %s41, 1
      %p237 = scmp.ne.s32.totalorder %s232, %s234
      %p238 = scmp.eq.s32.totalorder %s41, 0
      %p239 = por %p237, %p238
      %p240 = scmp.ne.s32.totalorder %s232, %s234
      %p241 = scmp.eq.s32.totalorder %s46, 1
      %p242 = por %p240, %p241
      %p243 = scmp.ne.s32.totalorder %s234, %s235
      %p244 = scmp.eq.s32.totalorder %s46, 0
      %p245 = por %p243, %p244
      %p246 = scmp.ne.s32.totalorder %s234, %s235
      %p247 = scmp.eq.s32.totalorder %s47, 1
      %p248 = por %p246, %p247
      %p250 = scmp.ne.s32.totalorder %s235, %s249
      %p251 = scmp.eq.s32.totalorder %s47, 0
      %p252 = por %p250, %p251
      %s254 = sadd.s32 %s253, 1
      %p257 = scmp.eq.s32.totalorder %s41, 1
      %p258 = scmp.ne.s32.totalorder %s253, %s255
      %p259 = scmp.eq.s32.totalorder %s41, 0
      %p260 = por %p258, %p259
      %p261 = scmp.ne.s32.totalorder %s253, %s255
      %p262 = scmp.eq.s32.totalorder %s46, 1
      %p263 = por %p261, %p262
      %p264 = scmp.ne.s32.totalorder %s255, %s256
      %p265 = scmp.eq.s32.totalorder %s46, 0
      %p266 = por %p264, %p265
      %p267 = scmp.ne.s32.totalorder %s255, %s256
      %p268 = scmp.eq.s32.totalorder %s47, 1
      %p269 = por %p267, %p268
      %p271 = scmp.ne.s32.totalorder %s256, %s270
      %p272 = scmp.eq.s32.totalorder %s47, 0
      %p273 = por %p271, %p272
      %s275 = sadd.s32 %s274, 1
      %p278 = scmp.eq.s32.totalorder %s41, 1
      %p279 = scmp.ne.s32.totalorder %s274, %s276
      %p280 = scmp.eq.s32.totalorder %s41, 0
      %p281 = por %p279, %p280
      %p282 = scmp.ne.s32.totalorder %s274, %s276
      %p283 = scmp.eq.s32.totalorder %s46, 1
      %p284 = por %p282, %p283
      %p285 = scmp.ne.s32.totalorder %s276, %s277
      %p286 = scmp.eq.s32.totalorder %s46, 0
      %p287 = por %p285, %p286
      %p288 = scmp.ne.s32.totalorder %s276, %s277
      %p289 = scmp.eq.s32.totalorder %s47, 1
      %p290 = por %p288, %p289
      %p292 = scmp.ne.s32.totalorder %s277, %s291
      %p293 = scmp.eq.s32.totalorder %s47, 0
      %p294 = por %p292, %p293
      %s296 = sadd.s32 %s295, 1
      %p299 = scmp.eq.s32.totalorder %s41, 1
      %p300 = scmp.ne.s32.totalorder %s295, %s297
      %p301 = scmp.eq.s32.totalorder %s41, 0
      %p302 = por %p300, %p301
      %p303 = scmp.ne.s32.totalorder %s295, %s297
      %p304 = scmp.eq.s32.totalorder %s46, 1
      %p305 = por %p303, %p304
      %p306 = scmp.ne.s32.totalorder %s297, %s298
      %p307 = scmp.eq.s32.totalorder %s46, 0
      %p308 = por %p306, %p307
      %p309 = scmp.ne.s32.totalorder %s297, %s298
      %p310 = scmp.eq.s32.totalorder %s47, 1
      %p311 = por %p309, %p310
      %p313 = scmp.ne.s32.totalorder %s298, %s312
      %p314 = scmp.eq.s32.totalorder %s47, 0
      %p315 = por %p313, %p314
      %s317 = sadd.s32 %s316, 1
      %p320 = scmp.eq.s32.totalorder %s41, 1
      %p321 = scmp.ne.s32.totalorder %s316, %s318
      %p322 = scmp.eq.s32.totalorder %s41, 0
      %p323 = por %p321, %p322
      %p324 = scmp.ne.s32.totalorder %s316, %s318
      %p325 = scmp.eq.s32.totalorder %s46, 1
      %p326 = por %p324, %p325
      %p327 = scmp.ne.s32.totalorder %s318, %s319
      %p328 = scmp.eq.s32.totalorder %s46, 0
      %p329 = por %p327, %p328
      %p330 = scmp.ne.s32.totalorder %s318, %s319
      %p331 = scmp.eq.s32.totalorder %s47, 1
      %p332 = por %p330, %p331
      %p334 = scmp.ne.s32.totalorder %s319, %s333
      %p335 = scmp.eq.s32.totalorder %s47, 0
      %p336 = por %p334, %p335
      %s338 = sadd.s32 %s337, 1
      %p341 = scmp.eq.s32.totalorder %s41, 1
      %p342 = scmp.ne.s32.totalorder %s337, %s339
      %p343 = scmp.eq.s32.totalorder %s41, 0
      %p344 = por %p342, %p343
      %p345 = scmp.ne.s32.totalorder %s337, %s339
      %p346 = scmp.eq.s32.totalorder %s46, 1
      %p347 = por %p345, %p346
      %p348 = scmp.ne.s32.totalorder %s339, %s340
      %p349 = scmp.eq.s32.totalorder %s46, 0
      %p350 = por %p348, %p349
      %p351 = scmp.ne.s32.totalorder %s339, %s340
      %p352 = scmp.eq.s32.totalorder %s47, 1
      %p353 = por %p351, %p352
      %p355 = scmp.ne.s32.totalorder %s340, %s354
      %p356 = scmp.eq.s32.totalorder %s47, 0
      %p357 = por %p355, %p356
      %s359 = sadd.s32 %s358, 1
      %p362 = scmp.eq.s32.totalorder %s41, 1
      %p363 = scmp.ne.s32.totalorder %s358, %s360
      %p364 = scmp.eq.s32.totalorder %s41, 0
      %p365 = por %p363, %p364
      %p366 = scmp.ne.s32.totalorder %s358, %s360
      %p367 = scmp.eq.s32.totalorder %s46, 1
      %p368 = por %p366, %p367
      %p369 = scmp.ne.s32.totalorder %s360, %s361
      %p370 = scmp.eq.s32.totalorder %s46, 0
      %p371 = por %p369, %p370
      %p372 = scmp.ne.s32.totalorder %s360, %s361
      %p373 = scmp.eq.s32.totalorder %s47, 1
      %p374 = por %p372, %p373
      %p376 = scmp.ne.s32.totalorder %s361, %s375
      %p377 = scmp.eq.s32.totalorder %s47, 0
      %p378 = por %p376, %p377
      %s380 = sadd.s32 %s379, 1
      %p383 = scmp.eq.s32.totalorder %s41, 1
      %p384 = scmp.ne.s32.totalorder %s379, %s381
      %p385 = scmp.eq.s32.totalorder %s41, 0
      %p386 = por %p384, %p385
      %p387 = scmp.ne.s32.totalorder %s379, %s381
      %p388 = scmp.eq.s32.totalorder %s46, 1
      %p389 = por %p387, %p388
      %p390 = scmp.ne.s32.totalorder %s381, %s382
      %p391 = scmp.eq.s32.totalorder %s46, 0
      %p392 = por %p390, %p391
      %p393 = scmp.ne.s32.totalorder %s381, %s382
      %p394 = scmp.eq.s32.totalorder %s47, 1
      %p395 = por %p393, %p394
      %p397 = scmp.ne.s32.totalorder %s382, %s396
      %p398 = scmp.eq.s32.totalorder %s47, 0
      %p399 = por %p397, %p398
      %s401 = sadd.s32 %s400, 1
      %p404 = scmp.eq.s32.totalorder %s41, 1
      %p405 = scmp.ne.s32.totalorder %s400, %s402
      %p406 = scmp.eq.s32.totalorder %s41, 0
      %p407 = por %p405, %p406
      %p408 = scmp.ne.s32.totalorder %s400, %s402
      %p409 = scmp.eq.s32.totalorder %s46, 1
      %p410 = por %p408, %p409
      %p411 = scmp.ne.s32.totalorder %s402, %s403
      %p412 = scmp.eq.s32.totalorder %s46, 0
      %p413 = por %p411, %p412
      %p414 = scmp.ne.s32.totalorder %s402, %s403
      %p415 = scmp.eq.s32.totalorder %s47, 1
      %p416 = por %p414, %p415
      %p418 = scmp.ne.s32.totalorder %s403, %s417
      %p419 = scmp.eq.s32.totalorder %s47, 0
      %p420 = por %p418, %p419
      %s422 = sadd.s32 %s421, 1
      %p425 = scmp.eq.s32.totalorder %s41, 1
      %p426 = scmp.ne.s32.totalorder %s421, %s423
      %p427 = scmp.eq.s32.totalorder %s41, 0
      %p428 = por %p426, %p427
      %p429 = scmp.ne.s32.totalorder %s421, %s423
      %p430 = scmp.eq.s32.totalorder %s46, 1
      %p431 = por %p429, %p430
      %p432 = scmp.ne.s32.totalorder %s423, %s424
      %p433 = scmp.eq.s32.totalorder %s46, 0
      %p434 = por %p432, %p433
      %p435 = scmp.ne.s32.totalorder %s423, %s424
      %p436 = scmp.eq.s32.totalorder %s47, 1
      %p437 = por %p435, %p436
      %p439 = scmp.ne.s32.totalorder %s424, %s438
      %p440 = scmp.eq.s32.totalorder %s47, 0
      %p441 = por %p439, %p440
      %s443 = sadd.s32 %s442, 1
      %p446 = scmp.eq.s32.totalorder %s41, 1
      %p447 = scmp.ne.s32.totalorder %s442, %s444
      %p448 = scmp.eq.s32.totalorder %s41, 0
      %p449 = por %p447, %p448
      %p450 = scmp.ne.s32.totalorder %s442, %s444
      %p451 = scmp.eq.s32.totalorder %s46, 1
      %p452 = por %p450, %p451
      %p453 = scmp.ne.s32.totalorder %s444, %s445
      %p454 = scmp.eq.s32.totalorder %s46, 0
      %p455 = por %p453, %p454
      %p456 = scmp.ne.s32.totalorder %s444, %s445
      %p457 = scmp.eq.s32.totalorder %s47, 1
      %p458 = por %p456, %p457
      %p460 = scmp.ne.s32.totalorder %s445, %s459
      %p461 = scmp.eq.s32.totalorder %s47, 0
      %p462 = por %p460, %p461
      %s464 = sadd.s32 %s463, 1
      %p467 = scmp.eq.s32.totalorder %s41, 1
      %p468 = scmp.ne.s32.totalorder %s463, %s465
      %p469 = scmp.eq.s32.totalorder %s41, 0
      %p470 = por %p468, %p469
      %p471 = scmp.ne.s32.totalorder %s463, %s465
      %p472 = scmp.eq.s32.totalorder %s46, 1
      %p473 = por %p471, %p472
      %p474 = scmp.ne.s32.totalorder %s465, %s466
      %p475 = scmp.eq.s32.totalorder %s46, 0
      %p476 = por %p474, %p475
      %p477 = scmp.ne.s32.totalorder %s465, %s466
      %p478 = scmp.eq.s32.totalorder %s47, 1
      %p479 = por %p477, %p478
      %p481 = scmp.ne.s32.totalorder %s466, %s480
      %p482 = scmp.eq.s32.totalorder %s47, 0
      %p483 = por %p481, %p482
      %s485 = sadd.s32 %s484, 1
      %p488 = scmp.eq.s32.totalorder %s41, 1
      %p489 = scmp.ne.s32.totalorder %s484, %s486
      %p490 = scmp.eq.s32.totalorder %s41, 0
      %p491 = por %p489, %p490
      %p492 = scmp.ne.s32.totalorder %s484, %s486
      %p493 = scmp.eq.s32.totalorder %s46, 1
      %p494 = por %p492, %p493
      %p495 = scmp.ne.s32.totalorder %s486, %s487
      %p496 = scmp.eq.s32.totalorder %s46, 0
      %p497 = por %p495, %p496
      %p498 = scmp.ne.s32.totalorder %s486, %s487
      %p499 = scmp.eq.s32.totalorder %s47, 1
      %p500 = por %p498, %p499
      %p502 = scmp.ne.s32.totalorder %s487, %s501
      %p503 = scmp.eq.s32.totalorder %s47, 0
      %p504 = por %p502, %p503
      %s506 = sadd.s32 %s505, 1
      %p509 = scmp.eq.s32.totalorder %s41, 1
      %p510 = scmp.ne.s32.totalorder %s505, %s507
      %p511 = scmp.eq.s32.totalorder %s41, 0
      %p512 = por %p510, %p511
      %p513 = scmp.ne.s32.totalorder %s505, %s507
      %p514 = scmp.eq.s32.totalorder %s46, 1
      %p515 = por %p513, %p514
      %p516 = scmp.ne.s32.totalorder %s507, %s508
      %p517 = scmp.eq.s32.totalorder %s46, 0
      %p518 = por %p516, %p517
      %p519 = scmp.ne.s32.totalorder %s507, %s508
      %p520 = scmp.eq.s32.totalorder %s47, 1
      %p521 = por %p519, %p520
      %p523 = scmp.ne.s32.totalorder %s508, %s522
      %p524 = scmp.eq.s32.totalorder %s47, 0
      %p525 = por %p523, %p524
      %s527 = sadd.s32 %s526, 1
      %p530 = scmp.eq.s32.totalorder %s41, 1
      %p531 = scmp.ne.s32.totalorder %s526, %s528
      %p532 = scmp.eq.s32.totalorder %s41, 0
      %p533 = por %p531, %p532
      %p534 = scmp.ne.s32.totalorder %s526, %s528
      %p535 = scmp.eq.s32.totalorder %s46, 1
      %p536 = por %p534, %p535
      %p537 = scmp.ne.s32.totalorder %s528, %s529
      %p538 = scmp.eq.s32.totalorder %s46, 0
      %p539 = por %p537, %p538
      %p540 = scmp.ne.s32.totalorder %s528, %s529
      %p541 = scmp.eq.s32.totalorder %s47, 1
      %p542 = por %p540, %p541
      %p544 = scmp.ne.s32.totalorder %s529, %s543
      %p545 = scmp.eq.s32.totalorder %s47, 0
      %p546 = por %p544, %p545
      %s548 = sadd.s32 %s547, 1
      %p551 = scmp.eq.s32.totalorder %s41, 1
      %p552 = scmp.ne.s32.totalorder %s547, %s549
      %p553 = scmp.eq.s32.totalorder %s41, 0
      %p554 = por %p552, %p553
      %p555 = scmp.ne.s32.totalorder %s547, %s549
      %p556 = scmp.eq.s32.totalorder %s46, 1
      %p557 = por %p555, %p556
      %p558 = scmp.ne.s32.totalorder %s549, %s550
      %p559 = scmp.eq.s32.totalorder %s46, 0
      %p560 = por %p558, %p559
      %p561 = scmp.ne.s32.totalorder %s549, %s550
      %p562 = scmp.eq.s32.totalorder %s47, 1
      %p563 = por %p561, %p562
      %p565 = scmp.ne.s32.totalorder %s550, %s564
      %p566 = scmp.eq.s32.totalorder %s47, 0
      %p567 = por %p565, %p566
      %s568 = ssub.s32 %s41, %s48
      %p569 = scmp.eq.s32.totalorder %s568, 0
      %s571 = sadd.s32 %s570, 1
      %s572 = scalar_select %p569, %s570, %s571
      %p575 = pneg %p569
      %p576 = scmp.eq.s32.totalorder %s41, 1
      %p577 = por %p575, %p576
      %p578 = scmp.ne.s32.totalorder %s570, %s573
      %p579 = scmp.eq.s32.totalorder %s41, 0
      %p580 = por %p578, %p579
      %p581 = scmp.ne.s32.totalorder %s570, %s573
      %p582 = scmp.eq.s32.totalorder %s46, 1
      %p583 = por %p581, %p582
      %p584 = scmp.ne.s32.totalorder %s573, %s574
      %p585 = scmp.eq.s32.totalorder %s46, 0
      %p586 = por %p584, %p585
      %p587 = scmp.ne.s32.totalorder %s573, %s574
      %p588 = scmp.eq.s32.totalorder %s47, 1
      %p589 = por %p587, %p588
      %p591 = scmp.ne.s32.totalorder %s574, %s590
      %p592 = scmp.eq.s32.totalorder %s47, 0
      %p593 = por %p591, %p592
      %p594 = scmp.le.s32.totalorder 1, %s41
      %p595 = scmp.lt.s32.totalorder %s41, 3
      %p596 = pnand %p594, %p595
      %p597 = pneg %p596
      // Predicated region
      $region9: #{tpu_custom_call.1} parent=5 // pred_check
        _
      $region10: #{tpu_custom_call.1} parent=5 // pred_check_branch
        %599 = sbr.rel (%p596) target = $region12
      $region11: #{tpu_custom_call.1} parent=5 // pred_region
        %s600 = ssub.s32 %s41, 1
        // Predicated region
        $region13: #{tpu_custom_call.1} parent=11 // pred_check
          %p601 = pneg %p140
        $region14: #{tpu_custom_call.1} parent=11 // pred_check_branch
          %603 = sbr.rel (%p601) target = $region16
        $region15: #{tpu_custom_call.1} parent=11 // pred_region
          _
        $region16: #{tpu_custom_call.1} parent=11 // pred_fallthru
          _
        // Predicated region
        $region17: #{tpu_custom_call.1} parent=11 // pred_check
          %p604 = pneg %p161
        $region18: #{tpu_custom_call.1} parent=11 // pred_check_branch
          %606 = sbr.rel (%p604) target = $region20
        $region19: #{tpu_custom_call.1} parent=11 // pred_region
          %s608 = ssub.s32 4096, 4096
          %609 = vsyncadd [#allocation5], %s608
          %s610 = sshll.u32 [#allocation4], 4
          %s611 = int_to_ptr.vmem [resolvable:$true] %s610
          %616 = dma.hbm_to_vmem [thread:$0]  %s4, 4096, %s611, [#allocation5], 128, 128, 8
        $region20: #{tpu_custom_call.1} parent=11 // pred_fallthru
          _
        // Predicated region
        $region21: #{tpu_custom_call.1} parent=11 // pred_check
          %p617 = pneg %p182
        $region22: #{tpu_custom_call.1} parent=11 // pred_check_branch
          %619 = sbr.rel (%p617) target = $region24
        $region23: #{tpu_custom_call.1} parent=11 // pred_region
          %s621 = ssub.s32 4096, 4096
          %622 = vsyncadd [#allocation8], %s621
          %s623 = sshll.u32 [#allocation7], 4
          %s624 = int_to_ptr.vmem [resolvable:$true] %s623
          %629 = dma.hbm_to_vmem [thread:$0]  %s5, 4096, %s624, [#allocation8], 128, 128, 8
        $region24: #{tpu_custom_call.1} parent=11 // pred_fallthru
          _
        // Predicated region
        $region25: #{tpu_custom_call.1} parent=11 // pred_check
          %p630 = pneg %p203
        $region26: #{tpu_custom_call.1} parent=11 // pred_check_branch
          %632 = sbr.rel (%p630) target = $region28
        $region27: #{tpu_custom_call.1} parent=11 // pred_region
          _
        $region28: #{tpu_custom_call.1} parent=11 // pred_fallthru
          _
        // Predicated region
        $region29: #{tpu_custom_call.1} parent=11 // pred_check
          %p633 = pneg %p224
        $region30: #{tpu_custom_call.1} parent=11 // pred_check_branch
          %635 = sbr.rel (%p633) target = $region32
        $region31: #{tpu_custom_call.1} parent=11 // pred_region
          %s637 = ssub.s32 4096, 4096
          %638 = vsyncadd [#allocation8], %s637
          %s639 = sshll.u32 [#allocation9], 4
          %s640 = int_to_ptr.vmem [resolvable:$true] %s639
          %645 = dma.hbm_to_vmem [thread:$0]  %s7, 4096, %s640, [#allocation8], 128, 128, 8
        $region32: #{tpu_custom_call.1} parent=11 // pred_fallthru
          _
        // Predicated region
        $region33: #{tpu_custom_call.1} parent=11 // pred_check
          %p646 = pneg %p245
        $region34: #{tpu_custom_call.1} parent=11 // pred_check_branch
          %648 = sbr.rel (%p646) target = $region36
        $region35: #{tpu_custom_call.1} parent=11 // pred_region
          _
        $region36: #{tpu_custom_call.1} parent=11 // pred_fallthru
          _
        // Predicated region
        $region37: #{tpu_custom_call.1} parent=11 // pred_check
          %p649 = pneg %p266
        $region38: #{tpu_custom_call.1} parent=11 // pred_check_branch
          %651 = sbr.rel (%p649) target = $region40
        $region39: #{tpu_custom_call.1} parent=11 // pred_region
          %s653 = ssub.s32 4096, 4096
          %654 = vsyncadd [#allocation11], %s653
          %s655 = sshll.u32 [#allocation10], 4
          %s656 = int_to_ptr.vmem [resolvable:$true] %s655
          %661 = dma.hbm_to_vmem [thread:$0]  %s9, 4096, %s656, [#allocation11], 128, 128, 8
        $region40: #{tpu_custom_call.1} parent=11 // pred_fallthru
          _
        // Predicated region
        $region41: #{tpu_custom_call.1} parent=11 // pred_check
          %p662 = pneg %p287
        $region42: #{tpu_custom_call.1} parent=11 // pred_check_branch
          %664 = sbr.rel (%p662) target = $region44
        $region43: #{tpu_custom_call.1} parent=11 // pred_region
          %s666 = ssub.s32 8192, 8192
          %667 = vsyncadd [#allocation11], %s666
          %s668 = sshll.u32 [#allocation12], 4
          %s669 = int_to_ptr.vmem [resolvable:$true] %s668
          %674 = dma.hbm_to_vmem [thread:$0]  %s10, 8192, %s669, [#allocation11], 256, 256, 16
        $region44: #{tpu_custom_call.1} parent=11 // pred_fallthru
          _
        // Predicated region
        $region45: #{tpu_custom_call.1} parent=11 // pred_check
          %p675 = pneg %p308
        $region46: #{tpu_custom_call.1} parent=11 // pred_check_branch
          %677 = sbr.rel (%p675) target = $region48
        $region47: #{tpu_custom_call.1} parent=11 // pred_region
          _
        $region48: #{tpu_custom_call.1} parent=11 // pred_fallthru
          _
        // Predicated region
        $region49: #{tpu_custom_call.1} parent=11 // pred_check
          %p678 = pneg %p329
        $region50: #{tpu_custom_call.1} parent=11 // pred_check_branch
          %680 = sbr.rel (%p678) target = $region52
        $region51: #{tpu_custom_call.1} parent=11 // pred_region
          %s682 = ssub.s32 8192, 8192
          %683 = vsyncadd [#allocation14], %s682
          %s684 = sshll.u32 [#allocation13], 4
          %s685 = int_to_ptr.vmem [resolvable:$true] %s684
          %690 = dma.hbm_to_vmem [thread:$0]  %s12, 8192, %s685, [#allocation14], 128, 128, 8
        $region52: #{tpu_custom_call.1} parent=11 // pred_fallthru
          _
        // Predicated region
        $region53: #{tpu_custom_call.1} parent=11 // pred_check
          %p691 = pneg %p350
        $region54: #{tpu_custom_call.1} parent=11 // pred_check_branch
          %693 = sbr.rel (%p691) target = $region56
        $region55: #{tpu_custom_call.1} parent=11 // pred_region
          _
        $region56: #{tpu_custom_call.1} parent=11 // pred_fallthru
          _
        // Predicated region
        $region57: #{tpu_custom_call.1} parent=11 // pred_check
          %p694 = pneg %p371
        $region58: #{tpu_custom_call.1} parent=11 // pred_check_branch
          %696 = sbr.rel (%p694) target = $region60
        $region59: #{tpu_custom_call.1} parent=11 // pred_region
          _
        $region60: #{tpu_custom_call.1} parent=11 // pred_fallthru
          _
        // Predicated region
        $region61: #{tpu_custom_call.1} parent=11 // pred_check
          %p697 = pneg %p392
        $region62: #{tpu_custom_call.1} parent=11 // pred_check_branch
          %699 = sbr.rel (%p697) target = $region64
        $region63: #{tpu_custom_call.1} parent=11 // pred_region
          _
        $region64: #{tpu_custom_call.1} parent=11 // pred_fallthru
          _
        // Predicated region
        $region65: #{tpu_custom_call.1} parent=11 // pred_check
          %p700 = pneg %p413
        $region66: #{tpu_custom_call.1} parent=11 // pred_check_branch
          %702 = sbr.rel (%p700) target = $region68
        $region67: #{tpu_custom_call.1} parent=11 // pred_region
          _
        $region68: #{tpu_custom_call.1} parent=11 // pred_fallthru
          _
        // Predicated region
        $region69: #{tpu_custom_call.1} parent=11 // pred_check
          %p703 = pneg %p434
        $region70: #{tpu_custom_call.1} parent=11 // pred_check_branch
          %705 = sbr.rel (%p703) target = $region72
        $region71: #{tpu_custom_call.1} parent=11 // pred_region
          _
        $region72: #{tpu_custom_call.1} parent=11 // pred_fallthru
          _
        // Predicated region
        $region73: #{tpu_custom_call.1} parent=11 // pred_check
          %p706 = pneg %p455
        $region74: #{tpu_custom_call.1} parent=11 // pred_check_branch
          %708 = sbr.rel (%p706) target = $region76
        $region75: #{tpu_custom_call.1} parent=11 // pred_region
          _
        $region76: #{tpu_custom_call.1} parent=11 // pred_fallthru
          _
        // Predicated region
        $region77: #{tpu_custom_call.1} parent=11 // pred_check
          %p709 = pneg %p476
        $region78: #{tpu_custom_call.1} parent=11 // pred_check_branch
          %711 = sbr.rel (%p709) target = $region80
        $region79: #{tpu_custom_call.1} parent=11 // pred_region
          _
        $region80: #{tpu_custom_call.1} parent=11 // pred_fallthru
          _
        // Predicated region
        $region81: #{tpu_custom_call.1} parent=11 // pred_check
          %p712 = pneg %p497
        $region82: #{tpu_custom_call.1} parent=11 // pred_check_branch
          %714 = sbr.rel (%p712) target = $region84
        $region83: #{tpu_custom_call.1} parent=11 // pred_region
          _
        $region84: #{tpu_custom_call.1} parent=11 // pred_fallthru
          _
        // Predicated region
        $region85: #{tpu_custom_call.1} parent=11 // pred_check
          %p715 = pneg %p518
        $region86: #{tpu_custom_call.1} parent=11 // pred_check_branch
          %717 = sbr.rel (%p715) target = $region88
        $region87: #{tpu_custom_call.1} parent=11 // pred_region
          _
        $region88: #{tpu_custom_call.1} parent=11 // pred_fallthru
          _
        // Predicated region
        $region89: #{tpu_custom_call.1} parent=11 // pred_check
          %p718 = pneg %p539
        $region90: #{tpu_custom_call.1} parent=11 // pred_check_branch
          %720 = sbr.rel (%p718) target = $region92
        $region91: #{tpu_custom_call.1} parent=11 // pred_region
          _
        $region92: #{tpu_custom_call.1} parent=11 // pred_fallthru
          _
        // Predicated region
        $region93: #{tpu_custom_call.1} parent=11 // pred_check
          %p721 = pneg %p560
        $region94: #{tpu_custom_call.1} parent=11 // pred_check_branch
          %723 = sbr.rel (%p721) target = $region96
        $region95: #{tpu_custom_call.1} parent=11 // pred_region
          _
        $region96: #{tpu_custom_call.1} parent=11 // pred_fallthru
          _
      $region12: #{tpu_custom_call.1} parent=5 // pred_fallthru
        _
      %p724 = scmp.lt.s32.totalorder %s41, 2
      // Predicated region
      $region97: #{tpu_custom_call.1} parent=5 // pred_check
        %p725 = pneg %p724
      $region98: #{tpu_custom_call.1} parent=5 // pred_check_branch
        %727 = sbr.rel (%p725) target = $region100
      $region99: #{tpu_custom_call.1} parent=5 // pred_region
        // Predicated region
        $region101: #{tpu_custom_call.1} parent=99 // pred_check
          %p728 = pneg %p61
        $region102: #{tpu_custom_call.1} parent=99 // pred_check_branch
          %730 = sbr.rel (%p728) target = $region104
        $region103: #{tpu_custom_call.1} parent=99 // pred_region
          %p731 = scmp.lt.s32.totalorder %s41, 1
          %s732 = scalar_select %p731, %s41, 1
          %s733 = smul.addr %s732, 8
          %s734 = scalar_lea.vmem %s0, %s733
        $region104: #{tpu_custom_call.1} parent=99 // pred_fallthru
          _
        // Predicated region
        $region105: #{tpu_custom_call.1} parent=99 // pred_check
          %p735 = pneg %p87
        $region106: #{tpu_custom_call.1} parent=99 // pred_check_branch
          %737 = sbr.rel (%p735) target = $region108
        $region107: #{tpu_custom_call.1} parent=99 // pred_region
          %p738 = scmp.lt.s32.totalorder %s41, 1
          %s739 = scalar_select %p738, %s41, 1
          %s740 = smul.addr %s739, 2
          %s741 = smul.addr %s740, 4
          %s742 = scalar_lea.vmem %s1, %s741
        $region108: #{tpu_custom_call.1} parent=99 // pred_fallthru
          _
        // Predicated region
        $region109: #{tpu_custom_call.1} parent=99 // pred_check
          %p743 = pneg %p113
        $region110: #{tpu_custom_call.1} parent=99 // pred_check_branch
          %745 = sbr.rel (%p743) target = $region112
        $region111: #{tpu_custom_call.1} parent=99 // pred_region
          %p746 = scmp.lt.s32.totalorder %s41, 1
          %s747 = scalar_select %p746, %s41, 1
          %s748 = smul.addr %s747, 4
          %s749 = scalar_lea.vmem %s2, %s748
        $region112: #{tpu_custom_call.1} parent=99 // pred_fallthru
          _
      $region100: #{tpu_custom_call.1} parent=5 // pred_fallthru
        _
      %p750 = scmp.le.s32.totalorder 1, %s41
      %p751 = scmp.lt.s32.totalorder %s41, 3
      %p752 = pnand %p750, %p751
      %p753 = pneg %p752
      // Predicated region
      $region113: #{tpu_custom_call.1} parent=5 // pred_check
        _
      $region114: #{tpu_custom_call.1} parent=5 // pred_check_branch
        %755 = sbr.rel (%p752) target = $region116
      $region115: #{tpu_custom_call.1} parent=5 // pred_region
        %s756 = ssub.s32 %s41, 1
        // Predicated region
        $region117: #{tpu_custom_call.1} parent=115 // pred_check
          %p757 = pneg %p161
        $region118: #{tpu_custom_call.1} parent=115 // pred_check_branch
          %759 = sbr.rel (%p757) target = $region120
        $region119: #{tpu_custom_call.1} parent=115 // pred_region
          %760 = dma.done [#allocation5], 4096
        $region120: #{tpu_custom_call.1} parent=115 // pred_fallthru
          _
        // Predicated region
        $region121: #{tpu_custom_call.1} parent=115 // pred_check
          %p761 = pneg %p182
        $region122: #{tpu_custom_call.1} parent=115 // pred_check_branch
          %763 = sbr.rel (%p761) target = $region124
        $region123: #{tpu_custom_call.1} parent=115 // pred_region
          %764 = dma.done [#allocation8], 4096
        $region124: #{tpu_custom_call.1} parent=115 // pred_fallthru
          _
        // Predicated region
        $region125: #{tpu_custom_call.1} parent=115 // pred_check
          %p765 = pneg %p224
        $region126: #{tpu_custom_call.1} parent=115 // pred_check_branch
          %767 = sbr.rel (%p765) target = $region128
        $region127: #{tpu_custom_call.1} parent=115 // pred_region
          %768 = dma.done [#allocation8], 4096
        $region128: #{tpu_custom_call.1} parent=115 // pred_fallthru
          _
        // Predicated region
        $region129: #{tpu_custom_call.1} parent=115 // pred_check
          %p769 = pneg %p266
        $region130: #{tpu_custom_call.1} parent=115 // pred_check_branch
          %771 = sbr.rel (%p769) target = $region132
        $region131: #{tpu_custom_call.1} parent=115 // pred_region
          %772 = dma.done [#allocation11], 4096
        $region132: #{tpu_custom_call.1} parent=115 // pred_fallthru
          _
        // Predicated region
        $region133: #{tpu_custom_call.1} parent=115 // pred_check
          %p773 = pneg %p287
        $region134: #{tpu_custom_call.1} parent=115 // pred_check_branch
          %775 = sbr.rel (%p773) target = $region136
        $region135: #{tpu_custom_call.1} parent=115 // pred_region
          %776 = dma.done [#allocation11], 8192
        $region136: #{tpu_custom_call.1} parent=115 // pred_fallthru
          _
        // Predicated region
        $region137: #{tpu_custom_call.1} parent=115 // pred_check
          %p777 = pneg %p329
        $region138: #{tpu_custom_call.1} parent=115 // pred_check_branch
          %779 = sbr.rel (%p777) target = $region140
        $region139: #{tpu_custom_call.1} parent=115 // pred_region
          %780 = dma.done [#allocation14], 8192
        $region140: #{tpu_custom_call.1} parent=115 // pred_fallthru
          _
        %p781 = scmp.lt.s32.totalorder %s46, 1
        %s782 = scalar_select %p781, %s46, 1
        %s783 = smul.addr %s782, 8
        %s784 = scalar_lea.vmem %s0, %s783
        %p785 = pneg %p67
        %p786 = pneg %p64
        %p787 = scmp.lt.s32.totalorder %s46, 1
        %s788 = scalar_select %p787, %s46, 1
        %s789 = smul.addr %s788, 2
        %s790 = smul.addr %s789, 4
        %s791 = scalar_lea.vmem %s1, %s790
        %p792 = pneg %p93
        %p793 = pneg %p90
        %p794 = scmp.lt.s32.totalorder %s46, 1
        %s795 = scalar_select %p794, %s46, 1
        %s796 = smul.addr %s795, 4
        %s797 = scalar_lea.vmem %s2, %s796
        %p798 = pneg %p119
        %p799 = pneg %p116
        %p800 = pneg %p140
        %p801 = pneg %p137
        %p802 = pneg %p161
        %p803 = pneg %p158
        %p804 = pneg %p182
        %p805 = pneg %p179
        %p806 = pneg %p203
        %p807 = pneg %p200
        %p808 = pneg %p224
        %p809 = pneg %p221
        %p810 = pneg %p245
        %p811 = pneg %p242
        %p812 = pneg %p266
        %p813 = pneg %p263
        %p814 = pneg %p287
        %p815 = pneg %p284
        %p816 = pneg %p308
        %p817 = pneg %p305
        %p818 = pneg %p329
        %p819 = pneg %p326
        %p820 = pneg %p350
        %p821 = pneg %p347
        %p822 = pneg %p371
        %p823 = pneg %p368
        %p824 = pneg %p392
        %p825 = pneg %p389
        %p826 = pneg %p413
        %p827 = pneg %p410
        %p828 = pneg %p434
        %p829 = pneg %p431
        %p830 = pneg %p455
        %p831 = pneg %p452
        %p832 = pneg %p476
        %p833 = pneg %p473
        %p834 = pneg %p497
        %p835 = pneg %p494
        %p836 = pneg %p518
        %p837 = pneg %p515
        %p838 = pneg %p539
        %p839 = pneg %p536
        %p840 = pneg %p560
        %p841 = pneg %p557
        %p842 = pneg %p586
        %p843 = pneg %p583
        %s844 = sand.u32 %s573, 1
        %s845 = scalar_lea.sflag [#allocation6], %s844
        %s846 = sand.u32 %s573, 1
        %s847 = smul.addr %s846, 8
        %s848 = scalar_lea.vmem [#allocation15], %s847
        %p849 = scmp.lt.s32.totalorder %s46, 1
        %s850 = scalar_select %p849, %s46, 1
        %s851 = smul.addr %s850, 8
        %s852 = scalar_lea.vmem %s0, %s851
        %p853 = scmp.lt.s32.totalorder %s46, 1
        %s854 = scalar_select %p853, %s46, 1
        %s855 = smul.addr %s854, 2
        %s856 = smul.addr %s855, 4
        %s857 = scalar_lea.vmem %s1, %s856
        %p858 = scmp.lt.s32.totalorder %s46, 1
        %s859 = scalar_select %p858, %s46, 1
        %s860 = smul.addr %s859, 4
        %s861 = scalar_lea.vmem %s2, %s860
        %v863 = vld [vmem:[%s852] sm:$0xff]
        %v864 = vld [vmem:[%s857] sm:$0xff]
        %v865 = vunpack.c.l.bf16 %v864
        %v866 = vunpack.c.h.bf16 %v864
        %v867 = vld [vmem:[%s3] sm:$0x3]
        %v869 = vlaneseq
        %v870 = vshrl.u32 %v869, 7
        %v871 = vsub.s32 0, %v870
        %v872 = vrot.slane %v867, %v871
        %v873 = vlaneseq
        %v874 = vshrl.u32 %v873, 7
        %v875 = vsub.s32 1, %v874
        %v876 = vrot.slane %v867, %v875
        %880 = vset.pattern.permute.xlu0 0
        %881 = vperm.xlu0 %880, %v863
        %v882 = vpop.permute.xlu0 %881
        %vm884 = vcmp.lt.f32.partialorder %v872, %v882
        %vm885 = vcmp.lt.f32.partialorder %v876, %v882
        %vm886 = vcmp.ge.f32.partialorder %v867, 1.0
        %v887 = vsel %vm886, 1, 0
        %v888 = vlaneseq
        %v889 = vshrl.u32 %v888, 7
        %v890 = vsub.s32 0, %v889
        %v891 = vrot.slane %v887, %v890
        %v892 = vlaneseq
        %v893 = vshrl.u32 %v892, 7
        %v894 = vsub.s32 1, %v893
        %v895 = vrot.slane %v887, %v894
        %vm896 = vcmp.eq.s32.totalorder %v891, 1
        %vm897 = vcmp.eq.s32.totalorder %v895, 1
        %vm898 = vmand %vm896, %vm884
        %vm899 = vmand %vm897, %vm885
        %v900 = vmul.f32 %v863, 2.0
        %v901 = vsub.f32 %v900, 1.0
        %v902 = vrcp.pop %v901
        %v903 = vmul.f32 1.0, %v902
        %v904 = vld [vmem:[#allocation4] sm:$0xff]
        %v905 = vld [vmem:[#allocation4 + $0x8] sm:$0xff]
        %v906 = vld [vmem:[#allocation4 + $0x10] sm:$0xff]
        %v907 = vld [vmem:[#allocation4 + $0x18] sm:$0xff]
        %v908 = vld [vmem:[#allocation4 + $0x20] sm:$0xff]
        %v909 = vld [vmem:[#allocation4 + $0x28] sm:$0xff]
        %v910 = vld [vmem:[#allocation4 + $0x30] sm:$0xff]
        %v911 = vld [vmem:[#allocation4 + $0x38] sm:$0xff]
        %v912 = vld [vmem:[#allocation4 + $0x40] sm:$0xff]
        %v913 = vld [vmem:[#allocation4 + $0x48] sm:$0xff]
        %v914 = vld [vmem:[#allocation4 + $0x50] sm:$0xff]
        %v915 = vld [vmem:[#allocation4 + $0x58] sm:$0xff]
        %v916 = vld [vmem:[#allocation4 + $0x60] sm:$0xff]
        %v917 = vld [vmem:[#allocation4 + $0x68] sm:$0xff]
        %v918 = vld [vmem:[#allocation4 + $0x70] sm:$0xff]
        %v919 = vld [vmem:[#allocation4 + $0x78] sm:$0xff]
        %v920 = vld [vmem:[#allocation4 + $0x80] sm:$0xff]
        %v921 = vld [vmem:[#allocation4 + $0x88] sm:$0xff]
        %v922 = vld [vmem:[#allocation4 + $0x90] sm:$0xff]
        %v923 = vld [vmem:[#allocation4 + $0x98] sm:$0xff]
        %v924 = vld [vmem:[#allocation4 + $0xa0] sm:$0xff]
        %v925 = vld [vmem:[#allocation4 + $0xa8] sm:$0xff]
        %v926 = vld [vmem:[#allocation4 + $0xb0] sm:$0xff]
        %v927 = vld [vmem:[#allocation4 + $0xb8] sm:$0xff]
        %v928 = vld [vmem:[#allocation4 + $0xc0] sm:$0xff]
        %v929 = vld [vmem:[#allocation4 + $0xc8] sm:$0xff]
        %v930 = vld [vmem:[#allocation4 + $0xd0] sm:$0xff]
        %v931 = vld [vmem:[#allocation4 + $0xd8] sm:$0xff]
        %v932 = vld [vmem:[#allocation4 + $0xe0] sm:$0xff]
        %v933 = vld [vmem:[#allocation4 + $0xe8] sm:$0xff]
        %v934 = vld [vmem:[#allocation4 + $0xf0] sm:$0xff]
        %v935 = vld [vmem:[#allocation4 + $0xf8] sm:$0xff]
        %v936 = vsel %vm884, %v865, 0.0
        %v937 = vsel %vm885, %v866, 0.0
        %v938 = vpack.c.bf16 %v936, %v936
        %v939 = vpack.c.bf16 %v937, %v937
        %v972 = vunpack.c.l.b16 %v904
        %v973 = vunpack.c.h.b16 %v904
        %v974 = vunpack.c.l.b16 %v905
        %v975 = vunpack.c.h.b16 %v905
        %v976 = vunpack.c.l.b16 %v906
        %v977 = vunpack.c.h.b16 %v906
        %v978 = vunpack.c.l.b16 %v907
        %v979 = vunpack.c.h.b16 %v907
        %v980 = vunpack.c.l.b16 %v908
        %v981 = vunpack.c.h.b16 %v908
        %v982 = vunpack.c.l.b16 %v909
        %v983 = vunpack.c.h.b16 %v909
        %v984 = vunpack.c.l.b16 %v910
        %v985 = vunpack.c.h.b16 %v910
        %v986 = vunpack.c.l.b16 %v911
        %v987 = vunpack.c.h.b16 %v911
        %v988 = vunpack.c.l.b16 %v912
        %v989 = vunpack.c.h.b16 %v912
        %v990 = vunpack.c.l.b16 %v913
        %v991 = vunpack.c.h.b16 %v913
        %v992 = vunpack.c.l.b16 %v914
        %v993 = vunpack.c.h.b16 %v914
        %v994 = vunpack.c.l.b16 %v915
        %v995 = vunpack.c.h.b16 %v915
        %v996 = vunpack.c.l.b16 %v916
        %v997 = vunpack.c.h.b16 %v916
        %v998 = vunpack.c.l.b16 %v917
        %v999 = vunpack.c.h.b16 %v917
        %v1000 = vunpack.c.l.b16 %v918
        %v1001 = vunpack.c.h.b16 %v918
        %v1002 = vunpack.c.l.b16 %v919
        %v1003 = vunpack.c.h.b16 %v919
        %v1004 = vunpack.c.l.b16 %v920
        %v1005 = vunpack.c.h.b16 %v920
        %v1006 = vunpack.c.l.b16 %v921
        %v1007 = vunpack.c.h.b16 %v921
        %v1008 = vunpack.c.l.b16 %v922
        %v1009 = vunpack.c.h.b16 %v922
        %v1010 = vunpack.c.l.b16 %v923
        %v1011 = vunpack.c.h.b16 %v923
        %v1012 = vunpack.c.l.b16 %v924
        %v1013 = vunpack.c.h.b16 %v924
        %v1014 = vunpack.c.l.b16 %v925
        %v1015 = vunpack.c.h.b16 %v925
        %v1016 = vunpack.c.l.b16 %v926
        %v1017 = vunpack.c.h.b16 %v926
        %v1018 = vunpack.c.l.b16 %v927
        %v1019 = vunpack.c.h.b16 %v927
        %v1020 = vunpack.c.l.b16 %v928
        %v1021 = vunpack.c.h.b16 %v928
        %v1022 = vunpack.c.l.b16 %v929
        %v1023 = vunpack.c.h.b16 %v929
        %v1024 = vunpack.c.l.b16 %v930
        %v1025 = vunpack.c.h.b16 %v930
        %v1026 = vunpack.c.l.b16 %v931
        %v1027 = vunpack.c.h.b16 %v931
        %v1028 = vunpack.c.l.b16 %v932
        %v1029 = vunpack.c.h.b16 %v932
        %v1030 = vunpack.c.l.b16 %v933
        %v1031 = vunpack.c.h.b16 %v933
        %v1032 = vunpack.c.l.b16 %v934
        %v1033 = vunpack.c.h.b16 %v934
        %v1034 = vunpack.c.l.b16 %v935
        %v1035 = vunpack.c.h.b16 %v935
        %v1036 = vpack.c.b16 %v974, %v972
        %v1037 = vpack.c.b16 %v975, %v973
        %v1038 = vpack.c.b16 %v978, %v976
        %v1039 = vpack.c.b16 %v979, %v977
        %v1040 = vpack.c.b16 %v982, %v980
        %v1041 = vpack.c.b16 %v983, %v981
        %v1042 = vpack.c.b16 %v986, %v984
        %v1043 = vpack.c.b16 %v987, %v985
        %v1044 = vpack.c.b16 %v990, %v988
        %v1045 = vpack.c.b16 %v991, %v989
        %v1046 = vpack.c.b16 %v994, %v992
        %v1047 = vpack.c.b16 %v995, %v993
        %v1048 = vpack.c.b16 %v998, %v996
        %v1049 = vpack.c.b16 %v999, %v997
        %v1050 = vpack.c.b16 %v1002, %v1000
        %v1051 = vpack.c.b16 %v1003, %v1001
        %v1052 = vpack.c.b16 %v1006, %v1004
        %v1053 = vpack.c.b16 %v1007, %v1005
        %v1054 = vpack.c.b16 %v1010, %v1008
        %v1055 = vpack.c.b16 %v1011, %v1009
        %v1056 = vpack.c.b16 %v1014, %v1012
        %v1057 = vpack.c.b16 %v1015, %v1013
        %v1058 = vpack.c.b16 %v1018, %v1016
        %v1059 = vpack.c.b16 %v1019, %v1017
        %v1060 = vpack.c.b16 %v1022, %v1020
        %v1061 = vpack.c.b16 %v1023, %v1021
        %v1062 = vpack.c.b16 %v1026, %v1024
        %v1063 = vpack.c.b16 %v1027, %v1025
        %v1064 = vpack.c.b16 %v1030, %v1028
        %v1065 = vpack.c.b16 %v1031, %v1029
        %v1066 = vpack.c.b16 %v1034, %v1032
        %v1067 = vpack.c.b16 %v1035, %v1033
        %1100 = vmatprep.subr.bf16.mxu0 %v1051
        %1101 = vmatpush1.bf16.msra.mxu0 %v1050
        %1102 = vmatprep.subr.bf16.mxu0 %v1049
        %1103 = vmatpush1.bf16.msra.mxu0 %v1048
        %1104 = vmatprep.subr.bf16.mxu0 %v1047
        %1105 = vmatpush1.bf16.msra.mxu0 %v1046
        %1106 = vmatprep.subr.bf16.mxu0 %v1045
        %1107 = vmatpush1.bf16.msra.mxu0 %v1044
        %1108 = vmatprep.subr.bf16.mxu0 %v1043
        %1109 = vmatpush1.bf16.msra.mxu0 %v1042
        %1110 = vmatprep.subr.bf16.mxu0 %v1041
        %1111 = vmatpush1.bf16.msra.mxu0 %v1040
        %1112 = vmatprep.subr.bf16.mxu0 %v1039
        %1113 = vmatpush1.bf16.msra.mxu0 %v1038
        %1114 = vmatprep.subr.bf16.mxu0 %v1037
        %1115 = vmatpush1.bf16.msra.mxu0 %v1036
        %1116 = vmatprep.subr.bf16.mxu0 %v1067
        %1117 = vmatpush2.bf16.msra.mxu0 %v1066
        %1118 = vmatprep.subr.bf16.mxu0 %v1065
        %1119 = vmatpush2.bf16.msra.mxu0 %v1064
        %1120 = vmatprep.subr.bf16.mxu0 %v1063
        %1121 = vmatpush2.bf16.msra.mxu0 %v1062
        %1122 = vmatprep.subr.bf16.mxu0 %v1061
        %1123 = vmatpush2.bf16.msra.mxu0 %v1060
        %1124 = vmatprep.subr.bf16.mxu0 %v1059
        %1125 = vmatpush2.bf16.msra.mxu0 %v1058
        %1126 = vmatprep.subr.bf16.mxu0 %v1057
        %1127 = vmatpush2.bf16.msra.mxu0 %v1056
        %1128 = vmatprep.subr.bf16.mxu0 %v1055
        %1129 = vmatpush2.bf16.msra.mxu0 %v1054
        %1130 = vmatprep.subr.bf16.mxu0 %v1053
        %1131 = vmatpush2.bf16.msra.mxu0 %v1052
        %1132 = vmatprep.mubr.bf16.mxu0 %v939
        %1133 = vmatmul.mubr.bf16.gmra.mxu0 %v938
        %v1134 = vpop.f32.mrf.mxu0
        %v1135 = vadd.f32 0.0, %v1134
        %v1136 = vpop.f32.mrf.mxu0
        %v1137 = vadd.f32 0.0, %v1136
        %v1138 = vpop.f32.mrf.mxu0
        %v1139 = vpop.f32.mrf.mxu0
        %1140 = vdwg.mxu0
        %1142 = vset.pattern.permute.xlu0 0
        %1143 = vperm.xlu0 %1142, %v903
        %v1144 = vpop.permute.xlu0 %1143
        %v1146 = vmul.f32 %v1135, %v1144
        %v1147 = vmul.f32 %v1137, %v1144
        %v1148 = vsel %vm884, %v1146, %v865
        %v1149 = vsel %vm885, %v1147, %v866
        %v1150 = vpack.c.bf16 %v1148, %v1148
        %v1151 = vpack.c.bf16 %v1149, %v1149
        %v1152 = vld [vmem:[#allocation7] sm:$0xff]
        %v1153 = vld [vmem:[#allocation7 + $0x8] sm:$0xff]
        %v1154 = vld [vmem:[#allocation7 + $0x10] sm:$0xff]
        %v1155 = vld [vmem:[#allocation7 + $0x18] sm:$0xff]
        %v1156 = vld [vmem:[#allocation7 + $0x20] sm:$0xff]
        %v1157 = vld [vmem:[#allocation7 + $0x28] sm:$0xff]
        %v1158 = vld [vmem:[#allocation7 + $0x30] sm:$0xff]
        %v1159 = vld [vmem:[#allocation7 + $0x38] sm:$0xff]
        %v1160 = vld [vmem:[#allocation7 + $0x40] sm:$0xff]
        %v1161 = vld [vmem:[#allocation7 + $0x48] sm:$0xff]
        %v1162 = vld [vmem:[#allocation7 + $0x50] sm:$0xff]
        %v1163 = vld [vmem:[#allocation7 + $0x58] sm:$0xff]
        %v1164 = vld [vmem:[#allocation7 + $0x60] sm:$0xff]
        %v1165 = vld [vmem:[#allocation7 + $0x68] sm:$0xff]
        %v1166 = vld [vmem:[#allocation7 + $0x70] sm:$0xff]
        %v1167 = vld [vmem:[#allocation7 + $0x78] sm:$0xff]
        %v1168 = vld [vmem:[#allocation7 + $0x80] sm:$0xff]
        %v1169 = vld [vmem:[#allocation7 + $0x88] sm:$0xff]
        %v1170 = vld [vmem:[#allocation7 + $0x90] sm:$0xff]
        %v1171 = vld [vmem:[#allocation7 + $0x98] sm:$0xff]
        %v1172 = vld [vmem:[#allocation7 + $0xa0] sm:$0xff]
        %v1173 = vld [vmem:[#allocation7 + $0xa8] sm:$0xff]
        %v1174 = vld [vmem:[#allocation7 + $0xb0] sm:$0xff]
        %v1175 = vld [vmem:[#allocation7 + $0xb8] sm:$0xff]
        %v1176 = vld [vmem:[#allocation7 + $0xc0] sm:$0xff]
        %v1177 = vld [vmem:[#allocation7 + $0xc8] sm:$0xff]
        %v1178 = vld [vmem:[#allocation7 + $0xd0] sm:$0xff]
        %v1179 = vld [vmem:[#allocation7 + $0xd8] sm:$0xff]
        %v1180 = vld [vmem:[#allocation7 + $0xe0] sm:$0xff]
        %v1181 = vld [vmem:[#allocation7 + $0xe8] sm:$0xff]
        %v1182 = vld [vmem:[#allocation7 + $0xf0] sm:$0xff]
        %v1183 = vld [vmem:[#allocation7 + $0xf8] sm:$0xff]
        %v1184 = vld [vmem:[%s6] sm:$0x3]
        %v1186 = vlaneseq
        %v1187 = vshrl.u32 %v1186, 7
        %v1188 = vsub.s32 0, %v1187
        %v1189 = vrot.slane %v1184, %v1188
        %v1190 = vlaneseq
        %v1191 = vshrl.u32 %v1190, 7
        %v1192 = vsub.s32 1, %v1191
        %v1193 = vrot.slane %v1184, %v1192
        %v1228 = vunpack.c.l.b16 %v1152
        %v1229 = vunpack.c.h.b16 %v1152
        %v1230 = vunpack.c.l.b16 %v1153
        %v1231 = vunpack.c.h.b16 %v1153
        %v1232 = vunpack.c.l.b16 %v1154
        %v1233 = vunpack.c.h.b16 %v1154
        %v1234 = vunpack.c.l.b16 %v1155
        %v1235 = vunpack.c.h.b16 %v1155
        %v1236 = vunpack.c.l.b16 %v1156
        %v1237 = vunpack.c.h.b16 %v1156
        %v1238 = vunpack.c.l.b16 %v1157
        %v1239 = vunpack.c.h.b16 %v1157
        %v1240 = vunpack.c.l.b16 %v1158
        %v1241 = vunpack.c.h.b16 %v1158
        %v1242 = vunpack.c.l.b16 %v1159
        %v1243 = vunpack.c.h.b16 %v1159
        %v1244 = vunpack.c.l.b16 %v1160
        %v1245 = vunpack.c.h.b16 %v1160
        %v1246 = vunpack.c.l.b16 %v1161
        %v1247 = vunpack.c.h.b16 %v1161
        %v1248 = vunpack.c.l.b16 %v1162
        %v1249 = vunpack.c.h.b16 %v1162
        %v1250 = vunpack.c.l.b16 %v1163
        %v1251 = vunpack.c.h.b16 %v1163
        %v1252 = vunpack.c.l.b16 %v1164
        %v1253 = vunpack.c.h.b16 %v1164
        %v1254 = vunpack.c.l.b16 %v1165
        %v1255 = vunpack.c.h.b16 %v1165
        %v1256 = vunpack.c.l.b16 %v1166
        %v1257 = vunpack.c.h.b16 %v1166
        %v1258 = vunpack.c.l.b16 %v1167
        %v1259 = vunpack.c.h.b16 %v1167
        %v1260 = vunpack.c.l.b16 %v1168
        %v1261 = vunpack.c.h.b16 %v1168
        %v1262 = vunpack.c.l.b16 %v1169
        %v1263 = vunpack.c.h.b16 %v1169
        %v1264 = vunpack.c.l.b16 %v1170
        %v1265 = vunpack.c.h.b16 %v1170
        %v1266 = vunpack.c.l.b16 %v1171
        %v1267 = vunpack.c.h.b16 %v1171
        %v1268 = vunpack.c.l.b16 %v1172
        %v1269 = vunpack.c.h.b16 %v1172
        %v1270 = vunpack.c.l.b16 %v1173
        %v1271 = vunpack.c.h.b16 %v1173
        %v1272 = vunpack.c.l.b16 %v1174
        %v1273 = vunpack.c.h.b16 %v1174
        %v1274 = vunpack.c.l.b16 %v1175
        %v1275 = vunpack.c.h.b16 %v1175
        %v1276 = vunpack.c.l.b16 %v1176
        %v1277 = vunpack.c.h.b16 %v1176
        %v1278 = vunpack.c.l.b16 %v1177
        %v1279 = vunpack.c.h.b16 %v1177
        %v1280 = vunpack.c.l.b16 %v1178
        %v1281 = vunpack.c.h.b16 %v1178
        %v1282 = vunpack.c.l.b16 %v1179
        %v1283 = vunpack.c.h.b16 %v1179
        %v1284 = vunpack.c.l.b16 %v1180
        %v1285 = vunpack.c.h.b16 %v1180
        %v1286 = vunpack.c.l.b16 %v1181
        %v1287 = vunpack.c.h.b16 %v1181
        %v1288 = vunpack.c.l.b16 %v1182
        %v1289 = vunpack.c.h.b16 %v1182
        %v1290 = vunpack.c.l.b16 %v1183
        %v1291 = vunpack.c.h.b16 %v1183
        %v1292 = vpack.c.b16 %v1230, %v1228
        %v1293 = vpack.c.b16 %v1231, %v1229
        %v1294 = vpack.c.b16 %v1234, %v1232
        %v1295 = vpack.c.b16 %v1235, %v1233
        %v1296 = vpack.c.b16 %v1238, %v1236
        %v1297 = vpack.c.b16 %v1239, %v1237
        %v1298 = vpack.c.b16 %v1242, %v1240
        %v1299 = vpack.c.b16 %v1243, %v1241
        %v1300 = vpack.c.b16 %v1246, %v1244
        %v1301 = vpack.c.b16 %v1247, %v1245
        %v1302 = vpack.c.b16 %v1250, %v1248
        %v1303 = vpack.c.b16 %v1251, %v1249
        %v1304 = vpack.c.b16 %v1254, %v1252
        %v1305 = vpack.c.b16 %v1255, %v1253
        %v1306 = vpack.c.b16 %v1258, %v1256
        %v1307 = vpack.c.b16 %v1259, %v1257
        %v1308 = vpack.c.b16 %v1262, %v1260
        %v1309 = vpack.c.b16 %v1263, %v1261
        %v1310 = vpack.c.b16 %v1266, %v1264
        %v1311 = vpack.c.b16 %v1267, %v1265
        %v1312 = vpack.c.b16 %v1270, %v1268
        %v1313 = vpack.c.b16 %v1271, %v1269
        %v1314 = vpack.c.b16 %v1274, %v1272
        %v1315 = vpack.c.b16 %v1275, %v1273
        %v1316 = vpack.c.b16 %v1278, %v1276
        %v1317 = vpack.c.b16 %v1279, %v1277
        %v1318 = vpack.c.b16 %v1282, %v1280
        %v1319 = vpack.c.b16 %v1283, %v1281
        %v1320 = vpack.c.b16 %v1286, %v1284
        %v1321 = vpack.c.b16 %v1287, %v1285
        %v1322 = vpack.c.b16 %v1290, %v1288
        %v1323 = vpack.c.b16 %v1291, %v1289
        %1356 = vmatprep.subr.bf16.mxu0 %v1307
        %1357 = vmatpush1.bf16.msra.mxu0 %v1306
        %1358 = vmatprep.subr.bf16.mxu0 %v1305
        %1359 = vmatpush1.bf16.msra.mxu0 %v1304
        %1360 = vmatprep.subr.bf16.mxu0 %v1303
        %1361 = vmatpush1.bf16.msra.mxu0 %v1302
        %1362 = vmatprep.subr.bf16.mxu0 %v1301
        %1363 = vmatpush1.bf16.msra.mxu0 %v1300
        %1364 = vmatprep.subr.bf16.mxu0 %v1299
        %1365 = vmatpush1.bf16.msra.mxu0 %v1298
        %1366 = vmatprep.subr.bf16.mxu0 %v1297
        %1367 = vmatpush1.bf16.msra.mxu0 %v1296
        %1368 = vmatprep.subr.bf16.mxu0 %v1295
        %1369 = vmatpush1.bf16.msra.mxu0 %v1294
        %1370 = vmatprep.subr.bf16.mxu0 %v1293
        %1371 = vmatpush1.bf16.msra.mxu0 %v1292
        %1372 = vmatprep.subr.bf16.mxu0 %v1323
        %1373 = vmatpush2.bf16.msra.mxu0 %v1322
        %1374 = vmatprep.subr.bf16.mxu0 %v1321
        %1375 = vmatpush2.bf16.msra.mxu0 %v1320
        %1376 = vmatprep.subr.bf16.mxu0 %v1319
        %1377 = vmatpush2.bf16.msra.mxu0 %v1318
        %1378 = vmatprep.subr.bf16.mxu0 %v1317
        %1379 = vmatpush2.bf16.msra.mxu0 %v1316
        %1380 = vmatprep.subr.bf16.mxu0 %v1315
        %1381 = vmatpush2.bf16.msra.mxu0 %v1314
        %1382 = vmatprep.subr.bf16.mxu0 %v1313
        %1383 = vmatpush2.bf16.msra.mxu0 %v1312
        %1384 = vmatprep.subr.bf16.mxu0 %v1311
        %1385 = vmatpush2.bf16.msra.mxu0 %v1310
        %1386 = vmatprep.subr.bf16.mxu0 %v1309
        %1387 = vmatpush2.bf16.msra.mxu0 %v1308
        %1388 = vmatprep.mubr.bf16.mxu0 %v1151
        %1389 = vmatmul.mubr.bf16.gmra.mxu0 %v1150
        %v1390 = vpop.f32.mrf.mxu0
        %v1391 = vadd.f32 %v1189, %v1390
        %v1392 = vpop.f32.mrf.mxu0
        %v1393 = vadd.f32 %v1193, %v1392
        %v1394 = vpop.f32.mrf.mxu0
        %v1395 = vpop.f32.mrf.mxu0
        %1396 = vdwg.mxu0
        %vm1397 = vcmp.gt.f32.partialorder %v1391, 0.0
        %vm1398 = vcmp.gt.f32.partialorder %v1393, 0.0
        %v1399 = vmin.f32 %v1391, 0.0
        %v1400 = vmin.f32 %v1393, 0.0
        %v1401 = vmul.f32 %v1399, 1.442695
        %v1402 = vpow.pop %v1401
        %v1403 = vmul.f32 %v1400, 1.442695
        %v1404 = vpow.pop %v1403
        %v1405 = vsub.f32 %v1402, 1.0
        %v1406 = vsub.f32 %v1404, 1.0
        %v1407 = vsel %vm1397, %v1391, %v1405
        %v1408 = vsel %vm1398, %v1393, %v1406
        %v1409 = vsel %vm884, %v1407, 0.0
        %v1410 = vsel %vm885, %v1408, 0.0
        %v1411 = vpack.c.bf16 %v1409, %v1409
        %v1412 = vpack.c.bf16 %v1410, %v1410
        %1413 = vmatprep.subr.bf16.mxu0 %v1051
        %1414 = vmatpush1.bf16.msra.mxu0 %v1050
        %1415 = vmatprep.subr.bf16.mxu0 %v1049
        %1416 = vmatpush1.bf16.msra.mxu0 %v1048
        %1417 = vmatprep.subr.bf16.mxu0 %v1047
        %1418 = vmatpush1.bf16.msra.mxu0 %v1046
        %1419 = vmatprep.subr.bf16.mxu0 %v1045
        %1420 = vmatpush1.bf16.msra.mxu0 %v1044
        %1421 = vmatprep.subr.bf16.mxu0 %v1043
        %1422 = vmatpush1.bf16.msra.mxu0 %v1042
        %1423 = vmatprep.subr.bf16.mxu0 %v1041
        %1424 = vmatpush1.bf16.msra.mxu0 %v1040
        %1425 = vmatprep.subr.bf16.mxu0 %v1039
        %1426 = vmatpush1.bf16.msra.mxu0 %v1038
        %1427 = vmatprep.subr.bf16.mxu0 %v1037
        %1428 = vmatpush1.bf16.msra.mxu0 %v1036
        %1429 = vmatprep.subr.bf16.mxu0 %v1067
        %1430 = vmatpush2.bf16.msra.mxu0 %v1066
        %1431 = vmatprep.subr.bf16.mxu0 %v1065
        %1432 = vmatpush2.bf16.msra.mxu0 %v1064
        %1433 = vmatprep.subr.bf16.mxu0 %v1063
        %1434 = vmatpush2.bf16.msra.mxu0 %v1062
        %1435 = vmatprep.subr.bf16.mxu0 %v1061
        %1436 = vmatpush2.bf16.msra.mxu0 %v1060
        %1437 = vmatprep.subr.bf16.mxu0 %v1059
        %1438 = vmatpush2.bf16.msra.mxu0 %v1058
        %1439 = vmatprep.subr.bf16.mxu0 %v1057
        %1440 = vmatpush2.bf16.msra.mxu0 %v1056
        %1441 = vmatprep.subr.bf16.mxu0 %v1055
        %1442 = vmatpush2.bf16.msra.mxu0 %v1054
        %1443 = vmatprep.subr.bf16.mxu0 %v1053
        %1444 = vmatpush2.bf16.msra.mxu0 %v1052
        %1445 = vmatprep.mubr.bf16.mxu0 %v1412
        %1446 = vmatmul.mubr.bf16.gmra.mxu0 %v1411
        %v1447 = vpop.f32.mrf.mxu0
        %v1448 = vadd.f32 0.0, %v1447
        %v1449 = vpop.f32.mrf.mxu0
        %v1450 = vadd.f32 0.0, %v1449
        %v1451 = vpop.f32.mrf.mxu0
        %v1452 = vpop.f32.mrf.mxu0
        %1453 = vdwg.mxu0
        %v1454 = vmul.f32 %v1448, %v1144
        %v1455 = vmul.f32 %v1450, %v1144
        %v1456 = vsel %vm884, %v1454, %v1407
        %v1457 = vsel %vm885, %v1455, %v1408
        %v1458 = vpack.c.bf16 %v1456, %v1456
        %v1459 = vpack.c.bf16 %v1457, %v1457
        %v1460 = vld [vmem:[#allocation9] sm:$0xff]
        %v1461 = vld [vmem:[#allocation9 + $0x8] sm:$0xff]
        %v1462 = vld [vmem:[#allocation9 + $0x10] sm:$0xff]
        %v1463 = vld [vmem:[#allocation9 + $0x18] sm:$0xff]
        %v1464 = vld [vmem:[#allocation9 + $0x20] sm:$0xff]
        %v1465 = vld [vmem:[#allocation9 + $0x28] sm:$0xff]
        %v1466 = vld [vmem:[#allocation9 + $0x30] sm:$0xff]
        %v1467 = vld [vmem:[#allocation9 + $0x38] sm:$0xff]
        %v1468 = vld [vmem:[#allocation9 + $0x40] sm:$0xff]
        %v1469 = vld [vmem:[#allocation9 + $0x48] sm:$0xff]
        %v1470 = vld [vmem:[#allocation9 + $0x50] sm:$0xff]
        %v1471 = vld [vmem:[#allocation9 + $0x58] sm:$0xff]
        %v1472 = vld [vmem:[#allocation9 + $0x60] sm:$0xff]
        %v1473 = vld [vmem:[#allocation9 + $0x68] sm:$0xff]
        %v1474 = vld [vmem:[#allocation9 + $0x70] sm:$0xff]
        %v1475 = vld [vmem:[#allocation9 + $0x78] sm:$0xff]
        %v1476 = vld [vmem:[#allocation9 + $0x80] sm:$0xff]
        %v1477 = vld [vmem:[#allocation9 + $0x88] sm:$0xff]
        %v1478 = vld [vmem:[#allocation9 + $0x90] sm:$0xff]
        %v1479 = vld [vmem:[#allocation9 + $0x98] sm:$0xff]
        %v1480 = vld [vmem:[#allocation9 + $0xa0] sm:$0xff]
        %v1481 = vld [vmem:[#allocation9 + $0xa8] sm:$0xff]
        %v1482 = vld [vmem:[#allocation9 + $0xb0] sm:$0xff]
        %v1483 = vld [vmem:[#allocation9 + $0xb8] sm:$0xff]
        %v1484 = vld [vmem:[#allocation9 + $0xc0] sm:$0xff]
        %v1485 = vld [vmem:[#allocation9 + $0xc8] sm:$0xff]
        %v1486 = vld [vmem:[#allocation9 + $0xd0] sm:$0xff]
        %v1487 = vld [vmem:[#allocation9 + $0xd8] sm:$0xff]
        %v1488 = vld [vmem:[#allocation9 + $0xe0] sm:$0xff]
        %v1489 = vld [vmem:[#allocation9 + $0xe8] sm:$0xff]
        %v1490 = vld [vmem:[#allocation9 + $0xf0] sm:$0xff]
        %v1491 = vld [vmem:[#allocation9 + $0xf8] sm:$0xff]
        %v1492 = vld [vmem:[%s8] sm:$0x3]
        %v1494 = vlaneseq
        %v1495 = vshrl.u32 %v1494, 7
        %v1496 = vsub.s32 0, %v1495
        %v1497 = vrot.slane %v1492, %v1496
        %v1498 = vlaneseq
        %v1499 = vshrl.u32 %v1498, 7
        %v1500 = vsub.s32 1, %v1499
        %v1501 = vrot.slane %v1492, %v1500
        %v1536 = vunpack.c.l.b16 %v1460
        %v1537 = vunpack.c.h.b16 %v1460
        %v1538 = vunpack.c.l.b16 %v1461
        %v1539 = vunpack.c.h.b16 %v1461
        %v1540 = vunpack.c.l.b16 %v1462
        %v1541 = vunpack.c.h.b16 %v1462
        %v1542 = vunpack.c.l.b16 %v1463
        %v1543 = vunpack.c.h.b16 %v1463
        %v1544 = vunpack.c.l.b16 %v1464
        %v1545 = vunpack.c.h.b16 %v1464
        %v1546 = vunpack.c.l.b16 %v1465
        %v1547 = vunpack.c.h.b16 %v1465
        %v1548 = vunpack.c.l.b16 %v1466
        %v1549 = vunpack.c.h.b16 %v1466
        %v1550 = vunpack.c.l.b16 %v1467
        %v1551 = vunpack.c.h.b16 %v1467
        %v1552 = vunpack.c.l.b16 %v1468
        %v1553 = vunpack.c.h.b16 %v1468
        %v1554 = vunpack.c.l.b16 %v1469
        %v1555 = vunpack.c.h.b16 %v1469
        %v1556 = vunpack.c.l.b16 %v1470
        %v1557 = vunpack.c.h.b16 %v1470
        %v1558 = vunpack.c.l.b16 %v1471
        %v1559 = vunpack.c.h.b16 %v1471
        %v1560 = vunpack.c.l.b16 %v1472
        %v1561 = vunpack.c.h.b16 %v1472
        %v1562 = vunpack.c.l.b16 %v1473
        %v1563 = vunpack.c.h.b16 %v1473
        %v1564 = vunpack.c.l.b16 %v1474
        %v1565 = vunpack.c.h.b16 %v1474
        %v1566 = vunpack.c.l.b16 %v1475
        %v1567 = vunpack.c.h.b16 %v1475
        %v1568 = vunpack.c.l.b16 %v1476
        %v1569 = vunpack.c.h.b16 %v1476
        %v1570 = vunpack.c.l.b16 %v1477
        %v1571 = vunpack.c.h.b16 %v1477
        %v1572 = vunpack.c.l.b16 %v1478
        %v1573 = vunpack.c.h.b16 %v1478
        %v1574 = vunpack.c.l.b16 %v1479
        %v1575 = vunpack.c.h.b16 %v1479
        %v1576 = vunpack.c.l.b16 %v1480
        %v1577 = vunpack.c.h.b16 %v1480
        %v1578 = vunpack.c.l.b16 %v1481
        %v1579 = vunpack.c.h.b16 %v1481
        %v1580 = vunpack.c.l.b16 %v1482
        %v1581 = vunpack.c.h.b16 %v1482
        %v1582 = vunpack.c.l.b16 %v1483
        %v1583 = vunpack.c.h.b16 %v1483
        %v1584 = vunpack.c.l.b16 %v1484
        %v1585 = vunpack.c.h.b16 %v1484
        %v1586 = vunpack.c.l.b16 %v1485
        %v1587 = vunpack.c.h.b16 %v1485
        %v1588 = vunpack.c.l.b16 %v1486
        %v1589 = vunpack.c.h.b16 %v1486
        %v1590 = vunpack.c.l.b16 %v1487
        %v1591 = vunpack.c.h.b16 %v1487
        %v1592 = vunpack.c.l.b16 %v1488
        %v1593 = vunpack.c.h.b16 %v1488
        %v1594 = vunpack.c.l.b16 %v1489
        %v1595 = vunpack.c.h.b16 %v1489
        %v1596 = vunpack.c.l.b16 %v1490
        %v1597 = vunpack.c.h.b16 %v1490
        %v1598 = vunpack.c.l.b16 %v1491
        %v1599 = vunpack.c.h.b16 %v1491
        %v1600 = vpack.c.b16 %v1538, %v1536
        %v1601 = vpack.c.b16 %v1539, %v1537
        %v1602 = vpack.c.b16 %v1542, %v1540
        %v1603 = vpack.c.b16 %v1543, %v1541
        %v1604 = vpack.c.b16 %v1546, %v1544
        %v1605 = vpack.c.b16 %v1547, %v1545
        %v1606 = vpack.c.b16 %v1550, %v1548
        %v1607 = vpack.c.b16 %v1551, %v1549
        %v1608 = vpack.c.b16 %v1554, %v1552
        %v1609 = vpack.c.b16 %v1555, %v1553
        %v1610 = vpack.c.b16 %v1558, %v1556
        %v1611 = vpack.c.b16 %v1559, %v1557
        %v1612 = vpack.c.b16 %v1562, %v1560
        %v1613 = vpack.c.b16 %v1563, %v1561
        %v1614 = vpack.c.b16 %v1566, %v1564
        %v1615 = vpack.c.b16 %v1567, %v1565
        %v1616 = vpack.c.b16 %v1570, %v1568
        %v1617 = vpack.c.b16 %v1571, %v1569
        %v1618 = vpack.c.b16 %v1574, %v1572
        %v1619 = vpack.c.b16 %v1575, %v1573
        %v1620 = vpack.c.b16 %v1578, %v1576
        %v1621 = vpack.c.b16 %v1579, %v1577
        %v1622 = vpack.c.b16 %v1582, %v1580
        %v1623 = vpack.c.b16 %v1583, %v1581
        %v1624 = vpack.c.b16 %v1586, %v1584
        %v1625 = vpack.c.b16 %v1587, %v1585
        %v1626 = vpack.c.b16 %v1590, %v1588
        %v1627 = vpack.c.b16 %v1591, %v1589
        %v1628 = vpack.c.b16 %v1594, %v1592
        %v1629 = vpack.c.b16 %v1595, %v1593
        %v1630 = vpack.c.b16 %v1598, %v1596
        %v1631 = vpack.c.b16 %v1599, %v1597
        %1664 = vmatprep.subr.bf16.mxu0 %v1615
        %1665 = vmatpush1.bf16.msra.mxu0 %v1614
        %1666 = vmatprep.subr.bf16.mxu0 %v1613
        %1667 = vmatpush1.bf16.msra.mxu0 %v1612
        %1668 = vmatprep.subr.bf16.mxu0 %v1611
        %1669 = vmatpush1.bf16.msra.mxu0 %v1610
        %1670 = vmatprep.subr.bf16.mxu0 %v1609
        %1671 = vmatpush1.bf16.msra.mxu0 %v1608
        %1672 = vmatprep.subr.bf16.mxu0 %v1607
        %1673 = vmatpush1.bf16.msra.mxu0 %v1606
        %1674 = vmatprep.subr.bf16.mxu0 %v1605
        %1675 = vmatpush1.bf16.msra.mxu0 %v1604
        %1676 = vmatprep.subr.bf16.mxu0 %v1603
        %1677 = vmatpush1.bf16.msra.mxu0 %v1602
        %1678 = vmatprep.subr.bf16.mxu0 %v1601
        %1679 = vmatpush1.bf16.msra.mxu0 %v1600
        %1680 = vmatprep.subr.bf16.mxu0 %v1631
        %1681 = vmatpush2.bf16.msra.mxu0 %v1630
        %1682 = vmatprep.subr.bf16.mxu0 %v1629
        %1683 = vmatpush2.bf16.msra.mxu0 %v1628
        %1684 = vmatprep.subr.bf16.mxu0 %v1627
        %1685 = vmatpush2.bf16.msra.mxu0 %v1626
        %1686 = vmatprep.subr.bf16.mxu0 %v1625
        %1687 = vmatpush2.bf16.msra.mxu0 %v1624
        %1688 = vmatprep.subr.bf16.mxu0 %v1623
        %1689 = vmatpush2.bf16.msra.mxu0 %v1622
        %1690 = vmatprep.subr.bf16.mxu0 %v1621
        %1691 = vmatpush2.bf16.msra.mxu0 %v1620
        %1692 = vmatprep.subr.bf16.mxu0 %v1619
        %1693 = vmatpush2.bf16.msra.mxu0 %v1618
        %1694 = vmatprep.subr.bf16.mxu0 %v1617
        %1695 = vmatpush2.bf16.msra.mxu0 %v1616
        %1696 = vmatprep.mubr.bf16.mxu0 %v1459
        %1697 = vmatmul.mubr.bf16.gmra.mxu0 %v1458
        %v1698 = vpop.f32.mrf.mxu0
        %v1699 = vadd.f32 %v1497, %v1698
        %v1700 = vpop.f32.mrf.mxu0
        %v1701 = vadd.f32 %v1501, %v1700
        %v1702 = vpop.f32.mrf.mxu0
        %v1703 = vpop.f32.mrf.mxu0
        %1704 = vdwg.mxu0
        %vm1705 = vcmp.gt.f32.partialorder %v1699, 0.0
        %vm1706 = vcmp.gt.f32.partialorder %v1701, 0.0
        %v1707 = vmin.f32 %v1699, 0.0
        %v1708 = vmin.f32 %v1701, 0.0
        %v1709 = vmul.f32 %v1707, 1.442695
        %v1710 = vpow.pop %v1709
        %v1711 = vmul.f32 %v1708, 1.442695
        %v1712 = vpow.pop %v1711
        %v1713 = vsub.f32 %v1710, 1.0
        %v1714 = vsub.f32 %v1712, 1.0
        %v1715 = vsel %vm1705, %v1699, %v1713
        %v1716 = vsel %vm1706, %v1701, %v1714
        %v1717 = vmul.f32 %v1715, %v1715
        %v1718 = vmul.f32 %v1716, %v1716
        %v1719 = vpack.c.bf16 %v1717, %v1717
        %v1720 = vpack.c.bf16 %v1718, %v1718
        %v1721 = vld [vmem:[#allocation10] sm:$0xff]
        %v1722 = vld [vmem:[#allocation10 + $0x8] sm:$0xff]
        %v1723 = vld [vmem:[#allocation10 + $0x10] sm:$0xff]
        %v1724 = vld [vmem:[#allocation10 + $0x18] sm:$0xff]
        %v1725 = vld [vmem:[#allocation10 + $0x20] sm:$0xff]
        %v1726 = vld [vmem:[#allocation10 + $0x28] sm:$0xff]
        %v1727 = vld [vmem:[#allocation10 + $0x30] sm:$0xff]
        %v1728 = vld [vmem:[#allocation10 + $0x38] sm:$0xff]
        %v1729 = vld [vmem:[#allocation10 + $0x40] sm:$0xff]
        %v1730 = vld [vmem:[#allocation10 + $0x48] sm:$0xff]
        %v1731 = vld [vmem:[#allocation10 + $0x50] sm:$0xff]
        %v1732 = vld [vmem:[#allocation10 + $0x58] sm:$0xff]
        %v1733 = vld [vmem:[#allocation10 + $0x60] sm:$0xff]
        %v1734 = vld [vmem:[#allocation10 + $0x68] sm:$0xff]
        %v1735 = vld [vmem:[#allocation10 + $0x70] sm:$0xff]
        %v1736 = vld [vmem:[#allocation10 + $0x78] sm:$0xff]
        %v1737 = vld [vmem:[#allocation10 + $0x80] sm:$0xff]
        %v1738 = vld [vmem:[#allocation10 + $0x88] sm:$0xff]
        %v1739 = vld [vmem:[#allocation10 + $0x90] sm:$0xff]
        %v1740 = vld [vmem:[#allocation10 + $0x98] sm:$0xff]
        %v1741 = vld [vmem:[#allocation10 + $0xa0] sm:$0xff]
        %v1742 = vld [vmem:[#allocation10 + $0xa8] sm:$0xff]
        %v1743 = vld [vmem:[#allocation10 + $0xb0] sm:$0xff]
        %v1744 = vld [vmem:[#allocation10 + $0xb8] sm:$0xff]
        %v1745 = vld [vmem:[#allocation10 + $0xc0] sm:$0xff]
        %v1746 = vld [vmem:[#allocation10 + $0xc8] sm:$0xff]
        %v1747 = vld [vmem:[#allocation10 + $0xd0] sm:$0xff]
        %v1748 = vld [vmem:[#allocation10 + $0xd8] sm:$0xff]
        %v1749 = vld [vmem:[#allocation10 + $0xe0] sm:$0xff]
        %v1750 = vld [vmem:[#allocation10 + $0xe8] sm:$0xff]
        %v1751 = vld [vmem:[#allocation10 + $0xf0] sm:$0xff]
        %v1752 = vld [vmem:[#allocation10 + $0xf8] sm:$0xff]
        %v1785 = vunpack.c.l.b16 %v1721
        %v1786 = vunpack.c.h.b16 %v1721
        %v1787 = vunpack.c.l.b16 %v1722
        %v1788 = vunpack.c.h.b16 %v1722
        %v1789 = vunpack.c.l.b16 %v1723
        %v1790 = vunpack.c.h.b16 %v1723
        %v1791 = vunpack.c.l.b16 %v1724
        %v1792 = vunpack.c.h.b16 %v1724
        %v1793 = vunpack.c.l.b16 %v1725
        %v1794 = vunpack.c.h.b16 %v1725
        %v1795 = vunpack.c.l.b16 %v1726
        %v1796 = vunpack.c.h.b16 %v1726
        %v1797 = vunpack.c.l.b16 %v1727
        %v1798 = vunpack.c.h.b16 %v1727
        %v1799 = vunpack.c.l.b16 %v1728
        %v1800 = vunpack.c.h.b16 %v1728
        %v1801 = vunpack.c.l.b16 %v1729
        %v1802 = vunpack.c.h.b16 %v1729
        %v1803 = vunpack.c.l.b16 %v1730
        %v1804 = vunpack.c.h.b16 %v1730
        %v1805 = vunpack.c.l.b16 %v1731
        %v1806 = vunpack.c.h.b16 %v1731
        %v1807 = vunpack.c.l.b16 %v1732
        %v1808 = vunpack.c.h.b16 %v1732
        %v1809 = vunpack.c.l.b16 %v1733
        %v1810 = vunpack.c.h.b16 %v1733
        %v1811 = vunpack.c.l.b16 %v1734
        %v1812 = vunpack.c.h.b16 %v1734
        %v1813 = vunpack.c.l.b16 %v1735
        %v1814 = vunpack.c.h.b16 %v1735
        %v1815 = vunpack.c.l.b16 %v1736
        %v1816 = vunpack.c.h.b16 %v1736
        %v1817 = vunpack.c.l.b16 %v1737
        %v1818 = vunpack.c.h.b16 %v1737
        %v1819 = vunpack.c.l.b16 %v1738
        %v1820 = vunpack.c.h.b16 %v1738
        %v1821 = vunpack.c.l.b16 %v1739
        %v1822 = vunpack.c.h.b16 %v1739
        %v1823 = vunpack.c.l.b16 %v1740
        %v1824 = vunpack.c.h.b16 %v1740
        %v1825 = vunpack.c.l.b16 %v1741
        %v1826 = vunpack.c.h.b16 %v1741
        %v1827 = vunpack.c.l.b16 %v1742
        %v1828 = vunpack.c.h.b16 %v1742
        %v1829 = vunpack.c.l.b16 %v1743
        %v1830 = vunpack.c.h.b16 %v1743
        %v1831 = vunpack.c.l.b16 %v1744
        %v1832 = vunpack.c.h.b16 %v1744
        %v1833 = vunpack.c.l.b16 %v1745
        %v1834 = vunpack.c.h.b16 %v1745
        %v1835 = vunpack.c.l.b16 %v1746
        %v1836 = vunpack.c.h.b16 %v1746
        %v1837 = vunpack.c.l.b16 %v1747
        %v1838 = vunpack.c.h.b16 %v1747
        %v1839 = vunpack.c.l.b16 %v1748
        %v1840 = vunpack.c.h.b16 %v1748
        %v1841 = vunpack.c.l.b16 %v1749
        %v1842 = vunpack.c.h.b16 %v1749
        %v1843 = vunpack.c.l.b16 %v1750
        %v1844 = vunpack.c.h.b16 %v1750
        %v1845 = vunpack.c.l.b16 %v1751
        %v1846 = vunpack.c.h.b16 %v1751
        %v1847 = vunpack.c.l.b16 %v1752
        %v1848 = vunpack.c.h.b16 %v1752
        %v1849 = vpack.c.b16 %v1787, %v1785
        %v1850 = vpack.c.b16 %v1788, %v1786
        %v1851 = vpack.c.b16 %v1791, %v1789
        %v1852 = vpack.c.b16 %v1792, %v1790
        %v1853 = vpack.c.b16 %v1795, %v1793
        %v1854 = vpack.c.b16 %v1796, %v1794
        %v1855 = vpack.c.b16 %v1799, %v1797
        %v1856 = vpack.c.b16 %v1800, %v1798
        %v1857 = vpack.c.b16 %v1803, %v1801
        %v1858 = vpack.c.b16 %v1804, %v1802
        %v1859 = vpack.c.b16 %v1807, %v1805
        %v1860 = vpack.c.b16 %v1808, %v1806
        %v1861 = vpack.c.b16 %v1811, %v1809
        %v1862 = vpack.c.b16 %v1812, %v1810
        %v1863 = vpack.c.b16 %v1815, %v1813
        %v1864 = vpack.c.b16 %v1816, %v1814
        %v1865 = vpack.c.b16 %v1819, %v1817
        %v1866 = vpack.c.b16 %v1820, %v1818
        %v1867 = vpack.c.b16 %v1823, %v1821
        %v1868 = vpack.c.b16 %v1824, %v1822
        %v1869 = vpack.c.b16 %v1827, %v1825
        %v1870 = vpack.c.b16 %v1828, %v1826
        %v1871 = vpack.c.b16 %v1831, %v1829
        %v1872 = vpack.c.b16 %v1832, %v1830
        %v1873 = vpack.c.b16 %v1835, %v1833
        %v1874 = vpack.c.b16 %v1836, %v1834
        %v1875 = vpack.c.b16 %v1839, %v1837
        %v1876 = vpack.c.b16 %v1840, %v1838
        %v1877 = vpack.c.b16 %v1843, %v1841
        %v1878 = vpack.c.b16 %v1844, %v1842
        %v1879 = vpack.c.b16 %v1847, %v1845
        %v1880 = vpack.c.b16 %v1848, %v1846
        %1913 = vmatprep.subr.bf16.mxu0 %v1864
        %1914 = vmatpush1.bf16.msra.mxu0 %v1863
        %1915 = vmatprep.subr.bf16.mxu0 %v1862
        %1916 = vmatpush1.bf16.msra.mxu0 %v1861
        %1917 = vmatprep.subr.bf16.mxu0 %v1860
        %1918 = vmatpush1.bf16.msra.mxu0 %v1859
        %1919 = vmatprep.subr.bf16.mxu0 %v1858
        %1920 = vmatpush1.bf16.msra.mxu0 %v1857
        %1921 = vmatprep.subr.bf16.mxu0 %v1856
        %1922 = vmatpush1.bf16.msra.mxu0 %v1855
        %1923 = vmatprep.subr.bf16.mxu0 %v1854
        %1924 = vmatpush1.bf16.msra.mxu0 %v1853
        %1925 = vmatprep.subr.bf16.mxu0 %v1852
        %1926 = vmatpush1.bf16.msra.mxu0 %v1851
        %1927 = vmatprep.subr.bf16.mxu0 %v1850
        %1928 = vmatpush1.bf16.msra.mxu0 %v1849
        %1929 = vmatprep.subr.bf16.mxu0 %v1880
        %1930 = vmatpush2.bf16.msra.mxu0 %v1879
        %1931 = vmatprep.subr.bf16.mxu0 %v1878
        %1932 = vmatpush2.bf16.msra.mxu0 %v1877
        %1933 = vmatprep.subr.bf16.mxu0 %v1876
        %1934 = vmatpush2.bf16.msra.mxu0 %v1875
        %1935 = vmatprep.subr.bf16.mxu0 %v1874
        %1936 = vmatpush2.bf16.msra.mxu0 %v1873
        %1937 = vmatprep.subr.bf16.mxu0 %v1872
        %1938 = vmatpush2.bf16.msra.mxu0 %v1871
        %1939 = vmatprep.subr.bf16.mxu0 %v1870
        %1940 = vmatpush2.bf16.msra.mxu0 %v1869
        %1941 = vmatprep.subr.bf16.mxu0 %v1868
        %1942 = vmatpush2.bf16.msra.mxu0 %v1867
        %1943 = vmatprep.subr.bf16.mxu0 %v1866
        %1944 = vmatpush2.bf16.msra.mxu0 %v1865
        %1945 = vmatprep.mubr.bf16.mxu0 %v1720
        %1946 = vmatmul.mubr.bf16.gmra.mxu0 %v1719
        %v1947 = vpop.f32.mrf.mxu0
        %v1948 = vadd.f32 0.0, %v1947
        %v1949 = vpop.f32.mrf.mxu0
        %v1950 = vadd.f32 0.0, %v1949
        %v1951 = vpop.f32.mrf.mxu0
        %v1952 = vpop.f32.mrf.mxu0
        %1953 = vdwg.mxu0
        %v1954 = vmax.f32 %v1948, 1e-24
        %v1955 = vmax.f32 %v1950, 1e-24
        %v1956 = vrsqrt.pop %v1954
        %v1957 = vrsqrt.pop %v1955
        %v1958 = vmul.f32 %v1715, %v1956
        %v1959 = vmul.f32 %v1716, %v1957
        %v1960 = vpack.c.bf16 %v1958, %v1958
        %v1961 = vpack.c.bf16 %v1959, %v1959
        %v1962 = vld [vmem:[#allocation12] sm:$0xff]
        %v1963 = vld [vmem:[#allocation12 + $0x8] sm:$0xff]
        %v1964 = vld [vmem:[#allocation12 + $0x10] sm:$0xff]
        %v1965 = vld [vmem:[#allocation12 + $0x18] sm:$0xff]
        %v1966 = vld [vmem:[#allocation12 + $0x20] sm:$0xff]
        %v1967 = vld [vmem:[#allocation12 + $0x28] sm:$0xff]
        %v1968 = vld [vmem:[#allocation12 + $0x30] sm:$0xff]
        %v1969 = vld [vmem:[#allocation12 + $0x38] sm:$0xff]
        %v1970 = vld [vmem:[#allocation12 + $0x40] sm:$0xff]
        %v1971 = vld [vmem:[#allocation12 + $0x48] sm:$0xff]
        %v1972 = vld [vmem:[#allocation12 + $0x50] sm:$0xff]
        %v1973 = vld [vmem:[#allocation12 + $0x58] sm:$0xff]
        %v1974 = vld [vmem:[#allocation12 + $0x60] sm:$0xff]
        %v1975 = vld [vmem:[#allocation12 + $0x68] sm:$0xff]
        %v1976 = vld [vmem:[#allocation12 + $0x70] sm:$0xff]
        %v1977 = vld [vmem:[#allocation12 + $0x78] sm:$0xff]
        %v1978 = vld [vmem:[#allocation12 + $0x80] sm:$0xff]
        %v1979 = vld [vmem:[#allocation12 + $0x88] sm:$0xff]
        %v1980 = vld [vmem:[#allocation12 + $0x90] sm:$0xff]
        %v1981 = vld [vmem:[#allocation12 + $0x98] sm:$0xff]
        %v1982 = vld [vmem:[#allocation12 + $0xa0] sm:$0xff]
        %v1983 = vld [vmem:[#allocation12 + $0xa8] sm:$0xff]
        %v1984 = vld [vmem:[#allocation12 + $0xb0] sm:$0xff]
        %v1985 = vld [vmem:[#allocation12 + $0xb8] sm:$0xff]
        %v1986 = vld [vmem:[#allocation12 + $0xc0] sm:$0xff]
        %v1987 = vld [vmem:[#allocation12 + $0xc8] sm:$0xff]
        %v1988 = vld [vmem:[#allocation12 + $0xd0] sm:$0xff]
        %v1989 = vld [vmem:[#allocation12 + $0xd8] sm:$0xff]
        %v1990 = vld [vmem:[#allocation12 + $0xe0] sm:$0xff]
        %v1991 = vld [vmem:[#allocation12 + $0xe8] sm:$0xff]
        %v1992 = vld [vmem:[#allocation12 + $0xf0] sm:$0xff]
        %v1993 = vld [vmem:[#allocation12 + $0xf8] sm:$0xff]
        %v1994 = vld [vmem:[#allocation12 + $0x100] sm:$0xff]
        %v1995 = vld [vmem:[#allocation12 + $0x108] sm:$0xff]
        %v1996 = vld [vmem:[#allocation12 + $0x110] sm:$0xff]
        %v1997 = vld [vmem:[#allocation12 + $0x118] sm:$0xff]
        %v1998 = vld [vmem:[#allocation12 + $0x120] sm:$0xff]
        %v1999 = vld [vmem:[#allocation12 + $0x128] sm:$0xff]
        %v2000 = vld [vmem:[#allocation12 + $0x130] sm:$0xff]
        %v2001 = vld [vmem:[#allocation12 + $0x138] sm:$0xff]
        %v2002 = vld [vmem:[#allocation12 + $0x140] sm:$0xff]
        %v2003 = vld [vmem:[#allocation12 + $0x148] sm:$0xff]
        %v2004 = vld [vmem:[#allocation12 + $0x150] sm:$0xff]
        %v2005 = vld [vmem:[#allocation12 + $0x158] sm:$0xff]
        %v2006 = vld [vmem:[#allocation12 + $0x160] sm:$0xff]
        %v2007 = vld [vmem:[#allocation12 + $0x168] sm:$0xff]
        %v2008 = vld [vmem:[#allocation12 + $0x170] sm:$0xff]
        %v2009 = vld [vmem:[#allocation12 + $0x178] sm:$0xff]
        %v2010 = vld [vmem:[#allocation12 + $0x180] sm:$0xff]
        %v2011 = vld [vmem:[#allocation12 + $0x188] sm:$0xff]
        %v2012 = vld [vmem:[#allocation12 + $0x190] sm:$0xff]
        %v2013 = vld [vmem:[#allocation12 + $0x198] sm:$0xff]
        %v2014 = vld [vmem:[#allocation12 + $0x1a0] sm:$0xff]
        %v2015 = vld [vmem:[#allocation12 + $0x1a8] sm:$0xff]
        %v2016 = vld [vmem:[#allocation12 + $0x1b0] sm:$0xff]
        %v2017 = vld [vmem:[#allocation12 + $0x1b8] sm:$0xff]
        %v2018 = vld [vmem:[#allocation12 + $0x1c0] sm:$0xff]
        %v2019 = vld [vmem:[#allocation12 + $0x1c8] sm:$0xff]
        %v2020 = vld [vmem:[#allocation12 + $0x1d0] sm:$0xff]
        %v2021 = vld [vmem:[#allocation12 + $0x1d8] sm:$0xff]
        %v2022 = vld [vmem:[#allocation12 + $0x1e0] sm:$0xff]
        %v2023 = vld [vmem:[#allocation12 + $0x1e8] sm:$0xff]
        %v2024 = vld [vmem:[#allocation12 + $0x1f0] sm:$0xff]
        %v2025 = vld [vmem:[#allocation12 + $0x1f8] sm:$0xff]
        %v2026 = vld [vmem:[%s11] sm:$0xf]
        %v2028 = vlaneseq
        %v2029 = vshrl.u32 %v2028, 7
        %v2030 = vsub.s32 0, %v2029
        %v2031 = vrot.slane %v2026, %v2030
        %v2032 = vlaneseq
        %v2033 = vshrl.u32 %v2032, 7
        %v2034 = vsub.s32 1, %v2033
        %v2035 = vrot.slane %v2026, %v2034
        %v2036 = vlaneseq
        %v2037 = vshrl.u32 %v2036, 7
        %v2038 = vsub.s32 2, %v2037
        %v2039 = vrot.slane %v2026, %v2038
        %v2040 = vlaneseq
        %v2041 = vshrl.u32 %v2040, 7
        %v2042 = vsub.s32 3, %v2041
        %v2043 = vrot.slane %v2026, %v2042
        %v2112 = vunpack.c.l.b16 %v1962
        %v2113 = vunpack.c.h.b16 %v1962
        %v2114 = vunpack.c.l.b16 %v1963
        %v2115 = vunpack.c.h.b16 %v1963
        %v2116 = vunpack.c.l.b16 %v1964
        %v2117 = vunpack.c.h.b16 %v1964
        %v2118 = vunpack.c.l.b16 %v1965
        %v2119 = vunpack.c.h.b16 %v1965
        %v2120 = vunpack.c.l.b16 %v1966
        %v2121 = vunpack.c.h.b16 %v1966
        %v2122 = vunpack.c.l.b16 %v1967
        %v2123 = vunpack.c.h.b16 %v1967
        %v2124 = vunpack.c.l.b16 %v1968
        %v2125 = vunpack.c.h.b16 %v1968
        %v2126 = vunpack.c.l.b16 %v1969
        %v2127 = vunpack.c.h.b16 %v1969
        %v2128 = vunpack.c.l.b16 %v1970
        %v2129 = vunpack.c.h.b16 %v1970
        %v2130 = vunpack.c.l.b16 %v1971
        %v2131 = vunpack.c.h.b16 %v1971
        %v2132 = vunpack.c.l.b16 %v1972
        %v2133 = vunpack.c.h.b16 %v1972
        %v2134 = vunpack.c.l.b16 %v1973
        %v2135 = vunpack.c.h.b16 %v1973
        %v2136 = vunpack.c.l.b16 %v1974
        %v2137 = vunpack.c.h.b16 %v1974
        %v2138 = vunpack.c.l.b16 %v1975
        %v2139 = vunpack.c.h.b16 %v1975
        %v2140 = vunpack.c.l.b16 %v1976
        %v2141 = vunpack.c.h.b16 %v1976
        %v2142 = vunpack.c.l.b16 %v1977
        %v2143 = vunpack.c.h.b16 %v1977
        %v2144 = vunpack.c.l.b16 %v1978
        %v2145 = vunpack.c.h.b16 %v1978
        %v2146 = vunpack.c.l.b16 %v1979
        %v2147 = vunpack.c.h.b16 %v1979
        %v2148 = vunpack.c.l.b16 %v1980
        %v2149 = vunpack.c.h.b16 %v1980
        %v2150 = vunpack.c.l.b16 %v1981
        %v2151 = vunpack.c.h.b16 %v1981
        %v2152 = vunpack.c.l.b16 %v1982
        %v2153 = vunpack.c.h.b16 %v1982
        %v2154 = vunpack.c.l.b16 %v1983
        %v2155 = vunpack.c.h.b16 %v1983
        %v2156 = vunpack.c.l.b16 %v1984
        %v2157 = vunpack.c.h.b16 %v1984
        %v2158 = vunpack.c.l.b16 %v1985
        %v2159 = vunpack.c.h.b16 %v1985
        %v2160 = vunpack.c.l.b16 %v1986
        %v2161 = vunpack.c.h.b16 %v1986
        %v2162 = vunpack.c.l.b16 %v1987
        %v2163 = vunpack.c.h.b16 %v1987
        %v2164 = vunpack.c.l.b16 %v1988
        %v2165 = vunpack.c.h.b16 %v1988
        %v2166 = vunpack.c.l.b16 %v1989
        %v2167 = vunpack.c.h.b16 %v1989
        %v2168 = vunpack.c.l.b16 %v1990
        %v2169 = vunpack.c.h.b16 %v1990
        %v2170 = vunpack.c.l.b16 %v1991
        %v2171 = vunpack.c.h.b16 %v1991
        %v2172 = vunpack.c.l.b16 %v1992
        %v2173 = vunpack.c.h.b16 %v1992
        %v2174 = vunpack.c.l.b16 %v1993
        %v2175 = vunpack.c.h.b16 %v1993
        %v2176 = vunpack.c.l.b16 %v1994
        %v2177 = vunpack.c.h.b16 %v1994
        %v2178 = vunpack.c.l.b16 %v1995
        %v2179 = vunpack.c.h.b16 %v1995
        %v2180 = vunpack.c.l.b16 %v1996
        %v2181 = vunpack.c.h.b16 %v1996
        %v2182 = vunpack.c.l.b16 %v1997
        %v2183 = vunpack.c.h.b16 %v1997
        %v2184 = vunpack.c.l.b16 %v1998
        %v2185 = vunpack.c.h.b16 %v1998
        %v2186 = vunpack.c.l.b16 %v1999
        %v2187 = vunpack.c.h.b16 %v1999
        %v2188 = vunpack.c.l.b16 %v2000
        %v2189 = vunpack.c.h.b16 %v2000
        %v2190 = vunpack.c.l.b16 %v2001
        %v2191 = vunpack.c.h.b16 %v2001
        %v2192 = vunpack.c.l.b16 %v2002
        %v2193 = vunpack.c.h.b16 %v2002
        %v2194 = vunpack.c.l.b16 %v2003
        %v2195 = vunpack.c.h.b16 %v2003
        %v2196 = vunpack.c.l.b16 %v2004
        %v2197 = vunpack.c.h.b16 %v2004
        %v2198 = vunpack.c.l.b16 %v2005
        %v2199 = vunpack.c.h.b16 %v2005
        %v2200 = vunpack.c.l.b16 %v2006
        %v2201 = vunpack.c.h.b16 %v2006
        %v2202 = vunpack.c.l.b16 %v2007
        %v2203 = vunpack.c.h.b16 %v2007
        %v2204 = vunpack.c.l.b16 %v2008
        %v2205 = vunpack.c.h.b16 %v2008
        %v2206 = vunpack.c.l.b16 %v2009
        %v2207 = vunpack.c.h.b16 %v2009
        %v2208 = vunpack.c.l.b16 %v2010
        %v2209 = vunpack.c.h.b16 %v2010
        %v2210 = vunpack.c.l.b16 %v2011
        %v2211 = vunpack.c.h.b16 %v2011
        %v2212 = vunpack.c.l.b16 %v2012
        %v2213 = vunpack.c.h.b16 %v2012
        %v2214 = vunpack.c.l.b16 %v2013
        %v2215 = vunpack.c.h.b16 %v2013
        %v2216 = vunpack.c.l.b16 %v2014
        %v2217 = vunpack.c.h.b16 %v2014
        %v2218 = vunpack.c.l.b16 %v2015
        %v2219 = vunpack.c.h.b16 %v2015
        %v2220 = vunpack.c.l.b16 %v2016
        %v2221 = vunpack.c.h.b16 %v2016
        %v2222 = vunpack.c.l.b16 %v2017
        %v2223 = vunpack.c.h.b16 %v2017
        %v2224 = vunpack.c.l.b16 %v2018
        %v2225 = vunpack.c.h.b16 %v2018
        %v2226 = vunpack.c.l.b16 %v2019
        %v2227 = vunpack.c.h.b16 %v2019
        %v2228 = vunpack.c.l.b16 %v2020
        %v2229 = vunpack.c.h.b16 %v2020
        %v2230 = vunpack.c.l.b16 %v2021
        %v2231 = vunpack.c.h.b16 %v2021
        %v2232 = vunpack.c.l.b16 %v2022
        %v2233 = vunpack.c.h.b16 %v2022
        %v2234 = vunpack.c.l.b16 %v2023
        %v2235 = vunpack.c.h.b16 %v2023
        %v2236 = vunpack.c.l.b16 %v2024
        %v2237 = vunpack.c.h.b16 %v2024
        %v2238 = vunpack.c.l.b16 %v2025
        %v2239 = vunpack.c.h.b16 %v2025
        %v2240 = vpack.c.b16 %v2116, %v2112
        %v2241 = vpack.c.b16 %v2117, %v2113
        %v2242 = vpack.c.b16 %v2118, %v2114
        %v2243 = vpack.c.b16 %v2119, %v2115
        %v2244 = vpack.c.b16 %v2124, %v2120
        %v2245 = vpack.c.b16 %v2125, %v2121
        %v2246 = vpack.c.b16 %v2126, %v2122
        %v2247 = vpack.c.b16 %v2127, %v2123
        %v2248 = vpack.c.b16 %v2132, %v2128
        %v2249 = vpack.c.b16 %v2133, %v2129
        %v2250 = vpack.c.b16 %v2134, %v2130
        %v2251 = vpack.c.b16 %v2135, %v2131
        %v2252 = vpack.c.b16 %v2140, %v2136
        %v2253 = vpack.c.b16 %v2141, %v2137
        %v2254 = vpack.c.b16 %v2142, %v2138
        %v2255 = vpack.c.b16 %v2143, %v2139
        %v2256 = vpack.c.b16 %v2148, %v2144
        %v2257 = vpack.c.b16 %v2149, %v2145
        %v2258 = vpack.c.b16 %v2150, %v2146
        %v2259 = vpack.c.b16 %v2151, %v2147
        %v2260 = vpack.c.b16 %v2156, %v2152
        %v2261 = vpack.c.b16 %v2157, %v2153
        %v2262 = vpack.c.b16 %v2158, %v2154
        %v2263 = vpack.c.b16 %v2159, %v2155
        %v2264 = vpack.c.b16 %v2164, %v2160
        %v2265 = vpack.c.b16 %v2165, %v2161
        %v2266 = vpack.c.b16 %v2166, %v2162
        %v2267 = vpack.c.b16 %v2167, %v2163
        %v2268 = vpack.c.b16 %v2172, %v2168
        %v2269 = vpack.c.b16 %v2173, %v2169
        %v2270 = vpack.c.b16 %v2174, %v2170
        %v2271 = vpack.c.b16 %v2175, %v2171
        %v2272 = vpack.c.b16 %v2180, %v2176
        %v2273 = vpack.c.b16 %v2181, %v2177
        %v2274 = vpack.c.b16 %v2182, %v2178
        %v2275 = vpack.c.b16 %v2183, %v2179
        %v2276 = vpack.c.b16 %v2188, %v2184
        %v2277 = vpack.c.b16 %v2189, %v2185
        %v2278 = vpack.c.b16 %v2190, %v2186
        %v2279 = vpack.c.b16 %v2191, %v2187
        %v2280 = vpack.c.b16 %v2196, %v2192
        %v2281 = vpack.c.b16 %v2197, %v2193
        %v2282 = vpack.c.b16 %v2198, %v2194
        %v2283 = vpack.c.b16 %v2199, %v2195
        %v2284 = vpack.c.b16 %v2204, %v2200
        %v2285 = vpack.c.b16 %v2205, %v2201
        %v2286 = vpack.c.b16 %v2206, %v2202
        %v2287 = vpack.c.b16 %v2207, %v2203
        %v2288 = vpack.c.b16 %v2212, %v2208
        %v2289 = vpack.c.b16 %v2213, %v2209
        %v2290 = vpack.c.b16 %v2214, %v2210
        %v2291 = vpack.c.b16 %v2215, %v2211
        %v2292 = vpack.c.b16 %v2220, %v2216
        %v2293 = vpack.c.b16 %v2221, %v2217
        %v2294 = vpack.c.b16 %v2222, %v2218
        %v2295 = vpack.c.b16 %v2223, %v2219
        %v2296 = vpack.c.b16 %v2228, %v2224
        %v2297 = vpack.c.b16 %v2229, %v2225
        %v2298 = vpack.c.b16 %v2230, %v2226
        %v2299 = vpack.c.b16 %v2231, %v2227
        %v2300 = vpack.c.b16 %v2236, %v2232
        %v2301 = vpack.c.b16 %v2237, %v2233
        %v2302 = vpack.c.b16 %v2238, %v2234
        %v2303 = vpack.c.b16 %v2239, %v2235
        %2368 = vmatprep.subr.bf16.mxu0 %v2269
        %2369 = vmatpush1.bf16.msra.mxu0 %v2268
        %2370 = vmatprep.subr.bf16.mxu0 %v2265
        %2371 = vmatpush1.bf16.msra.mxu0 %v2264
        %2372 = vmatprep.subr.bf16.mxu0 %v2261
        %2373 = vmatpush1.bf16.msra.mxu0 %v2260
        %2374 = vmatprep.subr.bf16.mxu0 %v2257
        %2375 = vmatpush1.bf16.msra.mxu0 %v2256
        %2376 = vmatprep.subr.bf16.mxu0 %v2253
        %2377 = vmatpush1.bf16.msra.mxu0 %v2252
        %2378 = vmatprep.subr.bf16.mxu0 %v2249
        %2379 = vmatpush1.bf16.msra.mxu0 %v2248
        %2380 = vmatprep.subr.bf16.mxu0 %v2245
        %2381 = vmatpush1.bf16.msra.mxu0 %v2244
        %2382 = vmatprep.subr.bf16.mxu0 %v2241
        %2383 = vmatpush1.bf16.msra.mxu0 %v2240
        %2384 = vmatprep.subr.bf16.mxu0 %v2301
        %2385 = vmatpush2.bf16.msra.mxu0 %v2300
        %2386 = vmatprep.subr.bf16.mxu0 %v2297
        %2387 = vmatpush2.bf16.msra.mxu0 %v2296
        %2388 = vmatprep.subr.bf16.mxu0 %v2293
        %2389 = vmatpush2.bf16.msra.mxu0 %v2292
        %2390 = vmatprep.subr.bf16.mxu0 %v2289
        %2391 = vmatpush2.bf16.msra.mxu0 %v2288
        %2392 = vmatprep.subr.bf16.mxu0 %v2285
        %2393 = vmatpush2.bf16.msra.mxu0 %v2284
        %2394 = vmatprep.subr.bf16.mxu0 %v2281
        %2395 = vmatpush2.bf16.msra.mxu0 %v2280
        %2396 = vmatprep.subr.bf16.mxu0 %v2277
        %2397 = vmatpush2.bf16.msra.mxu0 %v2276
        %2398 = vmatprep.subr.bf16.mxu0 %v2273
        %2399 = vmatpush2.bf16.msra.mxu0 %v2272
        %2400 = vmatprep.mubr.bf16.mxu0 %v1961
        %2401 = vmatmul.mubr.bf16.gmra.mxu0 %v1960
        %v2402 = vpop.f32.mrf.mxu0
        %v2403 = vadd.f32 %v2031, %v2402
        %v2404 = vpop.f32.mrf.mxu0
        %v2405 = vadd.f32 %v2035, %v2404
        %v2406 = vpop.f32.mrf.mxu0
        %v2407 = vpop.f32.mrf.mxu0
        %2408 = vdwg.mxu0
        %2409 = vmatprep.subr.bf16.mxu0 %v2271
        %2410 = vmatpush1.bf16.msra.mxu0 %v2270
        %2411 = vmatprep.subr.bf16.mxu0 %v2267
        %2412 = vmatpush1.bf16.msra.mxu0 %v2266
        %2413 = vmatprep.subr.bf16.mxu0 %v2263
        %2414 = vmatpush1.bf16.msra.mxu0 %v2262
        %2415 = vmatprep.subr.bf16.mxu0 %v2259
        %2416 = vmatpush1.bf16.msra.mxu0 %v2258
        %2417 = vmatprep.subr.bf16.mxu0 %v2255
        %2418 = vmatpush1.bf16.msra.mxu0 %v2254
        %2419 = vmatprep.subr.bf16.mxu0 %v2251
        %2420 = vmatpush1.bf16.msra.mxu0 %v2250
        %2421 = vmatprep.subr.bf16.mxu0 %v2247
        %2422 = vmatpush1.bf16.msra.mxu0 %v2246
        %2423 = vmatprep.subr.bf16.mxu0 %v2243
        %2424 = vmatpush1.bf16.msra.mxu0 %v2242
        %2425 = vmatprep.subr.bf16.mxu0 %v2303
        %2426 = vmatpush2.bf16.msra.mxu0 %v2302
        %2427 = vmatprep.subr.bf16.mxu0 %v2299
        %2428 = vmatpush2.bf16.msra.mxu0 %v2298
        %2429 = vmatprep.subr.bf16.mxu0 %v2295
        %2430 = vmatpush2.bf16.msra.mxu0 %v2294
        %2431 = vmatprep.subr.bf16.mxu0 %v2291
        %2432 = vmatpush2.bf16.msra.mxu0 %v2290
        %2433 = vmatprep.subr.bf16.mxu0 %v2287
        %2434 = vmatpush2.bf16.msra.mxu0 %v2286
        %2435 = vmatprep.subr.bf16.mxu0 %v2283
        %2436 = vmatpush2.bf16.msra.mxu0 %v2282
        %2437 = vmatprep.subr.bf16.mxu0 %v2279
        %2438 = vmatpush2.bf16.msra.mxu0 %v2278
        %2439 = vmatprep.subr.bf16.mxu0 %v2275
        %2440 = vmatpush2.bf16.msra.mxu0 %v2274
        %2441 = vmatprep.mubr.bf16.mxu0 %v1961
        %2442 = vmatmul.mubr.bf16.gmra.mxu0 %v1960
        %v2443 = vpop.f32.mrf.mxu0
        %v2444 = vadd.f32 %v2039, %v2443
        %v2445 = vpop.f32.mrf.mxu0
        %v2446 = vadd.f32 %v2043, %v2445
        %v2447 = vpop.f32.mrf.mxu0
        %v2448 = vpop.f32.mrf.mxu0
        %2449 = vdwg.mxu0
        %vm2450 = vcmp.gt.f32.partialorder %v2403, 0.0
        %vm2451 = vcmp.gt.f32.partialorder %v2405, 0.0
        %vm2452 = vcmp.gt.f32.partialorder %v2444, 0.0
        %vm2453 = vcmp.gt.f32.partialorder %v2446, 0.0
        %v2454 = vmin.f32 %v2403, 0.0
        %v2455 = vmin.f32 %v2405, 0.0
        %v2456 = vmin.f32 %v2444, 0.0
        %v2457 = vmin.f32 %v2446, 0.0
        %v2458 = vmul.f32 %v2454, 1.442695
        %v2459 = vpow.pop %v2458
        %v2460 = vmul.f32 %v2455, 1.442695
        %v2461 = vpow.pop %v2460
        %v2462 = vmul.f32 %v2456, 1.442695
        %v2463 = vpow.pop %v2462
        %v2464 = vmul.f32 %v2457, 1.442695
        %v2465 = vpow.pop %v2464
        %v2466 = vsub.f32 %v2459, 1.0
        %v2467 = vsub.f32 %v2461, 1.0
        %v2468 = vsub.f32 %v2463, 1.0
        %v2469 = vsub.f32 %v2465, 1.0
        %v2470 = vsel %vm2450, %v2403, %v2466
        %v2471 = vsel %vm2451, %v2405, %v2467
        %v2472 = vsel %vm2452, %v2444, %v2468
        %v2473 = vsel %vm2453, %v2446, %v2469
        %v2474 = vpack.c.bf16 %v2470, %v2470
        %v2475 = vpack.c.bf16 %v2471, %v2471
        %v2476 = vpack.c.bf16 %v2472, %v2472
        %v2477 = vpack.c.bf16 %v2473, %v2473
        %v2478 = vld [vmem:[#allocation13] sm:$0xff]
        %v2479 = vld [vmem:[#allocation13 + $0x8] sm:$0xff]
        %v2480 = vld [vmem:[#allocation13 + $0x10] sm:$0xff]
        %v2481 = vld [vmem:[#allocation13 + $0x18] sm:$0xff]
        %v2482 = vld [vmem:[#allocation13 + $0x20] sm:$0xff]
        %v2483 = vld [vmem:[#allocation13 + $0x28] sm:$0xff]
        %v2484 = vld [vmem:[#allocation13 + $0x30] sm:$0xff]
        %v2485 = vld [vmem:[#allocation13 + $0x38] sm:$0xff]
        %v2486 = vld [vmem:[#allocation13 + $0x40] sm:$0xff]
        %v2487 = vld [vmem:[#allocation13 + $0x48] sm:$0xff]
        %v2488 = vld [vmem:[#allocation13 + $0x50] sm:$0xff]
        %v2489 = vld [vmem:[#allocation13 + $0x58] sm:$0xff]
        %v2490 = vld [vmem:[#allocation13 + $0x60] sm:$0xff]
        %v2491 = vld [vmem:[#allocation13 + $0x68] sm:$0xff]
        %v2492 = vld [vmem:[#allocation13 + $0x70] sm:$0xff]
        %v2493 = vld [vmem:[#allocation13 + $0x78] sm:$0xff]
        %v2494 = vld [vmem:[#allocation13 + $0x80] sm:$0xff]
        %v2495 = vld [vmem:[#allocation13 + $0x88] sm:$0xff]
        %v2496 = vld [vmem:[#allocation13 + $0x90] sm:$0xff]
        %v2497 = vld [vmem:[#allocation13 + $0x98] sm:$0xff]
        %v2498 = vld [vmem:[#allocation13 + $0xa0] sm:$0xff]
        %v2499 = vld [vmem:[#allocation13 + $0xa8] sm:$0xff]
        %v2500 = vld [vmem:[#allocation13 + $0xb0] sm:$0xff]
        %v2501 = vld [vmem:[#allocation13 + $0xb8] sm:$0xff]
        %v2502 = vld [vmem:[#allocation13 + $0xc0] sm:$0xff]
        %v2503 = vld [vmem:[#allocation13 + $0xc8] sm:$0xff]
        %v2504 = vld [vmem:[#allocation13 + $0xd0] sm:$0xff]
        %v2505 = vld [vmem:[#allocation13 + $0xd8] sm:$0xff]
        %v2506 = vld [vmem:[#allocation13 + $0xe0] sm:$0xff]
        %v2507 = vld [vmem:[#allocation13 + $0xe8] sm:$0xff]
        %v2508 = vld [vmem:[#allocation13 + $0xf0] sm:$0xff]
        %v2509 = vld [vmem:[#allocation13 + $0xf8] sm:$0xff]
        %v2510 = vld [vmem:[#allocation13 + $0x100] sm:$0xff]
        %v2511 = vld [vmem:[#allocation13 + $0x108] sm:$0xff]
        %v2512 = vld [vmem:[#allocation13 + $0x110] sm:$0xff]
        %v2513 = vld [vmem:[#allocation13 + $0x118] sm:$0xff]
        %v2514 = vld [vmem:[#allocation13 + $0x120] sm:$0xff]
        %v2515 = vld [vmem:[#allocation13 + $0x128] sm:$0xff]
        %v2516 = vld [vmem:[#allocation13 + $0x130] sm:$0xff]
        %v2517 = vld [vmem:[#allocation13 + $0x138] sm:$0xff]
        %v2518 = vld [vmem:[#allocation13 + $0x140] sm:$0xff]
        %v2519 = vld [vmem:[#allocation13 + $0x148] sm:$0xff]
        %v2520 = vld [vmem:[#allocation13 + $0x150] sm:$0xff]
        %v2521 = vld [vmem:[#allocation13 + $0x158] sm:$0xff]
        %v2522 = vld [vmem:[#allocation13 + $0x160] sm:$0xff]
        %v2523 = vld [vmem:[#allocation13 + $0x168] sm:$0xff]
        %v2524 = vld [vmem:[#allocation13 + $0x170] sm:$0xff]
        %v2525 = vld [vmem:[#allocation13 + $0x178] sm:$0xff]
        %v2526 = vld [vmem:[#allocation13 + $0x180] sm:$0xff]
        %v2527 = vld [vmem:[#allocation13 + $0x188] sm:$0xff]
        %v2528 = vld [vmem:[#allocation13 + $0x190] sm:$0xff]
        %v2529 = vld [vmem:[#allocation13 + $0x198] sm:$0xff]
        %v2530 = vld [vmem:[#allocation13 + $0x1a0] sm:$0xff]
        %v2531 = vld [vmem:[#allocation13 + $0x1a8] sm:$0xff]
        %v2532 = vld [vmem:[#allocation13 + $0x1b0] sm:$0xff]
        %v2533 = vld [vmem:[#allocation13 + $0x1b8] sm:$0xff]
        %v2534 = vld [vmem:[#allocation13 + $0x1c0] sm:$0xff]
        %v2535 = vld [vmem:[#allocation13 + $0x1c8] sm:$0xff]
        %v2536 = vld [vmem:[#allocation13 + $0x1d0] sm:$0xff]
        %v2537 = vld [vmem:[#allocation13 + $0x1d8] sm:$0xff]
        %v2538 = vld [vmem:[#allocation13 + $0x1e0] sm:$0xff]
        %v2539 = vld [vmem:[#allocation13 + $0x1e8] sm:$0xff]
        %v2540 = vld [vmem:[#allocation13 + $0x1f0] sm:$0xff]
        %v2541 = vld [vmem:[#allocation13 + $0x1f8] sm:$0xff]
        %v2542 = vld [vmem:[#allocation2] sm:$0x1]
        %v2544 = vlaneseq
        %v2545 = vshrl.u32 %v2544, 7
        %v2546 = vsub.s32 0, %v2545
        %v2547 = vrot.slane %v2542, %v2546
        %2548 = vset.pattern.permute.xlu0 0
        %2549 = vperm.xlu0 %2548, %v2547
        %v2550 = vpop.permute.xlu0 %2549
        %v2616 = vunpack.c.l.b16 %v2478
        %v2617 = vunpack.c.h.b16 %v2478
        %v2618 = vunpack.c.l.b16 %v2479
        %v2619 = vunpack.c.h.b16 %v2479
        %v2620 = vunpack.c.l.b16 %v2480
        %v2621 = vunpack.c.h.b16 %v2480
        %v2622 = vunpack.c.l.b16 %v2481
        %v2623 = vunpack.c.h.b16 %v2481
        %v2624 = vunpack.c.l.b16 %v2482
        %v2625 = vunpack.c.h.b16 %v2482
        %v2626 = vunpack.c.l.b16 %v2483
        %v2627 = vunpack.c.h.b16 %v2483
        %v2628 = vunpack.c.l.b16 %v2484
        %v2629 = vunpack.c.h.b16 %v2484
        %v2630 = vunpack.c.l.b16 %v2485
        %v2631 = vunpack.c.h.b16 %v2485
        %v2632 = vunpack.c.l.b16 %v2486
        %v2633 = vunpack.c.h.b16 %v2486
        %v2634 = vunpack.c.l.b16 %v2487
        %v2635 = vunpack.c.h.b16 %v2487
        %v2636 = vunpack.c.l.b16 %v2488
        %v2637 = vunpack.c.h.b16 %v2488
        %v2638 = vunpack.c.l.b16 %v2489
        %v2639 = vunpack.c.h.b16 %v2489
        %v2640 = vunpack.c.l.b16 %v2490
        %v2641 = vunpack.c.h.b16 %v2490
        %v2642 = vunpack.c.l.b16 %v2491
        %v2643 = vunpack.c.h.b16 %v2491
        %v2644 = vunpack.c.l.b16 %v2492
        %v2645 = vunpack.c.h.b16 %v2492
        %v2646 = vunpack.c.l.b16 %v2493
        %v2647 = vunpack.c.h.b16 %v2493
        %v2648 = vunpack.c.l.b16 %v2494
        %v2649 = vunpack.c.h.b16 %v2494
        %v2650 = vunpack.c.l.b16 %v2495
        %v2651 = vunpack.c.h.b16 %v2495
        %v2652 = vunpack.c.l.b16 %v2496
        %v2653 = vunpack.c.h.b16 %v2496
        %v2654 = vunpack.c.l.b16 %v2497
        %v2655 = vunpack.c.h.b16 %v2497
        %v2656 = vunpack.c.l.b16 %v2498
        %v2657 = vunpack.c.h.b16 %v2498
        %v2658 = vunpack.c.l.b16 %v2499
        %v2659 = vunpack.c.h.b16 %v2499
        %v2660 = vunpack.c.l.b16 %v2500
        %v2661 = vunpack.c.h.b16 %v2500
        %v2662 = vunpack.c.l.b16 %v2501
        %v2663 = vunpack.c.h.b16 %v2501
        %v2664 = vunpack.c.l.b16 %v2502
        %v2665 = vunpack.c.h.b16 %v2502
        %v2666 = vunpack.c.l.b16 %v2503
        %v2667 = vunpack.c.h.b16 %v2503
        %v2668 = vunpack.c.l.b16 %v2504
        %v2669 = vunpack.c.h.b16 %v2504
        %v2670 = vunpack.c.l.b16 %v2505
        %v2671 = vunpack.c.h.b16 %v2505
        %v2672 = vunpack.c.l.b16 %v2506
        %v2673 = vunpack.c.h.b16 %v2506
        %v2674 = vunpack.c.l.b16 %v2507
        %v2675 = vunpack.c.h.b16 %v2507
        %v2676 = vunpack.c.l.b16 %v2508
        %v2677 = vunpack.c.h.b16 %v2508
        %v2678 = vunpack.c.l.b16 %v2509
        %v2679 = vunpack.c.h.b16 %v2509
        %v2680 = vunpack.c.l.b16 %v2510
        %v2681 = vunpack.c.h.b16 %v2510
        %v2682 = vunpack.c.l.b16 %v2511
        %v2683 = vunpack.c.h.b16 %v2511
        %v2684 = vunpack.c.l.b16 %v2512
        %v2685 = vunpack.c.h.b16 %v2512
        %v2686 = vunpack.c.l.b16 %v2513
        %v2687 = vunpack.c.h.b16 %v2513
        %v2688 = vunpack.c.l.b16 %v2514
        %v2689 = vunpack.c.h.b16 %v2514
        %v2690 = vunpack.c.l.b16 %v2515
        %v2691 = vunpack.c.h.b16 %v2515
        %v2692 = vunpack.c.l.b16 %v2516
        %v2693 = vunpack.c.h.b16 %v2516
        %v2694 = vunpack.c.l.b16 %v2517
        %v2695 = vunpack.c.h.b16 %v2517
        %v2696 = vunpack.c.l.b16 %v2518
        %v2697 = vunpack.c.h.b16 %v2518
        %v2698 = vunpack.c.l.b16 %v2519
        %v2699 = vunpack.c.h.b16 %v2519
        %v2700 = vunpack.c.l.b16 %v2520
        %v2701 = vunpack.c.h.b16 %v2520
        %v2702 = vunpack.c.l.b16 %v2521
        %v2703 = vunpack.c.h.b16 %v2521
        %v2704 = vunpack.c.l.b16 %v2522
        %v2705 = vunpack.c.h.b16 %v2522
        %v2706 = vunpack.c.l.b16 %v2523
        %v2707 = vunpack.c.h.b16 %v2523
        %v2708 = vunpack.c.l.b16 %v2524
        %v2709 = vunpack.c.h.b16 %v2524
        %v2710 = vunpack.c.l.b16 %v2525
        %v2711 = vunpack.c.h.b16 %v2525
        %v2712 = vunpack.c.l.b16 %v2526
        %v2713 = vunpack.c.h.b16 %v2526
        %v2714 = vunpack.c.l.b16 %v2527
        %v2715 = vunpack.c.h.b16 %v2527
        %v2716 = vunpack.c.l.b16 %v2528
        %v2717 = vunpack.c.h.b16 %v2528
        %v2718 = vunpack.c.l.b16 %v2529
        %v2719 = vunpack.c.h.b16 %v2529
        %v2720 = vunpack.c.l.b16 %v2530
        %v2721 = vunpack.c.h.b16 %v2530
        %v2722 = vunpack.c.l.b16 %v2531
        %v2723 = vunpack.c.h.b16 %v2531
        %v2724 = vunpack.c.l.b16 %v2532
        %v2725 = vunpack.c.h.b16 %v2532
        %v2726 = vunpack.c.l.b16 %v2533
        %v2727 = vunpack.c.h.b16 %v2533
        %v2728 = vunpack.c.l.b16 %v2534
        %v2729 = vunpack.c.h.b16 %v2534
        %v2730 = vunpack.c.l.b16 %v2535
        %v2731 = vunpack.c.h.b16 %v2535
        %v2732 = vunpack.c.l.b16 %v2536
        %v2733 = vunpack.c.h.b16 %v2536
        %v2734 = vunpack.c.l.b16 %v2537
        %v2735 = vunpack.c.h.b16 %v2537
        %v2736 = vunpack.c.l.b16 %v2538
        %v2737 = vunpack.c.h.b16 %v2538
        %v2738 = vunpack.c.l.b16 %v2539
        %v2739 = vunpack.c.h.b16 %v2539
        %v2740 = vunpack.c.l.b16 %v2540
        %v2741 = vunpack.c.h.b16 %v2540
        %v2742 = vunpack.c.l.b16 %v2541
        %v2743 = vunpack.c.h.b16 %v2541
        %v2744 = vpack.c.b16 %v2618, %v2616
        %v2745 = vpack.c.b16 %v2619, %v2617
        %v2746 = vpack.c.b16 %v2622, %v2620
        %v2747 = vpack.c.b16 %v2623, %v2621
        %v2748 = vpack.c.b16 %v2626, %v2624
        %v2749 = vpack.c.b16 %v2627, %v2625
        %v2750 = vpack.c.b16 %v2630, %v2628
        %v2751 = vpack.c.b16 %v2631, %v2629
        %v2752 = vpack.c.b16 %v2634, %v2632
        %v2753 = vpack.c.b16 %v2635, %v2633
        %v2754 = vpack.c.b16 %v2638, %v2636
        %v2755 = vpack.c.b16 %v2639, %v2637
        %v2756 = vpack.c.b16 %v2642, %v2640
        %v2757 = vpack.c.b16 %v2643, %v2641
        %v2758 = vpack.c.b16 %v2646, %v2644
        %v2759 = vpack.c.b16 %v2647, %v2645
        %v2760 = vpack.c.b16 %v2650, %v2648
        %v2761 = vpack.c.b16 %v2651, %v2649
        %v2762 = vpack.c.b16 %v2654, %v2652
        %v2763 = vpack.c.b16 %v2655, %v2653
        %v2764 = vpack.c.b16 %v2658, %v2656
        %v2765 = vpack.c.b16 %v2659, %v2657
        %v2766 = vpack.c.b16 %v2662, %v2660
        %v2767 = vpack.c.b16 %v2663, %v2661
        %v2768 = vpack.c.b16 %v2666, %v2664
        %v2769 = vpack.c.b16 %v2667, %v2665
        %v2770 = vpack.c.b16 %v2670, %v2668
        %v2771 = vpack.c.b16 %v2671, %v2669
        %v2772 = vpack.c.b16 %v2674, %v2672
        %v2773 = vpack.c.b16 %v2675, %v2673
        %v2774 = vpack.c.b16 %v2678, %v2676
        %v2775 = vpack.c.b16 %v2679, %v2677
        %v2776 = vpack.c.b16 %v2682, %v2680
        %v2777 = vpack.c.b16 %v2683, %v2681
        %v2778 = vpack.c.b16 %v2686, %v2684
        %v2779 = vpack.c.b16 %v2687, %v2685
        %v2780 = vpack.c.b16 %v2690, %v2688
        %v2781 = vpack.c.b16 %v2691, %v2689
        %v2782 = vpack.c.b16 %v2694, %v2692
        %v2783 = vpack.c.b16 %v2695, %v2693
        %v2784 = vpack.c.b16 %v2698, %v2696
        %v2785 = vpack.c.b16 %v2699, %v2697
        %v2786 = vpack.c.b16 %v2702, %v2700
        %v2787 = vpack.c.b16 %v2703, %v2701
        %v2788 = vpack.c.b16 %v2706, %v2704
        %v2789 = vpack.c.b16 %v2707, %v2705
        %v2790 = vpack.c.b16 %v2710, %v2708
        %v2791 = vpack.c.b16 %v2711, %v2709
        %v2792 = vpack.c.b16 %v2714, %v2712
        %v2793 = vpack.c.b16 %v2715, %v2713
        %v2794 = vpack.c.b16 %v2718, %v2716
        %v2795 = vpack.c.b16 %v2719, %v2717
        %v2796 = vpack.c.b16 %v2722, %v2720
        %v2797 = vpack.c.b16 %v2723, %v2721
        %v2798 = vpack.c.b16 %v2726, %v2724
        %v2799 = vpack.c.b16 %v2727, %v2725
        %v2800 = vpack.c.b16 %v2730, %v2728
        %v2801 = vpack.c.b16 %v2731, %v2729
        %v2802 = vpack.c.b16 %v2734, %v2732
        %v2803 = vpack.c.b16 %v2735, %v2733
        %v2804 = vpack.c.b16 %v2738, %v2736
        %v2805 = vpack.c.b16 %v2739, %v2737
        %v2806 = vpack.c.b16 %v2742, %v2740
        %v2807 = vpack.c.b16 %v2743, %v2741
        %2872 = vmatprep.subr.bf16.mxu0 %v2759
        %2873 = vmatpush1.bf16.msra.mxu0 %v2758
        %2874 = vmatprep.subr.bf16.mxu0 %v2757
        %2875 = vmatpush1.bf16.msra.mxu0 %v2756
        %2876 = vmatprep.subr.bf16.mxu0 %v2755
        %2877 = vmatpush1.bf16.msra.mxu0 %v2754
        %2878 = vmatprep.subr.bf16.mxu0 %v2753
        %2879 = vmatpush1.bf16.msra.mxu0 %v2752
        %2880 = vmatprep.subr.bf16.mxu0 %v2751
        %2881 = vmatpush1.bf16.msra.mxu0 %v2750
        %2882 = vmatprep.subr.bf16.mxu0 %v2749
        %2883 = vmatpush1.bf16.msra.mxu0 %v2748
        %2884 = vmatprep.subr.bf16.mxu0 %v2747
        %2885 = vmatpush1.bf16.msra.mxu0 %v2746
        %2886 = vmatprep.subr.bf16.mxu0 %v2745
        %2887 = vmatpush1.bf16.msra.mxu0 %v2744
        %2888 = vmatprep.subr.bf16.mxu0 %v2775
        %2889 = vmatpush2.bf16.msra.mxu0 %v2774
        %2890 = vmatprep.subr.bf16.mxu0 %v2773
        %2891 = vmatpush2.bf16.msra.mxu0 %v2772
        %2892 = vmatprep.subr.bf16.mxu0 %v2771
        %2893 = vmatpush2.bf16.msra.mxu0 %v2770
        %2894 = vmatprep.subr.bf16.mxu0 %v2769
        %2895 = vmatpush2.bf16.msra.mxu0 %v2768
        %2896 = vmatprep.subr.bf16.mxu0 %v2767
        %2897 = vmatpush2.bf16.msra.mxu0 %v2766
        %2898 = vmatprep.subr.bf16.mxu0 %v2765
        %2899 = vmatpush2.bf16.msra.mxu0 %v2764
        %2900 = vmatprep.subr.bf16.mxu0 %v2763
        %2901 = vmatpush2.bf16.msra.mxu0 %v2762
        %2902 = vmatprep.subr.bf16.mxu0 %v2761
        %2903 = vmatpush2.bf16.msra.mxu0 %v2760
        %2904 = vmatprep.mubr.bf16.mxu0 %v2475
        %2905 = vmatmul.mubr.bf16.gmra.mxu0 %v2474
        %v2906 = vpop.f32.mrf.mxu0
        %v2907 = vadd.f32 %v2550, %v2906
        %v2908 = vpop.f32.mrf.mxu0
        %v2909 = vadd.f32 %v2550, %v2908
        %v2910 = vpop.f32.mrf.mxu0
        %v2911 = vpop.f32.mrf.mxu0
        %2912 = vdwg.mxu0
        %2913 = vmatprep.subr.bf16.mxu0 %v2791
        %2914 = vmatpush1.bf16.msra.mxu0 %v2790
        %2915 = vmatprep.subr.bf16.mxu0 %v2789
        %2916 = vmatpush1.bf16.msra.mxu0 %v2788
        %2917 = vmatprep.subr.bf16.mxu0 %v2787
        %2918 = vmatpush1.bf16.msra.mxu0 %v2786
        %2919 = vmatprep.subr.bf16.mxu0 %v2785
        %2920 = vmatpush1.bf16.msra.mxu0 %v2784
        %2921 = vmatprep.subr.bf16.mxu0 %v2783
        %2922 = vmatpush1.bf16.msra.mxu0 %v2782
        %2923 = vmatprep.subr.bf16.mxu0 %v2781
        %2924 = vmatpush1.bf16.msra.mxu0 %v2780
        %2925 = vmatprep.subr.bf16.mxu0 %v2779
        %2926 = vmatpush1.bf16.msra.mxu0 %v2778
        %2927 = vmatprep.subr.bf16.mxu0 %v2777
        %2928 = vmatpush1.bf16.msra.mxu0 %v2776
        %2929 = vmatprep.subr.bf16.mxu0 %v2807
        %2930 = vmatpush2.bf16.msra.mxu0 %v2806
        %2931 = vmatprep.subr.bf16.mxu0 %v2805
        %2932 = vmatpush2.bf16.msra.mxu0 %v2804
        %2933 = vmatprep.subr.bf16.mxu0 %v2803
        %2934 = vmatpush2.bf16.msra.mxu0 %v2802
        %2935 = vmatprep.subr.bf16.mxu0 %v2801
        %2936 = vmatpush2.bf16.msra.mxu0 %v2800
        %2937 = vmatprep.subr.bf16.mxu0 %v2799
        %2938 = vmatpush2.bf16.msra.mxu0 %v2798
        %2939 = vmatprep.subr.bf16.mxu0 %v2797
        %2940 = vmatpush2.bf16.msra.mxu0 %v2796
        %2941 = vmatprep.subr.bf16.mxu0 %v2795
        %2942 = vmatpush2.bf16.msra.mxu0 %v2794
        %2943 = vmatprep.subr.bf16.mxu0 %v2793
        %2944 = vmatpush2.bf16.msra.mxu0 %v2792
        %2945 = vmatprep.mubr.bf16.mxu0 %v2477
        %2946 = vmatmul.mubr.bf16.gmra.mxu0 %v2476
        %v2947 = vpop.f32.mrf.mxu0
        %v2948 = vadd.f32 %v2907, %v2947
        %v2949 = vpop.f32.mrf.mxu0
        %v2950 = vadd.f32 %v2909, %v2949
        %v2951 = vpop.f32.mrf.mxu0
        %v2952 = vpop.f32.mrf.mxu0
        %2953 = vdwg.mxu0
        %vm2954 = vcmp.gt.f32.partialorder %v2948, 0.0
        %vm2955 = vcmp.gt.f32.partialorder %v2950, 0.0
        %v2956 = vmin.f32 %v2948, 0.0
        %v2957 = vmin.f32 %v2950, 0.0
        %v2958 = vmul.f32 %v2956, 1.442695
        %v2959 = vpow.pop %v2958
        %v2960 = vmul.f32 %v2957, 1.442695
        %v2961 = vpow.pop %v2960
        %v2962 = vsub.f32 %v2959, 1.0
        %v2963 = vsub.f32 %v2961, 1.0
        %v2964 = vsel %vm2954, %v2948, %v2962
        %v2965 = vsel %vm2955, %v2950, %v2963
        %v2966 = vsel %vm898, %v2964, -1e+30
        %v2967 = vsel %vm899, %v2965, -1e+30
        %v2968 = vmax.f32 %v2966, %v2967
        %2969 = vmax.xlane.f32.xlu0 %v2968
        %v2970 = vpop.xlane.xlu0 %2969
        %v2971 = vsub.f32 %v2966, %v2970
        %v2972 = vsub.f32 %v2967, %v2970
        %v2973 = vmul.f32 %v2971, 1.442695
        %v2974 = vpow.pop %v2973
        %v2975 = vmul.f32 %v2972, 1.442695
        %v2976 = vpow.pop %v2975
        %v2977 = vadd.f32 %v2974, %v2976
        %2978 = vadd.xlane.f32.xlu0 %v2977
        %v2979 = vpop.xlane.xlu0 %2978
        %v2980 = vrcp.pop %v2979
        %v2981 = vmul.f32 %v2980, 32.0
        %v2982 = vmul.f32 %v2974, %v2981
        %v2983 = vmul.f32 %v2976, %v2981
        %v2984 = vmul.f32 %v2982, %v1958
        %v2985 = vmul.f32 %v2983, %v1959
        %v2986 = vpack.c.bf16 %v2984, %v2984
        %v2987 = vpack.c.bf16 %v2985, %v2985
        %v2988 = vld [vmem:[%s14] sm:$0xf]
        %v2989 = vld [vmem:[%s14 + $0x4] sm:$0xf]
        %v2990 = vld [vmem:[%s14 + $0x8] sm:$0xf]
        %v2991 = vld [vmem:[%s14 + $0xc] sm:$0xf]
        %v2992 = vld [vmem:[%s14 + $0x10] sm:$0xf]
        %v2993 = vld [vmem:[%s14 + $0x14] sm:$0xf]
        %v2994 = vld [vmem:[%s14 + $0x18] sm:$0xf]
        %v2995 = vld [vmem:[%s14 + $0x1c] sm:$0xf]
        %v2996 = vld [vmem:[%s14 + $0x20] sm:$0xf]
        %v2997 = vld [vmem:[%s14 + $0x24] sm:$0xf]
        %v2998 = vld [vmem:[%s14 + $0x28] sm:$0xf]
        %v2999 = vld [vmem:[%s14 + $0x2c] sm:$0xf]
        %v3000 = vld [vmem:[%s14 + $0x30] sm:$0xf]
        %v3001 = vld [vmem:[%s14 + $0x34] sm:$0xf]
        %v3002 = vld [vmem:[%s14 + $0x38] sm:$0xf]
        %v3003 = vld [vmem:[%s14 + $0x3c] sm:$0xf]
        %v3004 = vld [vmem:[%s14 + $0x40] sm:$0xf]
        %v3005 = vld [vmem:[%s14 + $0x44] sm:$0xf]
        %v3006 = vld [vmem:[%s14 + $0x48] sm:$0xf]
        %v3007 = vld [vmem:[%s14 + $0x4c] sm:$0xf]
        %v3008 = vld [vmem:[%s14 + $0x50] sm:$0xf]
        %v3009 = vld [vmem:[%s14 + $0x54] sm:$0xf]
        %v3010 = vld [vmem:[%s14 + $0x58] sm:$0xf]
        %v3011 = vld [vmem:[%s14 + $0x5c] sm:$0xf]
        %v3012 = vld [vmem:[%s14 + $0x60] sm:$0xf]
        %v3013 = vld [vmem:[%s14 + $0x64] sm:$0xf]
        %v3014 = vld [vmem:[%s14 + $0x68] sm:$0xf]
        %v3015 = vld [vmem:[%s14 + $0x6c] sm:$0xf]
        %v3016 = vld [vmem:[%s14 + $0x70] sm:$0xf]
        %v3017 = vld [vmem:[%s14 + $0x74] sm:$0xf]
        %v3018 = vld [vmem:[%s14 + $0x78] sm:$0xf]
        %v3019 = vld [vmem:[%s14 + $0x7c] sm:$0xf]
        %v3052 = vunpack.c.l.b16 %v2988
        %v3053 = vunpack.c.l.b16 %v2989
        %v3054 = vunpack.c.l.b16 %v2990
        %v3055 = vunpack.c.l.b16 %v2991
        %v3056 = vunpack.c.l.b16 %v2992
        %v3057 = vunpack.c.l.b16 %v2993
        %v3058 = vunpack.c.l.b16 %v2994
        %v3059 = vunpack.c.l.b16 %v2995
        %v3060 = vunpack.c.l.b16 %v2996
        %v3061 = vunpack.c.l.b16 %v2997
        %v3062 = vunpack.c.l.b16 %v2998
        %v3063 = vunpack.c.l.b16 %v2999
        %v3064 = vunpack.c.l.b16 %v3000
        %v3065 = vunpack.c.l.b16 %v3001
        %v3066 = vunpack.c.l.b16 %v3002
        %v3067 = vunpack.c.l.b16 %v3003
        %v3068 = vunpack.c.l.b16 %v3004
        %v3069 = vunpack.c.l.b16 %v3005
        %v3070 = vunpack.c.l.b16 %v3006
        %v3071 = vunpack.c.l.b16 %v3007
        %v3072 = vunpack.c.l.b16 %v3008
        %v3073 = vunpack.c.l.b16 %v3009
        %v3074 = vunpack.c.l.b16 %v3010
        %v3075 = vunpack.c.l.b16 %v3011
        %v3076 = vunpack.c.l.b16 %v3012
        %v3077 = vunpack.c.l.b16 %v3013
        %v3078 = vunpack.c.l.b16 %v3014
        %v3079 = vunpack.c.l.b16 %v3015
        %v3080 = vunpack.c.l.b16 %v3016
        %v3081 = vunpack.c.l.b16 %v3017
        %v3082 = vunpack.c.l.b16 %v3018
        %v3083 = vunpack.c.l.b16 %v3019
        %v3084 = vpack.c.b16 %v3053, %v3052
        %v3085 = vpack.c.b16 %v3055, %v3054
        %v3086 = vpack.c.b16 %v3057, %v3056
        %v3087 = vpack.c.b16 %v3059, %v3058
        %v3088 = vpack.c.b16 %v3061, %v3060
        %v3089 = vpack.c.b16 %v3063, %v3062
        %v3090 = vpack.c.b16 %v3065, %v3064
        %v3091 = vpack.c.b16 %v3067, %v3066
        %v3092 = vpack.c.b16 %v3069, %v3068
        %v3093 = vpack.c.b16 %v3071, %v3070
        %v3094 = vpack.c.b16 %v3073, %v3072
        %v3095 = vpack.c.b16 %v3075, %v3074
        %v3096 = vpack.c.b16 %v3077, %v3076
        %v3097 = vpack.c.b16 %v3079, %v3078
        %v3098 = vpack.c.b16 %v3081, %v3080
        %v3099 = vpack.c.b16 %v3083, %v3082
        %3116 = vmatprep.subr.bf16.mxu0 0
        %3117 = vmatpush1.bf16.msra.mxu0 %v3091
        %3118 = vmatprep.subr.bf16.mxu0 0
        %3119 = vmatpush1.bf16.msra.mxu0 %v3090
        %3120 = vmatprep.subr.bf16.mxu0 0
        %3121 = vmatpush1.bf16.msra.mxu0 %v3089
        %3122 = vmatprep.subr.bf16.mxu0 0
        %3123 = vmatpush1.bf16.msra.mxu0 %v3088
        %3124 = vmatprep.subr.bf16.mxu0 0
        %3125 = vmatpush1.bf16.msra.mxu0 %v3087
        %3126 = vmatprep.subr.bf16.mxu0 0
        %3127 = vmatpush1.bf16.msra.mxu0 %v3086
        %3128 = vmatprep.subr.bf16.mxu0 0
        %3129 = vmatpush1.bf16.msra.mxu0 %v3085
        %3130 = vmatprep.subr.bf16.mxu0 0
        %3131 = vmatpush1.bf16.msra.mxu0 %v3084
        %3132 = vmatprep.subr.bf16.mxu0 0
        %3133 = vmatpush2.bf16.msra.mxu0 %v3099
        %3134 = vmatprep.subr.bf16.mxu0 0
        %3135 = vmatpush2.bf16.msra.mxu0 %v3098
        %3136 = vmatprep.subr.bf16.mxu0 0
        %3137 = vmatpush2.bf16.msra.mxu0 %v3097
        %3138 = vmatprep.subr.bf16.mxu0 0
        %3139 = vmatpush2.bf16.msra.mxu0 %v3096
        %3140 = vmatprep.subr.bf16.mxu0 0
        %3141 = vmatpush2.bf16.msra.mxu0 %v3095
        %3142 = vmatprep.subr.bf16.mxu0 0
        %3143 = vmatpush2.bf16.msra.mxu0 %v3094
        %3144 = vmatprep.subr.bf16.mxu0 0
        %3145 = vmatpush2.bf16.msra.mxu0 %v3093
        %3146 = vmatprep.subr.bf16.mxu0 0
        %3147 = vmatpush2.bf16.msra.mxu0 %v3092
        %3148 = vmatprep.mubr.bf16.mxu0 %v2987
        %3149 = vmatmul.mubr.bf16.gmra.mxu0 %v2986
        %v3150 = vpop.f32.mrf.mxu0
        %v3151 = vadd.f32 0.0, %v3150
        %v3152 = vpop.f32.mrf.mxu0
        %v3153 = vpop.f32.mrf.mxu0
        %v3154 = vpop.f32.mrf.mxu0
        %3155 = vdwg.mxu0
        %v3156 = vpack.c.bf16 %v3151, %v3151
        %v3157 = vld [vmem:[%s15] sm:$0xf]
        %v3158 = vld [vmem:[%s15 + $0x4] sm:$0xf]
        %v3159 = vld [vmem:[%s15 + $0x8] sm:$0xf]
        %v3160 = vld [vmem:[%s15 + $0xc] sm:$0xf]
        %v3161 = vld [vmem:[%s16] sm:$0x1]
        %v3163 = vlaneseq
        %v3164 = vshrl.u32 %v3163, 7
        %v3165 = vsub.s32 0, %v3164
        %v3166 = vrot.slane %v3161, %v3165
        %v3172 = vunpack.c.l.b16 %v3157
        %v3173 = vunpack.c.l.b16 %v3158
        %v3174 = vunpack.c.l.b16 %v3159
        %v3175 = vunpack.c.l.b16 %v3160
        %v3176 = vpack.c.b16 %v3173, %v3172
        %v3177 = vpack.c.b16 %v3175, %v3174
        %vm3180 = vcmask 261120
        %v3182 = vsel %vm3180, %v3156, 0
        %3184 = vmatprep.subr.bf16.mxu0 0
        %3185 = vmatpush1.bf16.msra.mxu0 0
        %3186 = vmatprep.subr.bf16.mxu0 0
        %3187 = vmatpush1.bf16.msra.mxu0 0
        %3188 = vmatprep.subr.bf16.mxu0 0
        %3189 = vmatpush1.bf16.msra.mxu0 0
        %3190 = vmatprep.subr.bf16.mxu0 0
        %3191 = vmatpush1.bf16.msra.mxu0 0
        %3192 = vmatprep.subr.bf16.mxu0 0
        %3193 = vmatpush1.bf16.msra.mxu0 0
        %3194 = vmatprep.subr.bf16.mxu0 0
        %3195 = vmatpush1.bf16.msra.mxu0 0
        %3196 = vmatprep.subr.bf16.mxu0 0
        %3197 = vmatpush1.bf16.msra.mxu0 %v3177
        %3198 = vmatprep.subr.bf16.mxu0 0
        %3199 = vmatpush1.bf16.msra.mxu0 %v3176
        %3200 = vmatprep.subr.bf16.mxu0 0
        %3201 = vmatpush2.bf16.msra.mxu0 0
        %3202 = vmatprep.subr.bf16.mxu0 0
        %3203 = vmatpush2.bf16.msra.mxu0 0
        %3204 = vmatprep.subr.bf16.mxu0 0
        %3205 = vmatpush2.bf16.msra.mxu0 0
        %3206 = vmatprep.subr.bf16.mxu0 0
        %3207 = vmatpush2.bf16.msra.mxu0 0
        %3208 = vmatprep.subr.bf16.mxu0 0
        %3209 = vmatpush2.bf16.msra.mxu0 0
        %3210 = vmatprep.subr.bf16.mxu0 0
        %3211 = vmatpush2.bf16.msra.mxu0 0
        %3212 = vmatprep.subr.bf16.mxu0 0
        %3213 = vmatpush2.bf16.msra.mxu0 0
        %3214 = vmatprep.subr.bf16.mxu0 0
        %3215 = vmatpush2.bf16.msra.mxu0 0
        %3216 = vmatprep.mubr.bf16.mxu0 0
        %3217 = vmatmul.mubr.bf16.gmra.mxu0 %v3182
        %v3218 = vpop.f32.mrf.mxu0
        %v3219 = vadd.f32 %v3166, %v3218
        %v3220 = vpop.f32.mrf.mxu0
        %v3221 = vpop.f32.mrf.mxu0
        %v3222 = vpop.f32.mrf.mxu0
        %3223 = vdwg.mxu0
        %vm3224 = vcmp.gt.f32.partialorder %v3219, 0.0
        %v3225 = vmin.f32 %v3219, 0.0
        %v3226 = vmul.f32 %v3225, 1.442695
        %v3227 = vpow.pop %v3226
        %v3228 = vsub.f32 %v3227, 1.0
        %v3229 = vsel %vm3224, %v3219, %v3228
        %v3230 = vpack.c.bf16 %v3229, %v3229
        %v3231 = vld [vmem:[%s17] sm:$0xf]
        %v3232 = vld [vmem:[%s17 + $0x4] sm:$0xf]
        %v3233 = vld [vmem:[%s17 + $0x8] sm:$0xf]
        %v3234 = vld [vmem:[%s17 + $0xc] sm:$0xf]
        %v3235 = vld [vmem:[%s18] sm:$0x1]
        %v3237 = vlaneseq
        %v3238 = vshrl.u32 %v3237, 7
        %v3239 = vsub.s32 0, %v3238
        %v3240 = vrot.slane %v3235, %v3239
        %v3246 = vunpack.c.l.b16 %v3231
        %v3247 = vunpack.c.l.b16 %v3232
        %v3248 = vunpack.c.l.b16 %v3233
        %v3249 = vunpack.c.l.b16 %v3234
        %v3250 = vpack.c.b16 %v3247, %v3246
        %v3251 = vpack.c.b16 %v3249, %v3248
        %v3255 = vsel %vm3180, %v3230, 0
        %3257 = vmatprep.subr.bf16.mxu0 0
        %3258 = vmatpush1.bf16.msra.mxu0 0
        %3259 = vmatprep.subr.bf16.mxu0 0
        %3260 = vmatpush1.bf16.msra.mxu0 0
        %3261 = vmatprep.subr.bf16.mxu0 0
        %3262 = vmatpush1.bf16.msra.mxu0 0
        %3263 = vmatprep.subr.bf16.mxu0 0
        %3264 = vmatpush1.bf16.msra.mxu0 0
        %3265 = vmatprep.subr.bf16.mxu0 0
        %3266 = vmatpush1.bf16.msra.mxu0 0
        %3267 = vmatprep.subr.bf16.mxu0 0
        %3268 = vmatpush1.bf16.msra.mxu0 0
        %3269 = vmatprep.subr.bf16.mxu0 0
        %3270 = vmatpush1.bf16.msra.mxu0 %v3251
        %3271 = vmatprep.subr.bf16.mxu0 0
        %3272 = vmatpush1.bf16.msra.mxu0 %v3250
        %3273 = vmatprep.subr.bf16.mxu0 0
        %3274 = vmatpush2.bf16.msra.mxu0 0
        %3275 = vmatprep.subr.bf16.mxu0 0
        %3276 = vmatpush2.bf16.msra.mxu0 0
        %3277 = vmatprep.subr.bf16.mxu0 0
        %3278 = vmatpush2.bf16.msra.mxu0 0
        %3279 = vmatprep.subr.bf16.mxu0 0
        %3280 = vmatpush2.bf16.msra.mxu0 0
        %3281 = vmatprep.subr.bf16.mxu0 0
        %3282 = vmatpush2.bf16.msra.mxu0 0
        %3283 = vmatprep.subr.bf16.mxu0 0
        %3284 = vmatpush2.bf16.msra.mxu0 0
        %3285 = vmatprep.subr.bf16.mxu0 0
        %3286 = vmatpush2.bf16.msra.mxu0 0
        %3287 = vmatprep.subr.bf16.mxu0 0
        %3288 = vmatpush2.bf16.msra.mxu0 0
        %3289 = vmatprep.mubr.bf16.mxu0 0
        %3290 = vmatmul.mubr.bf16.gmra.mxu0 %v3255
        %v3291 = vpop.f32.mrf.mxu0
        %v3292 = vadd.f32 %v3240, %v3291
        %v3293 = vpop.f32.mrf.mxu0
        %v3294 = vpop.f32.mrf.mxu0
        %v3295 = vpop.f32.mrf.mxu0
        %3296 = vdwg.mxu0
        %vm3297 = vcmp.gt.f32.partialorder %v3292, 0.0
        %v3298 = vmin.f32 %v3292, 0.0
        %v3299 = vmul.f32 %v3298, 1.442695
        %v3300 = vpow.pop %v3299
        %v3301 = vsub.f32 %v3300, 1.0
        %v3302 = vsel %vm3297, %v3292, %v3301
        %v3303 = vld [vmem:[%s861] sm:$0xf]
        %v3304 = vld [vmem:[%s19] sm:$0xf]
        %v3305 = vld [vmem:[%s19 + $0x4] sm:$0xf]
        %v3306 = vld [vmem:[%s19 + $0x8] sm:$0xf]
        %v3307 = vld [vmem:[%s19 + $0xc] sm:$0xf]
        %v3308 = vld [vmem:[%s20] sm:$0x1]
        %v3310 = vlaneseq
        %v3311 = vshrl.u32 %v3310, 7
        %v3312 = vsub.s32 0, %v3311
        %v3313 = vrot.slane %v3308, %v3312
        %v3319 = vunpack.c.l.b16 %v3304
        %v3320 = vunpack.c.l.b16 %v3305
        %v3321 = vunpack.c.l.b16 %v3306
        %v3322 = vunpack.c.l.b16 %v3307
        %v3323 = vpack.c.b16 %v3320, %v3319
        %v3324 = vpack.c.b16 %v3322, %v3321
        %v3328 = vsel %vm3180, %v3303, 0
        %3330 = vmatprep.subr.bf16.mxu0 0
        %3331 = vmatpush1.bf16.msra.mxu0 0
        %3332 = vmatprep.subr.bf16.mxu0 0
        %3333 = vmatpush1.bf16.msra.mxu0 0
        %3334 = vmatprep.subr.bf16.mxu0 0
        %3335 = vmatpush1.bf16.msra.mxu0 0
        %3336 = vmatprep.subr.bf16.mxu0 0
        %3337 = vmatpush1.bf16.msra.mxu0 0
        %3338 = vmatprep.subr.bf16.mxu0 0
        %3339 = vmatpush1.bf16.msra.mxu0 0
        %3340 = vmatprep.subr.bf16.mxu0 0
        %3341 = vmatpush1.bf16.msra.mxu0 0
        %3342 = vmatprep.subr.bf16.mxu0 0
        %3343 = vmatpush1.bf16.msra.mxu0 %v3324
        %3344 = vmatprep.subr.bf16.mxu0 0
        %3345 = vmatpush1.bf16.msra.mxu0 %v3323
        %3346 = vmatprep.subr.bf16.mxu0 0
        %3347 = vmatpush2.bf16.msra.mxu0 0
        %3348 = vmatprep.subr.bf16.mxu0 0
        %3349 = vmatpush2.bf16.msra.mxu0 0
        %3350 = vmatprep.subr.bf16.mxu0 0
        %3351 = vmatpush2.bf16.msra.mxu0 0
        %3352 = vmatprep.subr.bf16.mxu0 0
        %3353 = vmatpush2.bf16.msra.mxu0 0
        %3354 = vmatprep.subr.bf16.mxu0 0
        %3355 = vmatpush2.bf16.msra.mxu0 0
        %3356 = vmatprep.subr.bf16.mxu0 0
        %3357 = vmatpush2.bf16.msra.mxu0 0
        %3358 = vmatprep.subr.bf16.mxu0 0
        %3359 = vmatpush2.bf16.msra.mxu0 0
        %3360 = vmatprep.subr.bf16.mxu0 0
        %3361 = vmatpush2.bf16.msra.mxu0 0
        %3362 = vmatprep.mubr.bf16.mxu0 0
        %3363 = vmatmul.mubr.bf16.gmra.mxu0 %v3328
        %v3364 = vpop.f32.mrf.mxu0
        %v3365 = vadd.f32 %v3313, %v3364
        %v3366 = vpop.f32.mrf.mxu0
        %v3367 = vpop.f32.mrf.mxu0
        %v3368 = vpop.f32.mrf.mxu0
        %3369 = vdwg.mxu0
        %v3370 = vmax.f32 %v3365, 0.0
        %v3371 = vpack.c.bf16 %v3370, %v3370
        %v3372 = vld [vmem:[%s21] sm:$0xf]
        %v3373 = vld [vmem:[%s21 + $0x4] sm:$0xf]
        %v3374 = vld [vmem:[%s21 + $0x8] sm:$0xf]
        %v3375 = vld [vmem:[%s21 + $0xc] sm:$0xf]
        %v3376 = vld [vmem:[%s22] sm:$0x1]
        %v3378 = vlaneseq
        %v3379 = vshrl.u32 %v3378, 7
        %v3380 = vsub.s32 0, %v3379
        %v3381 = vrot.slane %v3376, %v3380
        %v3387 = vunpack.c.l.b16 %v3372
        %v3388 = vunpack.c.l.b16 %v3373
        %v3389 = vunpack.c.l.b16 %v3374
        %v3390 = vunpack.c.l.b16 %v3375
        %v3391 = vpack.c.b16 %v3388, %v3387
        %v3392 = vpack.c.b16 %v3390, %v3389
        %v3396 = vsel %vm3180, %v3371, 0
        %3398 = vmatprep.subr.bf16.mxu0 0
        %3399 = vmatpush1.bf16.msra.mxu0 0
        %3400 = vmatprep.subr.bf16.mxu0 0
        %3401 = vmatpush1.bf16.msra.mxu0 0
        %3402 = vmatprep.subr.bf16.mxu0 0
        %3403 = vmatpush1.bf16.msra.mxu0 0
        %3404 = vmatprep.subr.bf16.mxu0 0
        %3405 = vmatpush1.bf16.msra.mxu0 0
        %3406 = vmatprep.subr.bf16.mxu0 0
        %3407 = vmatpush1.bf16.msra.mxu0 0
        %3408 = vmatprep.subr.bf16.mxu0 0
        %3409 = vmatpush1.bf16.msra.mxu0 0
        %3410 = vmatprep.subr.bf16.mxu0 0
        %3411 = vmatpush1.bf16.msra.mxu0 %v3392
        %3412 = vmatprep.subr.bf16.mxu0 0
        %3413 = vmatpush1.bf16.msra.mxu0 %v3391
        %3414 = vmatprep.subr.bf16.mxu0 0
        %3415 = vmatpush2.bf16.msra.mxu0 0
        %3416 = vmatprep.subr.bf16.mxu0 0
        %3417 = vmatpush2.bf16.msra.mxu0 0
        %3418 = vmatprep.subr.bf16.mxu0 0
        %3419 = vmatpush2.bf16.msra.mxu0 0
        %3420 = vmatprep.subr.bf16.mxu0 0
        %3421 = vmatpush2.bf16.msra.mxu0 0
        %3422 = vmatprep.subr.bf16.mxu0 0
        %3423 = vmatpush2.bf16.msra.mxu0 0
        %3424 = vmatprep.subr.bf16.mxu0 0
        %3425 = vmatpush2.bf16.msra.mxu0 0
        %3426 = vmatprep.subr.bf16.mxu0 0
        %3427 = vmatpush2.bf16.msra.mxu0 0
        %3428 = vmatprep.subr.bf16.mxu0 0
        %3429 = vmatpush2.bf16.msra.mxu0 0
        %3430 = vmatprep.mubr.bf16.mxu0 0
        %3431 = vmatmul.mubr.bf16.gmra.mxu0 %v3396
        %v3432 = vpop.f32.mrf.mxu0
        %v3433 = vadd.f32 %v3381, %v3432
        %v3434 = vpop.f32.mrf.mxu0
        %v3435 = vpop.f32.mrf.mxu0
        %v3436 = vpop.f32.mrf.mxu0
        %3437 = vdwg.mxu0
        %v3438 = vmax.f32 %v3433, 0.0
        %v3439 = vadd.f32 %v3438, %v3302
        %v3440 = vsub.f32 0.0, %v3439
        %v3441 = vmul.f32 %v3440, 1.442695
        %v3442 = vpow.pop %v3441
        %v3443 = vadd.f32 %v3442, 1.0
        %v3444 = vrcp.pop %v3443
        %v3445 = vmul.f32 1.0, %v3444
        %v3446 = vadd.f32 %v3445, 1e-08
        %v3447 = vlog2.pop %v3446
        %v3448 = vmul.f32 %v3447, 0.6931472
        %v3449 = vld [vmem:[#allocation3] sm:$0x1]
        %v3451 = vlaneseq
        %v3452 = vshrl.u32 %v3451, 7
        %v3453 = vsub.s32 0, %v3452
        %v3454 = vrot.slane %v3449, %v3453
        %3455 = vset.pattern.permute.xlu0 0
        %3456 = vperm.xlu0 %3455, %v3454
        %v3457 = vpop.permute.xlu0 %3456
        %v3459 = vadd.f32 %v3438, %v3457
        %v3460 = vsub.f32 0.0, %v3459
        %v3461 = vmul.f32 %v3460, 1.442695
        %v3462 = vpow.pop %v3461
        %v3463 = vadd.f32 %v3462, 1.0
        %v3464 = vrcp.pop %v3463
        %v3465 = vmul.f32 1.0, %v3464
        %v3466 = vadd.f32 %v3465, 1e-08
        %v3467 = vlog2.pop %v3466
        %v3468 = vmul.f32 %v3467, 0.6931472
        %3469 = vst.msk [vmem:[%s848] sm:$0xff] %vm3180, %v3438
        %3471 = vrot.lane.b32.xlu0 %v3448, 32
        %v3472 = vpop.permute.xlu0 %3471
        %vm3474 = vcmask 523520
        %3475 = vst.msk [vmem:[%s848] sm:$0xff] %vm3474, %v3472
        %3477 = vrot.lane.b32.xlu0 %v3468, 64
        %v3478 = vpop.permute.xlu0 %3477
        %vm3480 = vcmask 785920
        %3481 = vst.msk [vmem:[%s848] sm:$0xff] %vm3480, %v3478
        %v3482 = vsub.f32 %v3448, %v3468
        %3484 = vrot.lane.b32.xlu0 %v3482, 96
        %v3485 = vpop.permute.xlu0 %3484
        %vm3487 = vcmask 1048320
        %3488 = vst.msk [vmem:[%s848] sm:$0xff] %vm3487, %v3485
        %s3489 = sand.u32 %s573, 1
        %s3490 = scalar_lea.sflag [#allocation6], %s3489
        %s3491 = sand.u32 %s573, 1
        %s3492 = smul.addr %s3491, 8
        %s3493 = scalar_lea.vmem [#allocation15], %s3492
        // Predicated region
        $region141: #{tpu_custom_call.1} parent=115 // pred_check
          %p3494 = pneg %p583
        $region142: #{tpu_custom_call.1} parent=115 // pred_check_branch
          %3496 = sbr.rel (%p3494) target = $region144
        $region143: #{tpu_custom_call.1} parent=115 // pred_region
          %s3498 = ssub.s32 128, 128
          %3499 = vsyncadd %s3490, %s3498
          %s3500 = smul.addr %s46, 128
          %s3501 = scalar_lea.hbm %s24, %s3500
          %s3503 = sshll.u32 %s3493, 4
          %s3504 = int_to_ptr.vmem [resolvable:$true] %s3503
          %3506 = dma.vmem_to_hbm [thread:$0]  %s3504, 128, %s3501, %s3490
        $region144: #{tpu_custom_call.1} parent=115 // pred_fallthru
          _
      $region116: #{tpu_custom_call.1} parent=5 // pred_fallthru
        _
      %p3507 = scmp.le.s32.totalorder 2, %s41
      // Predicated region
      $region145: #{tpu_custom_call.1} parent=5 // pred_check
        %p3508 = pneg %p3507
      $region146: #{tpu_custom_call.1} parent=5 // pred_check_branch
        %3510 = sbr.rel (%p3508) target = $region148
      $region147: #{tpu_custom_call.1} parent=5 // pred_region
        %s3511 = ssub.s32 %s41, 2
        // Predicated region
        $region149: #{tpu_custom_call.1} parent=147 // pred_check
          %p3512 = pneg %p589
        $region150: #{tpu_custom_call.1} parent=147 // pred_check_branch
          %3514 = sbr.rel (%p3512) target = $region152
        $region151: #{tpu_custom_call.1} parent=147 // pred_region
          %s3515 = sand.u32 %s574, 1
          %s3516 = scalar_lea.sflag [#allocation6], %s3515
          %s3517 = sand.u32 %s574, 1
          %s3518 = smul.addr %s3517, 8
          %s3519 = scalar_lea.vmem [#allocation15], %s3518
          %3520 = dma.done %s3516, 128
        $region152: #{tpu_custom_call.1} parent=147 // pred_fallthru
          _
      $region148: #{tpu_custom_call.1} parent=5 // pred_fallthru
        _
    $region6: #{tpu_custom_call.1} parent=1 // loop_footer
      %s45 = sadd.s32 1, %s41
    $region7: #{tpu_custom_call.1} parent=1 // loop_footer_branch
      %40 = sbr.rel target = $region3
    $region8: #{tpu_custom_call.1} parent=1 // loop_exit
      _
    %3521 = vsyncpa [#allocation5], 1
    %s3522 = scalar_lea.sflag [#allocation5], 1
    %3523 = vsyncpa %s3522, 1
    %3524 = vsyncpa [#allocation8], 1
    %3525 = vsyncpa [#allocation11], 1
    %3526 = vsyncpa [#allocation14], 1
    %3527 = vsyncpa [#allocation6], 1
    %s3528 = scalar_lea.sflag [#allocation6], 1
    %3529 = vsyncpa %s3528, 1

</llo_original>
